<compile_context>
chip_gen: v7x
topology: tpu7x:2x2x1
jax: 0.10.0
libtpu: 0.0.40
codegen_flags: <defaults>
</compile_context>

<pallas_src>
import functools

import jax
import jax.numpy as jnp
from jax import lax
from jax.experimental import pallas as pl
from jax.experimental.pallas import tpu as pltpu


def round_up(x, m):
    return (x + m - 1) // m * m


# ---------------------------------------------------------------------------
# Pallas kernels
# ---------------------------------------------------------------------------

def bidir_lstm_kernel(x_ref, wih_ref, whh_ref, b_ref, out_ref,
                      xproj_ref, h_ref, c_ref, *, T, H):
    """One bidirectional LSTM layer; grid axis 0 = direction (0 fwd, 1 bwd).

    x_ref     : (T, B, Din)   bf16 time-major input (shared by both directions)
    wih_ref   : (1, Din, 4H)  bf16 this direction's input->gates weight
    whh_ref   : (1, H, 4H)    bf16 this direction's hidden->gates weight
    b_ref     : (1, 1, 4H)    f32  b_ih + b_hh
    out_ref   : (T, B, H)     bf16 this direction's half of the (T, B, 2H) output
    xproj_ref : (T, B, 4H)    f32  scratch: hoisted input projection
    h_ref/c_ref : (B, H)      f32  scratch recurrent state
    """
    d = pl.program_id(0)
    B = x_ref.shape[1]
    Din = x_ref.shape[2]

    # ---- phase 1: hoisted input projection (+bias) as one big GEMM ----------
    x2d = x_ref[...].reshape(T * B, Din)
    xp = jnp.dot(x2d, wih_ref[0], preferred_element_type=jnp.float32) + b_ref[0]
    xproj_ref[...] = xp.reshape(T, B, 4 * H)

    # ---- phase 2: serial recurrence, only h_prev @ W_hh per step ------------
    h_ref[...] = jnp.zeros_like(h_ref)
    c_ref[...] = jnp.zeros_like(c_ref)
    reverse = d == 1

    def step(s, carry):
        t = jnp.where(reverse, T - 1 - s, s)
        gates = xproj_ref[t] + jnp.dot(
            h_ref[...].astype(jnp.bfloat16), whh_ref[0],
            preferred_element_type=jnp.float32)          # (B, 4H), gate order i,f,g,o
        i_g = jax.nn.sigmoid(gates[:, 0 * H:1 * H])
        f_g = jax.nn.sigmoid(gates[:, 1 * H:2 * H])
        g_g = jnp.tanh(gates[:, 2 * H:3 * H])
        o_g = jax.nn.sigmoid(gates[:, 3 * H:4 * H])
        c_new = f_g * c_ref[...] + i_g * g_g
        h_new = o_g * jnp.tanh(c_new)
        c_ref[...] = c_new
        h_ref[...] = h_new
        out_ref[t] = h_new.astype(out_ref.dtype)
        return carry

    lax.fori_loop(0, T, step, 0)


def fc_logsoftmax_kernel(h_ref, w_ref, b_ref, o_ref, *, num_valid):
    """Linear (2H_p -> O_p) + log_softmax over the last dim, masking padded cols.

    h_ref : (rows, 2H_p) bf16 | w_ref : (2H_p, O_p) bf16 | b_ref : (1, O_p) f32
    o_ref : (rows, O_p)  f32
    """
    logits = jnp.dot(h_ref[...], w_ref[...],
                     preferred_element_type=jnp.float32) + b_ref[...]
    col = lax.broadcasted_iota(jnp.int32, logits.shape, 1)
    logits = jnp.where(col < num_valid, logits, jnp.float32(-1e30))
    m = jnp.max(logits, axis=-1, keepdims=True)
    e = jnp.exp(logits - m)
    s = jnp.sum(e, axis=-1, keepdims=True)
    o_ref[...] = logits - m - jnp.log(s)


# ---------------------------------------------------------------------------
# JAX glue
# ---------------------------------------------------------------------------

def bidir_lstm_layer(x_tbd, layer_params, *, H_p):
    """One fused bidirectional LSTM layer. x_tbd: (T, B_p, Din_p) bf16 -> (T, B_p, 2H_p) bf16."""
    T, B_p, Din_p = x_tbd.shape
    wih, whh, bias = layer_params      # (2,Din_p,4H_p) bf16, (2,H_p,4H_p) bf16, (2,1,4H_p) f32
    kernel = functools.partial(bidir_lstm_kernel, T=T, H=H_p)
    return pl.pallas_call(
        kernel,
        out_shape=jax.ShapeDtypeStruct((T, B_p, 2 * H_p), jnp.bfloat16),
        grid_spec=pltpu.PrefetchScalarGridSpec(
            num_scalar_prefetch=0,
            grid=(2,),                                           # 2 directions
            in_specs=[
                pl.BlockSpec((T, B_p, Din_p), lambda d: (0, 0, 0)),      # shared x
                pl.BlockSpec((1, Din_p, 4 * H_p), lambda d: (d, 0, 0)),  # W_ih[d]
                pl.BlockSpec((1, H_p, 4 * H_p), lambda d: (d, 0, 0)),    # W_hh[d]
                pl.BlockSpec((1, 1, 4 * H_p), lambda d: (d, 0, 0)),      # bias[d]
            ],
            # each direction writes its own H_p-wide half of the 2H_p output
            out_specs=pl.BlockSpec((T, B_p, H_p), lambda d: (0, 0, d)),
            scratch_shapes=[
                pltpu.VMEM((T, B_p, 4 * H_p), jnp.float32),   # hoisted x @ W_ih
                pltpu.VMEM((B_p, H_p), jnp.float32),          # h state
                pltpu.VMEM((B_p, H_p), jnp.float32),          # c state
            ],
        ),
        compiler_params=pltpu.CompilerParams(
            dimension_semantics=("parallel",),    # direction axis -> 2 TCs on v7x
            vmem_limit_bytes=32 * 1024 * 1024,
        ),
    )(x_tbd, wih, whh, bias)


def fc_logsoftmax(h_2d, w_fc, b_fc, *, num_valid, row_tile=256):
    """Tiled Linear + log_softmax. h_2d: (N, 2H_p) bf16 -> (N, O_p) f32."""
    N, twoH = h_2d.shape
    O_p = w_fc.shape[1]
    row_tile = min(row_tile, N)
    kernel = functools.partial(fc_logsoftmax_kernel, num_valid=num_valid)
    return pl.pallas_call(
        kernel,
        out_shape=jax.ShapeDtypeStruct((N, O_p), jnp.float32),
        grid_spec=pltpu.PrefetchScalarGridSpec(
            num_scalar_prefetch=0,
            grid=(pl.cdiv(N, row_tile),),
            in_specs=[
                pl.BlockSpec((row_tile, twoH), lambda i: (i, 0)),
                pl.BlockSpec((twoH, O_p), lambda i: (0, 0)),   # weight resident
                pl.BlockSpec((1, O_p), lambda i: (0, 0)),
            ],
            out_specs=pl.BlockSpec((row_tile, O_p), lambda i: (i, 0)),
        ),
        compiler_params=pltpu.CompilerParams(
            dimension_semantics=("parallel",),
            vmem_limit_bytes=32 * 1024 * 1024,
        ),
    )(h_2d, w_fc, b_fc)


def speech_recognition_forward(x, params):
    """Forward pass. x: (B, T, input_dim) f32 -> (B, T, output_dim+1) f32 log-probs."""
    B, T, Din = x.shape
    cfg = params["cfg"]
    H_p, Din_p, O_p, O = cfg["H_p"], cfg["Din_p"], cfg["O_p"], cfg["num_classes"]
    B_p = round_up(B, 16)    # bf16-friendly sublane count

    # time-major + pad once at entry, cast to bf16 for the MXU
    x_tbd = jnp.transpose(x, (1, 0, 2))
    x_tbd = jnp.pad(x_tbd, ((0, 0), (0, B_p - B), (0, Din_p - Din)))
    h = x_tbd.astype(jnp.bfloat16)

    for layer_params in params["lstm"]:
        h = bidir_lstm_layer(h, layer_params, H_p=H_p)

    # TODO(synk): nn.Dropout(0.3) is treated as identity (inference / eval mode).

    w_fc, b_fc = params["fc"]
    h2d = h.reshape(T * B_p, 2 * H_p)
    out = fc_logsoftmax(h2d, w_fc, b_fc, num_valid=O)
    out = out.reshape(T, B_p, O_p).transpose(1, 0, 2)     # back to batch-first, once
    return out[:B, :, :O]


# ---------------------------------------------------------------------------
# Parameter init: PyTorch-style uniform(-k, k), then pad/pack to TPU layouts.
# Zero-padding of hidden/input/gate blocks is exact (padded hidden units stay 0).
# ---------------------------------------------------------------------------

def init_params(key, input_dim, hidden_dim, output_dim, num_layers=3):
    H = hidden_dim
    O = output_dim + 1
    H_p = round_up(H, 128)
    Din_p = round_up(input_dim, 128)
    O_p = round_up(O, 128)
    k = 1.0 / jnp.sqrt(H)

    def uniform(key, shape, bound):
        return jax.random.uniform(key, shape, jnp.float32, -bound, bound)

    def pad_to(a, axis, size):
        widths = [(0, 0)] * a.ndim
        widths[axis] = (0, size - a.shape[axis])
        return jnp.pad(a, widths)

    def pad_blocks(a, axis, n_blocks, block_p):
        chunks = jnp.split(a, n_blocks, axis=axis)
        return jnp.concatenate([pad_to(c, axis, block_p) for c in chunks], axis=axis)

    params = {"lstm": []}
    for layer in range(num_layers):
        d_in = input_dim if layer == 0 else 2 * H
        d_in_p = Din_p if layer == 0 else 2 * H_p
        wih_dirs, whh_dirs, b_dirs = [], [], []
        for _ in range(2):                                   # fwd, bwd
            key, k1, k2, k3, k4 = jax.random.split(key, 5)
            w_ih = uniform(k1, (4 * H, d_in), k)             # PyTorch layout
            w_hh = uniform(k2, (4 * H, H), k)
            b_ih = uniform(k3, (4 * H,), k)
            b_hh = uniform(k4, (4 * H,), k)
            w_ih_t = pad_blocks(w_ih.T, 1, 4, H_p)           # (d_in, 4H_p)
            if layer == 0:
                w_ih_t = pad_to(w_ih_t, 0, d_in_p)           # (Din_p, 4H_p)
            else:
                w_ih_t = pad_blocks(w_ih_t, 0, 2, H_p)       # (2H_p, 4H_p)
            w_hh_t = pad_to(pad_blocks(w_hh.T, 1, 4, H_p), 0, H_p)   # (H_p, 4H_p)
            bias = pad_blocks((b_ih + b_hh).reshape(1, 4 * H), 1, 4, H_p)
            wih_dirs.append(w_ih_t.astype(jnp.bfloat16))
            whh_dirs.append(w_hh_t.astype(jnp.bfloat16))
            b_dirs.append(bias)
        params["lstm"].append((
            jnp.stack(wih_dirs),        # (2, d_in_p, 4H_p) bf16
            jnp.stack(whh_dirs),        # (2, H_p,   4H_p) bf16
            jnp.stack(b_dirs),          # (2, 1,     4H_p) f32
        ))

    key, k1, k2 = jax.random.split(key, 3)
    kf = 1.0 / jnp.sqrt(2 * H)
    w_fc = uniform(k1, (O, 2 * H), kf)                       # PyTorch layout (O, 2H)
    b_fc = uniform(k2, (O,), kf)
    w_fc_t = pad_to(pad_blocks(w_fc.T, 0, 2, H_p), 1, O_p)   # (2H_p, O_p)
    b_fc_p = pad_to(b_fc.reshape(1, O), 1, O_p)              # (1, O_p)
    params["fc"] = (w_fc_t.astype(jnp.bfloat16), b_fc_p)
    params["cfg"] = {"H_p": H_p, "Din_p": Din_p, "O_p": O_p, "num_classes": O}
    return params


# ---------------------------------------------------------------------------
# Main
# ---------------------------------------------------------------------------

if __name__ == "__main__":
    # Small shapes consistent with the module's forward (nn.LSTM(batch_first=True)).
    B, T = 2, 8
    INPUT_DIM = 40        # mel features
    HIDDEN_DIM = 32       # scaled down from 256 for the test (padded to 128 internally)
    OUTPUT_DIM = 30       # synthetic vocab size; fc outputs OUTPUT_DIM + 1

    key = jax.random.PRNGKey(0)
    key, pkey, xkey = jax.random.split(key, 3)

    params = init_params(pkey, INPUT_DIM, HIDDEN_DIM, OUTPUT_DIM)
    x = jax.random.normal(xkey, (B, T, INPUT_DIM), jnp.float32)

    fwd = jax.jit(functools.partial(speech_recognition_forward, params=params))
    out = fwd(x)
    jax.block_until_ready(out)

    assert out.shape == (B, T, OUTPUT_DIM + 1), out.shape
    # log_softmax rows must (log-)normalize to ~1 in probability space
    assert jnp.allclose(jnp.sum(jnp.exp(out), axis=-1), 1.0, atol=1e-4)

    print("KERNEL_OK")
</pallas_src>

<mosaic_0001>
module attributes {stable_mosaic.version = 11 : i64} {
  func.func @bidir_lstm_kernel(%arg0: i32, %arg1: memref<8x16x128xbf16, #tpu.memory_space<vmem>>, %arg2: memref<1x128x512xbf16, #tpu.memory_space<vmem>>, %arg3: memref<1x128x512xbf16, #tpu.memory_space<vmem>>, %arg4: memref<1x1x512xf32, #tpu.memory_space<vmem>>, %arg5: memref<8x16x128xbf16, #tpu.memory_space<vmem>>, %arg6: memref<8x16x512xf32, #tpu.memory_space<vmem>>, %arg7: memref<16x128xf32, #tpu.memory_space<vmem>>, %arg8: memref<16x128xf32, #tpu.memory_space<vmem>>) attributes {dimension_semantics = [#tpu.dimension_semantics<parallel>], iteration_bounds = array<i64: 2>, scalar_prefetch = 0 : i64, scratch_operands = 3 : i64, tpu.core_type = #tpu.core_type<tc>, window_params = [{pipeline_mode = #tpu.pipeline_mode<synchronous>, transform_indices = @transform_0, window_bounds = array<i64: 8, 16, 128>}, {transform_indices = @transform_1, window_bounds = array<i64: 1, 128, 512>}, {transform_indices = @transform_2, window_bounds = array<i64: 1, 128, 512>}, {transform_indices = @transform_3, window_bounds = array<i64: 1, 1, 512>}, {transform_indices = @transform_4, window_bounds = array<i64: 8, 16, 128>}]} {
    %c0 = arith.constant 0 : index
    %c0_0 = arith.constant 0 : index
    %c0_1 = arith.constant 0 : index
    %0 = vector.load %arg1[%c0, %c0_0, %c0_1] : memref<8x16x128xbf16, #tpu.memory_space<vmem>>, vector<8x16x128xbf16>
    %1 = vector.shape_cast %0 : vector<8x16x128xbf16> to vector<128x128xbf16>
    %c0_2 = arith.constant 0 : index
    %c0_3 = arith.constant 0 : index
    %c0_4 = arith.constant 0 : index
    %2 = vector.load %arg2[%c0_2, %c0_3, %c0_4] : memref<1x128x512xbf16, #tpu.memory_space<vmem>>, vector<1x128x512xbf16>
    %3 = vector.shape_cast %2 : vector<1x128x512xbf16> to vector<128x512xbf16>
    %cst = arith.constant dense<0.000000e+00> : vector<128x512xf32>
    %4 = tpu.matmul %1, %3, %cst {dimension_numbers = #tpu.dot_dimension_numbers<[1], [0], [0], [1], [0, 0, 1, 1], [], []>} : vector<128x128xbf16>, vector<128x512xbf16>, vector<128x512xf32> -> vector<128x512xf32>
    %c0_5 = arith.constant 0 : index
    %c0_6 = arith.constant 0 : index
    %c0_7 = arith.constant 0 : index
    %5 = vector.load %arg4[%c0_5, %c0_6, %c0_7] : memref<1x1x512xf32, #tpu.memory_space<vmem>>, vector<1x1x512xf32>
    %6 = vector.shape_cast %5 : vector<1x1x512xf32> to vector<1x512xf32>
    %7 = vector.broadcast %6 : vector<1x512xf32> to vector<128x512xf32>
    %8 = arith.addf %4, %7 : vector<128x512xf32>
    %9 = vector.shape_cast %8 : vector<128x512xf32> to vector<8x16x512xf32>
    %c0_8 = arith.constant 0 : index
    %c0_9 = arith.constant 0 : index
    %c0_10 = arith.constant 0 : index
    %10 = vector.load %arg6[%c0_8, %c0_9, %c0_10] : memref<8x16x512xf32, #tpu.memory_space<vmem>>, vector<8x16x512xf32>
    tpu.vector_store %arg6[%c0_8, %c0_9, %c0_10], %9 {strides = array<i32>} : memref<8x16x512xf32, #tpu.memory_space<vmem>>, vector<8x16x512xf32>,
    %cst_11 = arith.constant 0.000000e+00 : f32
    %11 = vector.broadcast %cst_11 : f32 to vector<16x128xf32>
    %c0_12 = arith.constant 0 : index
    %c0_13 = arith.constant 0 : index
    %12 = vector.load %arg7[%c0_12, %c0_13] : memref<16x128xf32, #tpu.memory_space<vmem>>, vector<16x128xf32>
    tpu.vector_store %arg7[%c0_12, %c0_13], %11 {strides = array<i32>} : memref<16x128xf32, #tpu.memory_space<vmem>>, vector<16x128xf32>,
    %cst_14 = arith.constant 0.000000e+00 : f32
    %13 = vector.broadcast %cst_14 : f32 to vector<16x128xf32>
    %c0_15 = arith.constant 0 : index
    %c0_16 = arith.constant 0 : index
    %14 = vector.load %arg8[%c0_15, %c0_16] : memref<16x128xf32, #tpu.memory_space<vmem>>, vector<16x128xf32>
    tpu.vector_store %arg8[%c0_15, %c0_16], %13 {strides = array<i32>} : memref<16x128xf32, #tpu.memory_space<vmem>>, vector<16x128xf32>,
    %c1_i32 = arith.constant 1 : i32
    %15 = arith.cmpi eq, %arg0, %c1_i32 : i32
    %c0_i32 = arith.constant 0 : i32
    %c8_i32 = arith.constant 8 : i32
    %16 = arith.addi %c0_i32, %c8_i32 : i32
    %c1_i32_17 = arith.constant 1 : i32
    scf.for %arg9 = %c0_i32 to %16 step %c1_i32_17  : i32 {
      %c7_i32 = arith.constant 7 : i32
      %17 = arith.subi %c7_i32, %arg9 : i32
      %18 = arith.select %15, %17, %arg9 : i32
      %19 = arith.index_cast %18 : i32 to index
      %c0_19 = arith.constant 0 : index
      %c0_20 = arith.constant 0 : index
      %20 = vector.load %arg6[%19, %c0_19, %c0_20] : memref<8x16x512xf32, #tpu.memory_space<vmem>>, vector<1x16x512xf32>
      %21 = vector.shape_cast %20 : vector<1x16x512xf32> to vector<16x512xf32>
      %c0_21 = arith.constant 0 : index
      %c0_22 = arith.constant 0 : index
      %22 = vector.load %arg7[%c0_21, %c0_22] : memref<16x128xf32, #tpu.memory_space<vmem>>, vector<16x128xf32>
      %23 = arith.truncf %22 : vector<16x128xf32> to vector<16x128xbf16>
      %c0_23 = arith.constant 0 : index
      %c0_24 = arith.constant 0 : index
      %c0_25 = arith.constant 0 : index
      %24 = vector.load %arg3[%c0_23, %c0_24, %c0_25] : memref<1x128x512xbf16, #tpu.memory_space<vmem>>, vector<1x128x512xbf16>
      %25 = vector.shape_cast %24 : vector<1x128x512xbf16> to vector<128x512xbf16>
      %cst_26 = arith.constant dense<0.000000e+00> : vector<16x512xf32>
      %26 = tpu.matmul %23, %25, %cst_26 {dimension_numbers = #tpu.dot_dimension_numbers<[1], [0], [0], [1], [0, 0, 1, 1], [], []>} : vector<16x128xbf16>, vector<128x512xbf16>, vector<16x512xf32> -> vector<16x512xf32>
      %27 = arith.addf %21, %26 : vector<16x512xf32>
      %28 = vector.extract_strided_slice %27 {offsets = [0, 0], sizes = [16, 128], strides = [1, 1]} : vector<16x512xf32> to vector<16x128xf32>
      %29 = arith.negf %28 : vector<16x128xf32>
      %30 = math.exp %29 : vector<16x128xf32>
      %cst_27 = arith.constant 1.000000e+00 : f32
      %31 = vector.broadcast %cst_27 : f32 to vector<16x128xf32>
      %32 = arith.addf %31, %30 : vector<16x128xf32>
      %33 = arith.divf %31, %32 : vector<16x128xf32>
      %34 = vector.extract_strided_slice %27 {offsets = [0, 128], sizes = [16, 128], strides = [1, 1]} : vector<16x512xf32> to vector<16x128xf32>
      %35 = arith.negf %34 : vector<16x128xf32>
      %36 = math.exp %35 : vector<16x128xf32>
      %cst_28 = arith.constant 1.000000e+00 : f32
      %37 = vector.broadcast %cst_28 : f32 to vector<16x128xf32>
      %38 = arith.addf %37, %36 : vector<16x128xf32>
      %39 = arith.divf %37, %38 : vector<16x128xf32>
      %40 = vector.extract_strided_slice %27 {offsets = [0, 256], sizes = [16, 128], strides = [1, 1]} : vector<16x512xf32> to vector<16x128xf32>
      %41 = math.tanh %40 : vector<16x128xf32>
      %42 = vector.extract_strided_slice %27 {offsets = [0, 384], sizes = [16, 128], strides = [1, 1]} : vector<16x512xf32> to vector<16x128xf32>
      %43 = arith.negf %42 : vector<16x128xf32>
      %44 = math.exp %43 : vector<16x128xf32>
      %cst_29 = arith.constant 1.000000e+00 : f32
      %45 = vector.broadcast %cst_29 : f32 to vector<16x128xf32>
      %46 = arith.addf %45, %44 : vector<16x128xf32>
      %47 = arith.divf %45, %46 : vector<16x128xf32>
      %c0_30 = arith.constant 0 : index
      %c0_31 = arith.constant 0 : index
      %48 = vector.load %arg8[%c0_30, %c0_31] : memref<16x128xf32, #tpu.memory_space<vmem>>, vector<16x128xf32>
      %49 = arith.mulf %39, %48 : vector<16x128xf32>
      %50 = arith.mulf %33, %41 : vector<16x128xf32>
      %51 = arith.addf %49, %50 : vector<16x128xf32>
      %52 = math.tanh %51 : vector<16x128xf32>
      %53 = arith.mulf %47, %52 : vector<16x128xf32>
      %c0_32 = arith.constant 0 : index
      %c0_33 = arith.constant 0 : index
      %54 = vector.load %arg8[%c0_32, %c0_33] : memref<16x128xf32, #tpu.memory_space<vmem>>, vector<16x128xf32>
      tpu.vector_store %arg8[%c0_32, %c0_33], %51 {strides = array<i32>} : memref<16x128xf32, #tpu.memory_space<vmem>>, vector<16x128xf32>,
      %c0_34 = arith.constant 0 : index
      %c0_35 = arith.constant 0 : index
      %55 = vector.load %arg7[%c0_34, %c0_35] : memref<16x128xf32, #tpu.memory_space<vmem>>, vector<16x128xf32>
      tpu.vector_store %arg7[%c0_34, %c0_35], %53 {strides = array<i32>} : memref<16x128xf32, #tpu.memory_space<vmem>>, vector<16x128xf32>,
      %56 = arith.truncf %53 : vector<16x128xf32> to vector<16x128xbf16>
      %57 = arith.index_cast %18 : i32 to index
      %c0_36 = arith.constant 0 : index
      %c0_37 = arith.constant 0 : index
      %58 = vector.load %arg5[%57, %c0_36, %c0_37] : memref<8x16x128xbf16, #tpu.memory_space<vmem>>, vector<1x16x128xbf16>
      %59 = vector.shape_cast %58 : vector<1x16x128xbf16> to vector<16x128xbf16>
      %60 = vector.shape_cast %56 : vector<16x128xbf16> to vector<1x16x128xbf16>
      tpu.vector_store %arg5[%57, %c0_36, %c0_37], %60 {strides = array<i32>} : memref<8x16x128xbf16, #tpu.memory_space<vmem>>, vector<1x16x128xbf16>,
    }
    %c8_i32_18 = arith.constant 8 : i32
    return
  }
  func.func @transform_0(%arg0: i32) -> (i32, i32, i32) {
    %c0_i32 = arith.constant 0 : i32
    %c0_i32_0 = arith.constant 0 : i32
    %c0_i32_1 = arith.constant 0 : i32
    %c0_i32_2 = arith.constant 0 : i32
    return %c0_i32, %c0_i32_0, %c0_i32_1 : i32, i32, i32
  }
  func.func @transform_1(%arg0: i32) -> (i32, i32, i32) {
    %c0_i32 = arith.constant 0 : i32
    %c0_i32_0 = arith.constant 0 : i32
    %c0_i32_1 = arith.constant 0 : i32
    return %arg0, %c0_i32, %c0_i32_0 : i32, i32, i32
  }
  func.func @transform_2(%arg0: i32) -> (i32, i32, i32) {
    %c0_i32 = arith.constant 0 : i32
    %c0_i32_0 = arith.constant 0 : i32
    %c0_i32_1 = arith.constant 0 : i32
    return %arg0, %c0_i32, %c0_i32_0 : i32, i32, i32
  }
  func.func @transform_3(%arg0: i32) -> (i32, i32, i32) {
    %c0_i32 = arith.constant 0 : i32
    %c0_i32_0 = arith.constant 0 : i32
    %c0_i32_1 = arith.constant 0 : i32
    return %arg0, %c0_i32, %c0_i32_0 : i32, i32, i32
  }
  func.func @transform_4(%arg0: i32) -> (i32, i32, i32) {
    %c0_i32 = arith.constant 0 : i32
    %c0_i32_0 = arith.constant 0 : i32
    %c0_i32_1 = arith.constant 0 : i32
    return %c0_i32, %c0_i32_0, %arg0 : i32, i32, i32
  }
}

module attributes {stable_mosaic.version = 11 : i64} {
  func.func @bidir_lstm_kernel(%arg0: i32, %arg1: memref<8x16x256xbf16, #tpu.memory_space<vmem>>, %arg2: memref<1x256x512xbf16, #tpu.memory_space<vmem>>, %arg3: memref<1x128x512xbf16, #tpu.memory_space<vmem>>, %arg4: memref<1x1x512xf32, #tpu.memory_space<vmem>>, %arg5: memref<8x16x128xbf16, #tpu.memory_space<vmem>>, %arg6: memref<8x16x512xf32, #tpu.memory_space<vmem>>, %arg7: memref<16x128xf32, #tpu.memory_space<vmem>>, %arg8: memref<16x128xf32, #tpu.memory_space<vmem>>) attributes {dimension_semantics = [#tpu.dimension_semantics<parallel>], iteration_bounds = array<i64: 2>, scalar_prefetch = 0 : i64, scratch_operands = 3 : i64, tpu.core_type = #tpu.core_type<tc>, window_params = [{pipeline_mode = #tpu.pipeline_mode<synchronous>, transform_indices = @transform_0, window_bounds = array<i64: 8, 16, 256>}, {transform_indices = @transform_1, window_bounds = array<i64: 1, 256, 512>}, {transform_indices = @transform_2, window_bounds = array<i64: 1, 128, 512>}, {transform_indices = @transform_3, window_bounds = array<i64: 1, 1, 512>}, {transform_indices = @transform_4, window_bounds = array<i64: 8, 16, 128>}]} {
    %c0 = arith.constant 0 : index
    %c0_0 = arith.constant 0 : index
    %c0_1 = arith.constant 0 : index
    %0 = vector.load %arg1[%c0, %c0_0, %c0_1] : memref<8x16x256xbf16, #tpu.memory_space<vmem>>, vector<8x16x256xbf16>
    %1 = vector.shape_cast %0 : vector<8x16x256xbf16> to vector<128x256xbf16>
    %c0_2 = arith.constant 0 : index
    %c0_3 = arith.constant 0 : index
    %c0_4 = arith.constant 0 : index
    %2 = vector.load %arg2[%c0_2, %c0_3, %c0_4] : memref<1x256x512xbf16, #tpu.memory_space<vmem>>, vector<1x256x512xbf16>
    %3 = vector.shape_cast %2 : vector<1x256x512xbf16> to vector<256x512xbf16>
    %cst = arith.constant dense<0.000000e+00> : vector<128x512xf32>
    %4 = tpu.matmul %1, %3, %cst {dimension_numbers = #tpu.dot_dimension_numbers<[1], [0], [0], [1], [0, 0, 1, 1], [], []>} : vector<128x256xbf16>, vector<256x512xbf16>, vector<128x512xf32> -> vector<128x512xf32>
    %c0_5 = arith.constant 0 : index
    %c0_6 = arith.constant 0 : index
    %c0_7 = arith.constant 0 : index
    %5 = vector.load %arg4[%c0_5, %c0_6, %c0_7] : memref<1x1x512xf32, #tpu.memory_space<vmem>>, vector<1x1x512xf32>
    %6 = vector.shape_cast %5 : vector<1x1x512xf32> to vector<1x512xf32>
    %7 = vector.broadcast %6 : vector<1x512xf32> to vector<128x512xf32>
    %8 = arith.addf %4, %7 : vector<128x512xf32>
    %9 = vector.shape_cast %8 : vector<128x512xf32> to vector<8x16x512xf32>
    %c0_8 = arith.constant 0 : index
    %c0_9 = arith.constant 0 : index
    %c0_10 = arith.constant 0 : index
    %10 = vector.load %arg6[%c0_8, %c0_9, %c0_10] : memref<8x16x512xf32, #tpu.memory_space<vmem>>, vector<8x16x512xf32>
    tpu.vector_store %arg6[%c0_8, %c0_9, %c0_10], %9 {strides = array<i32>} : memref<8x16x512xf32, #tpu.memory_space<vmem>>, vector<8x16x512xf32>,
    %cst_11 = arith.constant 0.000000e+00 : f32
    %11 = vector.broadcast %cst_11 : f32 to vector<16x128xf32>
    %c0_12 = arith.constant 0 : index
    %c0_13 = arith.constant 0 : index
    %12 = vector.load %arg7[%c0_12, %c0_13] : memref<16x128xf32, #tpu.memory_space<vmem>>, vector<16x128xf32>
    tpu.vector_store %arg7[%c0_12, %c0_13], %11 {strides = array<i32>} : memref<16x128xf32, #tpu.memory_space<vmem>>, vector<16x128xf32>,
    %cst_14 = arith.constant 0.000000e+00 : f32
    %13 = vector.broadcast %cst_14 : f32 to vector<16x128xf32>
    %c0_15 = arith.constant 0 : index
    %c0_16 = arith.constant 0 : index
    %14 = vector.load %arg8[%c0_15, %c0_16] : memref<16x128xf32, #tpu.memory_space<vmem>>, vector<16x128xf32>
    tpu.vector_store %arg8[%c0_15, %c0_16], %13 {strides = array<i32>} : memref<16x128xf32, #tpu.memory_space<vmem>>, vector<16x128xf32>,
    %c1_i32 = arith.constant 1 : i32
    %15 = arith.cmpi eq, %arg0, %c1_i32 : i32
    %c0_i32 = arith.constant 0 : i32
    %c8_i32 = arith.constant 8 : i32
    %16 = arith.addi %c0_i32, %c8_i32 : i32
    %c1_i32_17 = arith.constant 1 : i32
    scf.for %arg9 = %c0_i32 to %16 step %c1_i32_17  : i32 {
      %c7_i32 = arith.constant 7 : i32
      %17 = arith.subi %c7_i32, %arg9 : i32
      %18 = arith.select %15, %17, %arg9 : i32
      %19 = arith.index_cast %18 : i32 to index
      %c0_19 = arith.constant 0 : index
      %c0_20 = arith.constant 0 : index
      %20 = vector.load %arg6[%19, %c0_19, %c0_20] : memref<8x16x512xf32, #tpu.memory_space<vmem>>, vector<1x16x512xf32>
      %21 = vector.shape_cast %20 : vector<1x16x512xf32> to vector<16x512xf32>
      %c0_21 = arith.constant 0 : index
      %c0_22 = arith.constant 0 : index
      %22 = vector.load %arg7[%c0_21, %c0_22] : memref<16x128xf32, #tpu.memory_space<vmem>>, vector<16x128xf32>
      %23 = arith.truncf %22 : vector<16x128xf32> to vector<16x128xbf16>
      %c0_23 = arith.constant 0 : index
      %c0_24 = arith.constant 0 : index
      %c0_25 = arith.constant 0 : index
      %24 = vector.load %arg3[%c0_23, %c0_24, %c0_25] : memref<1x128x512xbf16, #tpu.memory_space<vmem>>, vector<1x128x512xbf16>
      %25 = vector.shape_cast %24 : vector<1x128x512xbf16> to vector<128x512xbf16>
      %cst_26 = arith.constant dense<0.000000e+00> : vector<16x512xf32>
      %26 = tpu.matmul %23, %25, %cst_26 {dimension_numbers = #tpu.dot_dimension_numbers<[1], [0], [0], [1], [0, 0, 1, 1], [], []>} : vector<16x128xbf16>, vector<128x512xbf16>, vector<16x512xf32> -> vector<16x512xf32>
      %27 = arith.addf %21, %26 : vector<16x512xf32>
      %28 = vector.extract_strided_slice %27 {offsets = [0, 0], sizes = [16, 128], strides = [1, 1]} : vector<16x512xf32> to vector<16x128xf32>
      %29 = arith.negf %28 : vector<16x128xf32>
      %30 = math.exp %29 : vector<16x128xf32>
      %cst_27 = arith.constant 1.000000e+00 : f32
      %31 = vector.broadcast %cst_27 : f32 to vector<16x128xf32>
      %32 = arith.addf %31, %30 : vector<16x128xf32>
      %33 = arith.divf %31, %32 : vector<16x128xf32>
      %34 = vector.extract_strided_slice %27 {offsets = [0, 128], sizes = [16, 128], strides = [1, 1]} : vector<16x512xf32> to vector<16x128xf32>
      %35 = arith.negf %34 : vector<16x128xf32>
      %36 = math.exp %35 : vector<16x128xf32>
      %cst_28 = arith.constant 1.000000e+00 : f32
      %37 = vector.broadcast %cst_28 : f32 to vector<16x128xf32>
      %38 = arith.addf %37, %36 : vector<16x128xf32>
      %39 = arith.divf %37, %38 : vector<16x128xf32>
      %40 = vector.extract_strided_slice %27 {offsets = [0, 256], sizes = [16, 128], strides = [1, 1]} : vector<16x512xf32> to vector<16x128xf32>
      %41 = math.tanh %40 : vector<16x128xf32>
      %42 = vector.extract_strided_slice %27 {offsets = [0, 384], sizes = [16, 128], strides = [1, 1]} : vector<16x512xf32> to vector<16x128xf32>
      %43 = arith.negf %42 : vector<16x128xf32>
      %44 = math.exp %43 : vector<16x128xf32>
      %cst_29 = arith.constant 1.000000e+00 : f32
      %45 = vector.broadcast %cst_29 : f32 to vector<16x128xf32>
      %46 = arith.addf %45, %44 : vector<16x128xf32>
      %47 = arith.divf %45, %46 : vector<16x128xf32>
      %c0_30 = arith.constant 0 : index
      %c0_31 = arith.constant 0 : index
      %48 = vector.load %arg8[%c0_30, %c0_31] : memref<16x128xf32, #tpu.memory_space<vmem>>, vector<16x128xf32>
      %49 = arith.mulf %39, %48 : vector<16x128xf32>
      %50 = arith.mulf %33, %41 : vector<16x128xf32>
      %51 = arith.addf %49, %50 : vector<16x128xf32>
      %52 = math.tanh %51 : vector<16x128xf32>
      %53 = arith.mulf %47, %52 : vector<16x128xf32>
      %c0_32 = arith.constant 0 : index
      %c0_33 = arith.constant 0 : index
      %54 = vector.load %arg8[%c0_32, %c0_33] : memref<16x128xf32, #tpu.memory_space<vmem>>, vector<16x128xf32>
      tpu.vector_store %arg8[%c0_32, %c0_33], %51 {strides = array<i32>} : memref<16x128xf32, #tpu.memory_space<vmem>>, vector<16x128xf32>,
      %c0_34 = arith.constant 0 : index
      %c0_35 = arith.constant 0 : index
      %55 = vector.load %arg7[%c0_34, %c0_35] : memref<16x128xf32, #tpu.memory_space<vmem>>, vector<16x128xf32>
      tpu.vector_store %arg7[%c0_34, %c0_35], %53 {strides = array<i32>} : memref<16x128xf32, #tpu.memory_space<vmem>>, vector<16x128xf32>,
      %56 = arith.truncf %53 : vector<16x128xf32> to vector<16x128xbf16>
      %57 = arith.index_cast %18 : i32 to index
      %c0_36 = arith.constant 0 : index
      %c0_37 = arith.constant 0 : index
      %58 = vector.load %arg5[%57, %c0_36, %c0_37] : memref<8x16x128xbf16, #tpu.memory_space<vmem>>, vector<1x16x128xbf16>
      %59 = vector.shape_cast %58 : vector<1x16x128xbf16> to vector<16x128xbf16>
      %60 = vector.shape_cast %56 : vector<16x128xbf16> to vector<1x16x128xbf16>
      tpu.vector_store %arg5[%57, %c0_36, %c0_37], %60 {strides = array<i32>} : memref<8x16x128xbf16, #tpu.memory_space<vmem>>, vector<1x16x128xbf16>,
    }
    %c8_i32_18 = arith.constant 8 : i32
    return
  }
  func.func @transform_0(%arg0: i32) -> (i32, i32, i32) {
    %c0_i32 = arith.constant 0 : i32
    %c0_i32_0 = arith.constant 0 : i32
    %c0_i32_1 = arith.constant 0 : i32
    %c0_i32_2 = arith.constant 0 : i32
    return %c0_i32, %c0_i32_0, %c0_i32_1 : i32, i32, i32
  }
  func.func @transform_1(%arg0: i32) -> (i32, i32, i32) {
    %c0_i32 = arith.constant 0 : i32
    %c0_i32_0 = arith.constant 0 : i32
    %c0_i32_1 = arith.constant 0 : i32
    return %arg0, %c0_i32, %c0_i32_0 : i32, i32, i32
  }
  func.func @transform_2(%arg0: i32) -> (i32, i32, i32) {
    %c0_i32 = arith.constant 0 : i32
    %c0_i32_0 = arith.constant 0 : i32
    %c0_i32_1 = arith.constant 0 : i32
    return %arg0, %c0_i32, %c0_i32_0 : i32, i32, i32
  }
  func.func @transform_3(%arg0: i32) -> (i32, i32, i32) {
    %c0_i32 = arith.constant 0 : i32
    %c0_i32_0 = arith.constant 0 : i32
    %c0_i32_1 = arith.constant 0 : i32
    return %arg0, %c0_i32, %c0_i32_0 : i32, i32, i32
  }
  func.func @transform_4(%arg0: i32) -> (i32, i32, i32) {
    %c0_i32 = arith.constant 0 : i32
    %c0_i32_0 = arith.constant 0 : i32
    %c0_i32_1 = arith.constant 0 : i32
    return %c0_i32, %c0_i32_0, %arg0 : i32, i32, i32
  }
}

module attributes {stable_mosaic.version = 11 : i64} {
  func.func @fc_logsoftmax_kernel(%arg0: i32, %arg1: memref<128x256xbf16, #tpu.memory_space<vmem>>, %arg2: memref<256x128xbf16, #tpu.memory_space<vmem>>, %arg3: memref<1x128xf32, #tpu.memory_space<vmem>>, %arg4: memref<128x128xf32, #tpu.memory_space<vmem>>) attributes {dimension_semantics = [#tpu.dimension_semantics<parallel>], iteration_bounds = array<i64: 1>, scalar_prefetch = 0 : i64, scratch_operands = 0 : i64, tpu.core_type = #tpu.core_type<tc>, window_params = [{transform_indices = @transform_0, window_bounds = array<i64: 128, 256>}, {pipeline_mode = #tpu.pipeline_mode<synchronous>, transform_indices = @transform_1, window_bounds = array<i64: 256, 128>}, {pipeline_mode = #tpu.pipeline_mode<synchronous>, transform_indices = @transform_2, window_bounds = array<i64: 1, 128>}, {transform_indices = @transform_3, window_bounds = array<i64: 128, 128>}]} {
    %c0 = arith.constant 0 : index
    %c0_0 = arith.constant 0 : index
    %0 = vector.load %arg1[%c0, %c0_0] : memref<128x256xbf16, #tpu.memory_space<vmem>>, vector<128x256xbf16>
    %c0_1 = arith.constant 0 : index
    %c0_2 = arith.constant 0 : index
    %1 = vector.load %arg2[%c0_1, %c0_2] : memref<256x128xbf16, #tpu.memory_space<vmem>>, vector<256x128xbf16>
    %cst = arith.constant dense<0.000000e+00> : vector<128x128xf32>
    %2 = tpu.matmul %0, %1, %cst {dimension_numbers = #tpu.dot_dimension_numbers<[1], [0], [0], [1], [0, 0, 1, 1], [], []>} : vector<128x256xbf16>, vector<256x128xbf16>, vector<128x128xf32> -> vector<128x128xf32>
    %c0_3 = arith.constant 0 : index
    %c0_4 = arith.constant 0 : index
    %3 = vector.load %arg3[%c0_3, %c0_4] : memref<1x128xf32, #tpu.memory_space<vmem>>, vector<1x128xf32>
    %4 = vector.broadcast %3 : vector<1x128xf32> to vector<128x128xf32>
    %5 = arith.addf %2, %4 : vector<128x128xf32>
    %6 = tpu.iota {dimensions = array<i32: 1>} : vector<128x128xi32>
    %c31_i32 = arith.constant 31 : i32
    %7 = vector.broadcast %c31_i32 : i32 to vector<128x128xi32>
    %8 = arith.cmpi slt, %6, %7 : vector<128x128xi32>
    %cst_5 = arith.constant -1.000000e+30 : f32
    %9 = vector.broadcast %cst_5 : f32 to vector<128x128xf32>
    %10 = arith.select %8, %5, %9 : vector<128x128xi1>, vector<128x128xf32>
    %cst_6 = arith.constant dense<0xFF800000> : vector<128xf32>
    %11 = vector.multi_reduction <maximumf>, %10, %cst_6 [1] : vector<128x128xf32> to vector<128xf32>
    %12 = vector.shape_cast %11 : vector<128xf32> to vector<128x1xf32>
    %13 = vector.broadcast %12 : vector<128x1xf32> to vector<128x128xf32>
    %14 = arith.subf %10, %13 : vector<128x128xf32>
    %15 = math.exp %14 : vector<128x128xf32>
    %cst_7 = arith.constant dense<0.000000e+00> : vector<128xf32>
    %16 = vector.multi_reduction <add>, %15, %cst_7 [1] : vector<128x128xf32> to vector<128xf32>
    %17 = vector.shape_cast %16 : vector<128xf32> to vector<128x1xf32>
    %18 = vector.broadcast %12 : vector<128x1xf32> to vector<128x128xf32>
    %19 = arith.subf %10, %18 : vector<128x128xf32>
    %20 = math.log %17 : vector<128x1xf32>
    %21 = vector.broadcast %20 : vector<128x1xf32> to vector<128x128xf32>
    %22 = arith.subf %19, %21 : vector<128x128xf32>
    %c0_8 = arith.constant 0 : index
    %c0_9 = arith.constant 0 : index
    %23 = vector.load %arg4[%c0_8, %c0_9] : memref<128x128xf32, #tpu.memory_space<vmem>>, vector<128x128xf32>
    tpu.vector_store %arg4[%c0_8, %c0_9], %22 {strides = array<i32>} : memref<128x128xf32, #tpu.memory_space<vmem>>, vector<128x128xf32>,
    return
  }
  func.func @transform_0(%arg0: i32) -> (i32, i32) {
    %c0_i32 = arith.constant 0 : i32
    %c0_i32_0 = arith.constant 0 : i32
    return %arg0, %c0_i32 : i32, i32
  }
  func.func @transform_1(%arg0: i32) -> (i32, i32) {
    %c0_i32 = arith.constant 0 : i32
    %c0_i32_0 = arith.constant 0 : i32
    %c0_i32_1 = arith.constant 0 : i32
    return %c0_i32, %c0_i32_0 : i32, i32
  }
  func.func @transform_2(%arg0: i32) -> (i32, i32) {
    %c0_i32 = arith.constant 0 : i32
    %c0_i32_0 = arith.constant 0 : i32
    %c0_i32_1 = arith.constant 0 : i32
    return %c0_i32, %c0_i32_0 : i32, i32
  }
  func.func @transform_3(%arg0: i32) -> (i32, i32) {
    %c0_i32 = arith.constant 0 : i32
    %c0_i32_0 = arith.constant 0 : i32
    return %arg0, %c0_i32 : i32, i32
  }
}

</mosaic_0001>

<llo_original>
// kernel: speech_recognition_forward.7
$region0: #{speech_recognition_forward.7}
  #allocation0 [shape = 'u32[]', space=smem, size = 0x4, offset = 0x4, fixed_abs, tag = 'smem constant byte address 0x4 - core index']
  #allocation1 [shape = 'u32[144,128]{1,0:T(1,128)}', space=vmem, size = 0x12000, scoped, tag = 'internal scratch']
  %s0 = inlined_call_operand.vmem [shape: bf16[128,256], index: 0, kind: input, shape index: {}]
  %s1 = inlined_call_operand.vmem [shape: bf16[256,128], index: 1, kind: input, shape index: {}]
  %s2 = inlined_call_operand.vmem [shape: f32[1,128], index: 2, kind: input, shape index: {}]
  %s3 = inlined_call_operand.vmem [shape: f32[128,128], index: 3, kind: output, shape index: {}]
  %s4 = sld [smem:[#allocation0]]
  $region22: #{speech_recognition_forward.7} parent=0
    _
  %s6 = ssub.s32 1, %s4
  %s7 = scalar_select 0, %s6, %s4
  // Predicated region
  $region2: #{speech_recognition_forward.7} parent=0 // pred_check
    _
  $region3: #{speech_recognition_forward.7} parent=0 // pred_check_branch
    %9 = sbr.rel (0) target = $region5
  $region4: #{speech_recognition_forward.7} parent=0 // pred_region
    _
  $region5: #{speech_recognition_forward.7} parent=0 // pred_fallthru
    _
  // Predicated region
  $region6: #{speech_recognition_forward.7} parent=0 // pred_check
    _
  $region7: #{speech_recognition_forward.7} parent=0 // pred_check_branch
    %11 = sbr.rel (0) target = $region9
  $region8: #{speech_recognition_forward.7} parent=0 // pred_region
    _
  $region9: #{speech_recognition_forward.7} parent=0 // pred_fallthru
    _
  // Predicated region
  $region10: #{speech_recognition_forward.7} parent=0 // pred_check
    _
  $region11: #{speech_recognition_forward.7} parent=0 // pred_check_branch
    %13 = sbr.rel (0) target = $region13
  $region12: #{speech_recognition_forward.7} parent=0 // pred_region
    _
  $region13: #{speech_recognition_forward.7} parent=0 // pred_fallthru
    _
  %v15 = vld [vmem:[%s0] sm:$0xff]
  %v16 = vld [vmem:[%s0 + $0x8] sm:$0xff]
  %v17 = vld [vmem:[%s0 + $0x10] sm:$0xff]
  %v18 = vld [vmem:[%s0 + $0x18] sm:$0xff]
  %v19 = vld [vmem:[%s0 + $0x20] sm:$0xff]
  %v20 = vld [vmem:[%s0 + $0x28] sm:$0xff]
  %v21 = vld [vmem:[%s0 + $0x30] sm:$0xff]
  %v22 = vld [vmem:[%s0 + $0x38] sm:$0xff]
  %v23 = vld [vmem:[%s0 + $0x40] sm:$0xff]
  %v24 = vld [vmem:[%s0 + $0x48] sm:$0xff]
  %v25 = vld [vmem:[%s0 + $0x50] sm:$0xff]
  %v26 = vld [vmem:[%s0 + $0x58] sm:$0xff]
  %v27 = vld [vmem:[%s0 + $0x60] sm:$0xff]
  %v28 = vld [vmem:[%s0 + $0x68] sm:$0xff]
  %v29 = vld [vmem:[%s0 + $0x70] sm:$0xff]
  %v30 = vld [vmem:[%s0 + $0x78] sm:$0xff]
  %v31 = vld [vmem:[%s1] sm:$0xf]
  %v32 = vld [vmem:[%s1 + $0x4] sm:$0xf]
  %v33 = vld [vmem:[%s1 + $0x8] sm:$0xf]
  %v34 = vld [vmem:[%s1 + $0xc] sm:$0xf]
  %v35 = vld [vmem:[%s1 + $0x10] sm:$0xf]
  %v36 = vld [vmem:[%s1 + $0x14] sm:$0xf]
  %v37 = vld [vmem:[%s1 + $0x18] sm:$0xf]
  %v38 = vld [vmem:[%s1 + $0x1c] sm:$0xf]
  %v39 = vld [vmem:[%s1 + $0x20] sm:$0xf]
  %v40 = vld [vmem:[%s1 + $0x24] sm:$0xf]
  %v41 = vld [vmem:[%s1 + $0x28] sm:$0xf]
  %v42 = vld [vmem:[%s1 + $0x2c] sm:$0xf]
  %v43 = vld [vmem:[%s1 + $0x30] sm:$0xf]
  %v44 = vld [vmem:[%s1 + $0x34] sm:$0xf]
  %v45 = vld [vmem:[%s1 + $0x38] sm:$0xf]
  %v46 = vld [vmem:[%s1 + $0x3c] sm:$0xf]
  %v47 = vld [vmem:[%s1 + $0x40] sm:$0xf]
  %v48 = vld [vmem:[%s1 + $0x44] sm:$0xf]
  %v49 = vld [vmem:[%s1 + $0x48] sm:$0xf]
  %v50 = vld [vmem:[%s1 + $0x4c] sm:$0xf]
  %v51 = vld [vmem:[%s1 + $0x50] sm:$0xf]
  %v52 = vld [vmem:[%s1 + $0x54] sm:$0xf]
  %v53 = vld [vmem:[%s1 + $0x58] sm:$0xf]
  %v54 = vld [vmem:[%s1 + $0x5c] sm:$0xf]
  %v55 = vld [vmem:[%s1 + $0x60] sm:$0xf]
  %v56 = vld [vmem:[%s1 + $0x64] sm:$0xf]
  %v57 = vld [vmem:[%s1 + $0x68] sm:$0xf]
  %v58 = vld [vmem:[%s1 + $0x6c] sm:$0xf]
  %v59 = vld [vmem:[%s1 + $0x70] sm:$0xf]
  %v60 = vld [vmem:[%s1 + $0x74] sm:$0xf]
  %v61 = vld [vmem:[%s1 + $0x78] sm:$0xf]
  %v62 = vld [vmem:[%s1 + $0x7c] sm:$0xf]
  %v63 = vld [vmem:[%s2] sm:$0x1]
  %v65 = vlaneseq
  %v66 = vshrl.u32 %v65, 7
  %v67 = vsub.s32 0, %v66
  %v68 = vrot.slane %v63, %v67
  %v86 = vunpack.c.l.b16 %v15
  %v87 = vunpack.c.h.b16 %v15
  %v88 = vunpack.c.l.b16 %v16
  %v89 = vunpack.c.h.b16 %v16
  %v90 = vunpack.c.l.b16 %v17
  %v91 = vunpack.c.h.b16 %v17
  %v92 = vunpack.c.l.b16 %v18
  %v93 = vunpack.c.h.b16 %v18
  %v94 = vunpack.c.l.b16 %v19
  %v95 = vunpack.c.h.b16 %v19
  %v96 = vunpack.c.l.b16 %v20
  %v97 = vunpack.c.h.b16 %v20
  %v98 = vunpack.c.l.b16 %v21
  %v99 = vunpack.c.h.b16 %v21
  %v100 = vunpack.c.l.b16 %v22
  %v101 = vunpack.c.h.b16 %v22
  %v102 = vunpack.c.l.b16 %v23
  %v103 = vunpack.c.h.b16 %v23
  %v104 = vunpack.c.l.b16 %v24
  %v105 = vunpack.c.h.b16 %v24
  %v106 = vunpack.c.l.b16 %v25
  %v107 = vunpack.c.h.b16 %v25
  %v108 = vunpack.c.l.b16 %v26
  %v109 = vunpack.c.h.b16 %v26
  %v110 = vunpack.c.l.b16 %v27
  %v111 = vunpack.c.h.b16 %v27
  %v112 = vunpack.c.l.b16 %v28
  %v113 = vunpack.c.h.b16 %v28
  %v114 = vunpack.c.l.b16 %v29
  %v115 = vunpack.c.h.b16 %v29
  %v116 = vunpack.c.l.b16 %v30
  %v117 = vunpack.c.h.b16 %v30
  %v118 = vpack.c.b16 %v88, %v86
  %v119 = vpack.c.b16 %v89, %v87
  %v120 = vpack.c.b16 %v92, %v90
  %v121 = vpack.c.b16 %v93, %v91
  %v122 = vpack.c.b16 %v96, %v94
  %v123 = vpack.c.b16 %v97, %v95
  %v124 = vpack.c.b16 %v100, %v98
  %v125 = vpack.c.b16 %v101, %v99
  %v126 = vpack.c.b16 %v104, %v102
  %v127 = vpack.c.b16 %v105, %v103
  %v128 = vpack.c.b16 %v108, %v106
  %v129 = vpack.c.b16 %v109, %v107
  %v130 = vpack.c.b16 %v112, %v110
  %v131 = vpack.c.b16 %v113, %v111
  %v132 = vpack.c.b16 %v116, %v114
  %v133 = vpack.c.b16 %v117, %v115
  %v182 = vunpack.c.l.b16 %v31
  %v183 = vunpack.c.l.b16 %v32
  %v184 = vunpack.c.l.b16 %v33
  %v185 = vunpack.c.l.b16 %v34
  %v186 = vunpack.c.l.b16 %v35
  %v187 = vunpack.c.l.b16 %v36
  %v188 = vunpack.c.l.b16 %v37
  %v189 = vunpack.c.l.b16 %v38
  %v190 = vunpack.c.l.b16 %v39
  %v191 = vunpack.c.l.b16 %v40
  %v192 = vunpack.c.l.b16 %v41
  %v193 = vunpack.c.l.b16 %v42
  %v194 = vunpack.c.l.b16 %v43
  %v195 = vunpack.c.l.b16 %v44
  %v196 = vunpack.c.l.b16 %v45
  %v197 = vunpack.c.l.b16 %v46
  %v198 = vunpack.c.l.b16 %v47
  %v199 = vunpack.c.l.b16 %v48
  %v200 = vunpack.c.l.b16 %v49
  %v201 = vunpack.c.l.b16 %v50
  %v202 = vunpack.c.l.b16 %v51
  %v203 = vunpack.c.l.b16 %v52
  %v204 = vunpack.c.l.b16 %v53
  %v205 = vunpack.c.l.b16 %v54
  %v206 = vunpack.c.l.b16 %v55
  %v207 = vunpack.c.l.b16 %v56
  %v208 = vunpack.c.l.b16 %v57
  %v209 = vunpack.c.l.b16 %v58
  %v210 = vunpack.c.l.b16 %v59
  %v211 = vunpack.c.l.b16 %v60
  %v212 = vunpack.c.l.b16 %v61
  %v213 = vunpack.c.l.b16 %v62
  %v214 = vpack.c.b16 %v183, %v182
  %v215 = vpack.c.b16 %v185, %v184
  %v216 = vpack.c.b16 %v187, %v186
  %v217 = vpack.c.b16 %v189, %v188
  %v218 = vpack.c.b16 %v191, %v190
  %v219 = vpack.c.b16 %v193, %v192
  %v220 = vpack.c.b16 %v195, %v194
  %v221 = vpack.c.b16 %v197, %v196
  %v222 = vpack.c.b16 %v199, %v198
  %v223 = vpack.c.b16 %v201, %v200
  %v224 = vpack.c.b16 %v203, %v202
  %v225 = vpack.c.b16 %v205, %v204
  %v226 = vpack.c.b16 %v207, %v206
  %v227 = vpack.c.b16 %v209, %v208
  %v228 = vpack.c.b16 %v211, %v210
  %v229 = vpack.c.b16 %v213, %v212
  %246 = vmatprep.subr.bf16.mxu0 0
  %247 = vmatpush1.bf16.msra.mxu0 %v214
  %248 = vmatprep.subr.bf16.mxu0 0
  %249 = vmatpush1.bf16.msra.mxu0 %v215
  %250 = vmatprep.subr.bf16.mxu0 0
  %251 = vmatpush1.bf16.msra.mxu0 %v216
  %252 = vmatprep.subr.bf16.mxu0 0
  %253 = vmatpush1.bf16.msra.mxu0 %v217
  %254 = vmatprep.subr.bf16.mxu0 0
  %255 = vmatpush1.bf16.msra.mxu0 %v218
  %256 = vmatprep.subr.bf16.mxu0 0
  %257 = vmatpush1.bf16.msra.mxu0 %v219
  %258 = vmatprep.subr.bf16.mxu0 0
  %259 = vmatpush1.bf16.msra.mxu0 %v220
  %260 = vmatprep.subr.bf16.mxu0 0
  %261 = vmatpush1.bf16.msra.mxu0 %v221
  %262 = vmatprep.subr.bf16.mxu0 0
  %263 = vmatpush1.bf16.msra.mxu0 %v222
  %264 = vmatprep.subr.bf16.mxu0 0
  %265 = vmatpush1.bf16.msra.mxu0 %v223
  %266 = vmatprep.subr.bf16.mxu0 0
  %267 = vmatpush1.bf16.msra.mxu0 %v224
  %268 = vmatprep.subr.bf16.mxu0 0
  %269 = vmatpush1.bf16.msra.mxu0 %v225
  %270 = vmatprep.subr.bf16.mxu0 0
  %271 = vmatpush1.bf16.msra.mxu0 %v226
  %272 = vmatprep.subr.bf16.mxu0 0
  %273 = vmatpush1.bf16.msra.mxu0 %v227
  %274 = vmatprep.subr.bf16.mxu0 0
  %275 = vmatpush1.bf16.msra.mxu0 %v228
  %276 = vmatprep.subr.bf16.mxu0 0
  %277 = vmatpush1.bf16.msra.mxu0 %v229
  %278 = vmatprep.mubr.bf16.mxu0 %v119
  %279 = vmatmul.mubr.bf16.gmra.mrb[0].mxu0 %v118
  %v280 = vpop.f32.mrb[0].mxu0
  %v281 = vadd.f32 %v68, %v280
  %v282 = vpop.f32.mrb[0].mxu0
  %v283 = vpop.f32.mrb[0].mxu0
  %v284 = vadd.f32 %v68, %v283
  %v285 = vpop.f32.mrb[0].mxu0
  %286 = vmatprep.mubr.bf16.mxu0 %v121
  %287 = vmatmul.mubr.bf16.gmra.mrb[0].mxu0 %v120
  %v288 = vpop.f32.mrb[0].mxu0
  %v289 = vadd.f32 %v68, %v288
  %v290 = vpop.f32.mrb[0].mxu0
  %v291 = vpop.f32.mrb[0].mxu0
  %v292 = vadd.f32 %v68, %v291
  %v293 = vpop.f32.mrb[0].mxu0
  %294 = vmatprep.mubr.bf16.mxu0 %v123
  %295 = vmatmul.mubr.bf16.gmra.mrb[0].mxu0 %v122
  %v296 = vpop.f32.mrb[0].mxu0
  %v297 = vadd.f32 %v68, %v296
  %v298 = vpop.f32.mrb[0].mxu0
  %v299 = vpop.f32.mrb[0].mxu0
  %v300 = vadd.f32 %v68, %v299
  %v301 = vpop.f32.mrb[0].mxu0
  %302 = vmatprep.mubr.bf16.mxu0 %v125
  %303 = vmatmul.mubr.bf16.gmra.mrb[0].mxu0 %v124
  %v304 = vpop.f32.mrb[0].mxu0
  %v305 = vadd.f32 %v68, %v304
  %v306 = vpop.f32.mrb[0].mxu0
  %v307 = vpop.f32.mrb[0].mxu0
  %v308 = vadd.f32 %v68, %v307
  %v309 = vpop.f32.mrb[0].mxu0
  %310 = vmatprep.mubr.bf16.mxu0 %v127
  %311 = vmatmul.mubr.bf16.gmra.mrb[0].mxu0 %v126
  %v312 = vpop.f32.mrb[0].mxu0
  %v313 = vadd.f32 %v68, %v312
  %v314 = vpop.f32.mrb[0].mxu0
  %v315 = vpop.f32.mrb[0].mxu0
  %v316 = vadd.f32 %v68, %v315
  %v317 = vpop.f32.mrb[0].mxu0
  %318 = vmatprep.mubr.bf16.mxu0 %v129
  %319 = vmatmul.mubr.bf16.gmra.mrb[0].mxu0 %v128
  %v320 = vpop.f32.mrb[0].mxu0
  %v321 = vadd.f32 %v68, %v320
  %v322 = vpop.f32.mrb[0].mxu0
  %v323 = vpop.f32.mrb[0].mxu0
  %v324 = vadd.f32 %v68, %v323
  %v325 = vpop.f32.mrb[0].mxu0
  %326 = vmatprep.mubr.bf16.mxu0 %v131
  %327 = vmatmul.mubr.bf16.gmra.mrb[0].mxu0 %v130
  %v328 = vpop.f32.mrb[0].mxu0
  %v329 = vadd.f32 %v68, %v328
  %v330 = vpop.f32.mrb[0].mxu0
  %v331 = vpop.f32.mrb[0].mxu0
  %v332 = vadd.f32 %v68, %v331
  %v333 = vpop.f32.mrb[0].mxu0
  %334 = vmatprep.mubr.bf16.mxu0 %v133
  %335 = vmatmul.mubr.bf16.gmra.mrb[0].mxu0 %v132
  %v336 = vpop.f32.mrb[0].mxu0
  %v337 = vadd.f32 %v68, %v336
  %v338 = vpop.f32.mrb[0].mxu0
  %v339 = vpop.f32.mrb[0].mxu0
  %v340 = vadd.f32 %v68, %v339
  %v341 = vpop.f32.mrb[0].mxu0
  %342 = vdwg.mxu0
  %v343 = vlaneseq
  %v344 = vand.u32 %v343, 127
  %vm345 = vcmp.lt.s32.totalorder %v344, 31
  %v346 = vsel %vm345, %v281, -1e+30
  %v347 = vsel %vm345, %v284, -1e+30
  %v348 = vsel %vm345, %v289, -1e+30
  %v349 = vsel %vm345, %v292, -1e+30
  %v350 = vsel %vm345, %v297, -1e+30
  %v351 = vsel %vm345, %v300, -1e+30
  %v352 = vsel %vm345, %v305, -1e+30
  %v353 = vsel %vm345, %v308, -1e+30
  %v354 = vsel %vm345, %v313, -1e+30
  %v355 = vsel %vm345, %v316, -1e+30
  %v356 = vsel %vm345, %v321, -1e+30
  %v357 = vsel %vm345, %v324, -1e+30
  %v358 = vsel %vm345, %v329, -1e+30
  %v359 = vsel %vm345, %v332, -1e+30
  %v360 = vsel %vm345, %v337, -1e+30
  %v361 = vsel %vm345, %v340, -1e+30
  %362 = vmax.xlane.f32.xlu0 %v346
  %v363 = vpop.xlane.xlu0 %362
  %364 = vmax.xlane.f32.xlu0 %v347
  %v365 = vpop.xlane.xlu0 %364
  %366 = vmax.xlane.f32.xlu0 %v348
  %v367 = vpop.xlane.xlu0 %366
  %368 = vmax.xlane.f32.xlu0 %v349
  %v369 = vpop.xlane.xlu0 %368
  %370 = vmax.xlane.f32.xlu0 %v350
  %v371 = vpop.xlane.xlu0 %370
  %372 = vmax.xlane.f32.xlu0 %v351
  %v373 = vpop.xlane.xlu0 %372
  %374 = vmax.xlane.f32.xlu0 %v352
  %v375 = vpop.xlane.xlu0 %374
  %376 = vmax.xlane.f32.xlu0 %v353
  %v377 = vpop.xlane.xlu0 %376
  %378 = vmax.xlane.f32.xlu0 %v354
  %v379 = vpop.xlane.xlu0 %378
  %380 = vmax.xlane.f32.xlu0 %v355
  %v381 = vpop.xlane.xlu0 %380
  %382 = vmax.xlane.f32.xlu0 %v356
  %v383 = vpop.xlane.xlu0 %382
  %384 = vmax.xlane.f32.xlu0 %v357
  %v385 = vpop.xlane.xlu0 %384
  %386 = vmax.xlane.f32.xlu0 %v358
  %v387 = vpop.xlane.xlu0 %386
  %388 = vmax.xlane.f32.xlu0 %v359
  %v389 = vpop.xlane.xlu0 %388
  %390 = vmax.xlane.f32.xlu0 %v360
  %v391 = vpop.xlane.xlu0 %390
  %392 = vmax.xlane.f32.xlu0 %v361
  %v393 = vpop.xlane.xlu0 %392
  %v394 = vsub.f32 %v346, %v363
  %v395 = vsub.f32 %v347, %v365
  %v396 = vsub.f32 %v348, %v367
  %v397 = vsub.f32 %v349, %v369
  %v398 = vsub.f32 %v350, %v371
  %v399 = vsub.f32 %v351, %v373
  %v400 = vsub.f32 %v352, %v375
  %v401 = vsub.f32 %v353, %v377
  %v402 = vsub.f32 %v354, %v379
  %v403 = vsub.f32 %v355, %v381
  %v404 = vsub.f32 %v356, %v383
  %v405 = vsub.f32 %v357, %v385
  %v406 = vsub.f32 %v358, %v387
  %v407 = vsub.f32 %v359, %v389
  %v408 = vsub.f32 %v360, %v391
  %v409 = vsub.f32 %v361, %v393
  %v410 = vmul.f32 %v394, 1.442695
  %v411 = vpow.pop %v410
  %v412 = vmul.f32 %v395, 1.442695
  %v413 = vpow.pop %v412
  %v414 = vmul.f32 %v396, 1.442695
  %v415 = vpow.pop %v414
  %v416 = vmul.f32 %v397, 1.442695
  %v417 = vpow.pop %v416
  %v418 = vmul.f32 %v398, 1.442695
  %v419 = vpow.pop %v418
  %v420 = vmul.f32 %v399, 1.442695
  %v421 = vpow.pop %v420
  %v422 = vmul.f32 %v400, 1.442695
  %v423 = vpow.pop %v422
  %v424 = vmul.f32 %v401, 1.442695
  %v425 = vpow.pop %v424
  %v426 = vmul.f32 %v402, 1.442695
  %v427 = vpow.pop %v426
  %v428 = vmul.f32 %v403, 1.442695
  %v429 = vpow.pop %v428
  %v430 = vmul.f32 %v404, 1.442695
  %v431 = vpow.pop %v430
  %v432 = vmul.f32 %v405, 1.442695
  %v433 = vpow.pop %v432
  %v434 = vmul.f32 %v406, 1.442695
  %v435 = vpow.pop %v434
  %v436 = vmul.f32 %v407, 1.442695
  %v437 = vpow.pop %v436
  %v438 = vmul.f32 %v408, 1.442695
  %v439 = vpow.pop %v438
  %v440 = vmul.f32 %v409, 1.442695
  %v441 = vpow.pop %v440
  %442 = vadd.xlane.f32.xlu0 %v411
  %v443 = vpop.xlane.xlu0 %442
  %444 = vadd.xlane.f32.xlu0 %v413
  %v445 = vpop.xlane.xlu0 %444
  %446 = vadd.xlane.f32.xlu0 %v415
  %v447 = vpop.xlane.xlu0 %446
  %448 = vadd.xlane.f32.xlu0 %v417
  %v449 = vpop.xlane.xlu0 %448
  %450 = vadd.xlane.f32.xlu0 %v419
  %v451 = vpop.xlane.xlu0 %450
  %452 = vadd.xlane.f32.xlu0 %v421
  %v453 = vpop.xlane.xlu0 %452
  %454 = vadd.xlane.f32.xlu0 %v423
  %v455 = vpop.xlane.xlu0 %454
  %456 = vadd.xlane.f32.xlu0 %v425
  %v457 = vpop.xlane.xlu0 %456
  %458 = vadd.xlane.f32.xlu0 %v427
  %v459 = vpop.xlane.xlu0 %458
  %460 = vadd.xlane.f32.xlu0 %v429
  %v461 = vpop.xlane.xlu0 %460
  %462 = vadd.xlane.f32.xlu0 %v431
  %v463 = vpop.xlane.xlu0 %462
  %464 = vadd.xlane.f32.xlu0 %v433
  %v465 = vpop.xlane.xlu0 %464
  %466 = vadd.xlane.f32.xlu0 %v435
  %v467 = vpop.xlane.xlu0 %466
  %468 = vadd.xlane.f32.xlu0 %v437
  %v469 = vpop.xlane.xlu0 %468
  %470 = vadd.xlane.f32.xlu0 %v439
  %v471 = vpop.xlane.xlu0 %470
  %472 = vadd.xlane.f32.xlu0 %v441
  %v473 = vpop.xlane.xlu0 %472
  %v474 = vlog2.pop %v443
  %v475 = vmul.f32 %v474, 0.6931472
  %v476 = vlog2.pop %v445
  %v477 = vmul.f32 %v476, 0.6931472
  %v478 = vlog2.pop %v447
  %v479 = vmul.f32 %v478, 0.6931472
  %v480 = vlog2.pop %v449
  %v481 = vmul.f32 %v480, 0.6931472
  %v482 = vlog2.pop %v451
  %v483 = vmul.f32 %v482, 0.6931472
  %v484 = vlog2.pop %v453
  %v485 = vmul.f32 %v484, 0.6931472
  %v486 = vlog2.pop %v455
  %v487 = vmul.f32 %v486, 0.6931472
  %v488 = vlog2.pop %v457
  %v489 = vmul.f32 %v488, 0.6931472
  %v490 = vlog2.pop %v459
  %v491 = vmul.f32 %v490, 0.6931472
  %v492 = vlog2.pop %v461
  %v493 = vmul.f32 %v492, 0.6931472
  %v494 = vlog2.pop %v463
  %v495 = vmul.f32 %v494, 0.6931472
  %v496 = vlog2.pop %v465
  %v497 = vmul.f32 %v496, 0.6931472
  %v498 = vlog2.pop %v467
  %v499 = vmul.f32 %v498, 0.6931472
  %v500 = vlog2.pop %v469
  %v501 = vmul.f32 %v500, 0.6931472
  %v502 = vlog2.pop %v471
  %v503 = vmul.f32 %v502, 0.6931472
  %v504 = vlog2.pop %v473
  %v505 = vmul.f32 %v504, 0.6931472
  %v506 = vsub.f32 %v394, %v475
  %v507 = vsub.f32 %v395, %v477
  %v508 = vsub.f32 %v396, %v479
  %v509 = vsub.f32 %v397, %v481
  %v510 = vsub.f32 %v398, %v483
  %v511 = vsub.f32 %v399, %v485
  %v512 = vsub.f32 %v400, %v487
  %v513 = vsub.f32 %v401, %v489
  %v514 = vsub.f32 %v402, %v491
  %v515 = vsub.f32 %v403, %v493
  %v516 = vsub.f32 %v404, %v495
  %v517 = vsub.f32 %v405, %v497
  %v518 = vsub.f32 %v406, %v499
  %v519 = vsub.f32 %v407, %v501
  %v520 = vsub.f32 %v408, %v503
  %v521 = vsub.f32 %v409, %v505
  %522 = vst [vmem:[%s3] sm:$0xff] %v506
  %523 = vst [vmem:[%s3 + $0x8] sm:$0xff] %v507
  %524 = vst [vmem:[%s3 + $0x10] sm:$0xff] %v508
  %525 = vst [vmem:[%s3 + $0x18] sm:$0xff] %v509
  %526 = vst [vmem:[%s3 + $0x20] sm:$0xff] %v510
  %527 = vst [vmem:[%s3 + $0x28] sm:$0xff] %v511
  %528 = vst [vmem:[%s3 + $0x30] sm:$0xff] %v512
  %529 = vst [vmem:[%s3 + $0x38] sm:$0xff] %v513
  %530 = vst [vmem:[%s3 + $0x40] sm:$0xff] %v514
  %531 = vst [vmem:[%s3 + $0x48] sm:$0xff] %v515
  %532 = vst [vmem:[%s3 + $0x50] sm:$0xff] %v516
  %533 = vst [vmem:[%s3 + $0x58] sm:$0xff] %v517
  %534 = vst [vmem:[%s3 + $0x60] sm:$0xff] %v518
  %535 = vst [vmem:[%s3 + $0x68] sm:$0xff] %v519
  %536 = vst [vmem:[%s3 + $0x70] sm:$0xff] %v520
  %537 = vst [vmem:[%s3 + $0x78] sm:$0xff] %v521
  // Predicated region
  $region14: #{speech_recognition_forward.7} parent=0 // pred_check
    _
  $region15: #{speech_recognition_forward.7} parent=0 // pred_check_branch
    %539 = sbr.rel (0) target = $region17
  $region16: #{speech_recognition_forward.7} parent=0 // pred_region
    _
  $region17: #{speech_recognition_forward.7} parent=0 // pred_fallthru
    _
  // Predicated region
  $region18: #{speech_recognition_forward.7} parent=0 // pred_check
    _
  $region19: #{speech_recognition_forward.7} parent=0 // pred_check_branch
    %541 = sbr.rel (0) target = $region21
  $region20: #{speech_recognition_forward.7} parent=0 // pred_region
    _
  $region21: #{speech_recognition_forward.7} parent=0 // pred_fallthru
    _

// kernel: speech_recognition_forward.4
$region0: #{speech_recognition_forward.4}
  #allocation0 [shape = 'u32[]', space=smem, size = 0x4, offset = 0x4, fixed_abs, tag = 'smem constant byte address 0x4 - core index']
  #allocation1 [shape = 'u32[144,128]{1,0:T(1,128)}', space=vmem, size = 0x12000, scoped, tag = 'internal scratch']
  #allocation2 [shape = 'f32[8,16,512]{2,1,0:T(8,128)}', space=vmem, size = 0x40000, scoped, tag = 'scratch operand']
  #allocation3 [shape = 'f32[16,128]{1,0:T(8,128)}', space=vmem, size = 0x2000, scoped, tag = 'scratch operand']
  #allocation4 [shape = 'f32[16,128]{1,0:T(8,128)}', space=vmem, size = 0x2000, scoped, tag = 'scratch operand']
  %s0 = inlined_call_operand.vmem [shape: bf16[8,16,128], index: 0, kind: input, shape index: {}]
  %s1 = inlined_call_operand.vmem [shape: bf16[2,128,512], index: 1, kind: input, shape index: {}]
  %s2 = inlined_call_operand.vmem [shape: bf16[2,128,512], index: 2, kind: input, shape index: {}]
  %s3 = inlined_call_operand.vmem [shape: f32[2,1,512], index: 3, kind: input, shape index: {}]
  %s4 = inlined_call_operand.vmem [shape: bf16[8,16,256], index: 4, kind: output, shape index: {}]
  %s5 = sld [smem:[#allocation0]]
  $region93: #{speech_recognition_forward.4} parent=0
    _
  %s7 = ssub.s32 1, %s5
  %s8 = scalar_select 0, %s7, %s5
  $region1: #{speech_recognition_forward.4} parent=0
    #allocation5 [shape = 'u8[65536]{0}', space=vmem, size = 0x10000, scoped, tag = 'output window, operand 0']
    loop: start=0, step=1, limit=4
    $region2: #{speech_recognition_forward.4} parent=1 // loop_pre_header
      _
    $region3: #{speech_recognition_forward.4} parent=1 // loop_header
      %s10 = sphi 0, %s14
      %p11 = scmp.ge.s32.totalorder %s10, 4
      %s18 = sphi 0, %s18
      %s20 = sphi 0, %s18
      %s21 = sphi 0, %s20
      %s35 = sphi 0, %s21
      %s41 = sphi 0, %s43
      %s44 = sphi 0, %s41
      %s45 = sphi 0, %s44
      %s61 = sphi 0, %s45
      %s67 = sphi 0, %s69
      %s70 = sphi 0, %s67
      %s71 = sphi 0, %s70
      %s87 = sphi 0, %s71
      %s93 = sphi 0, %s95
      %s96 = sphi 0, %s93
      %s97 = sphi 0, %s96
      %s113 = sphi 0, %s97
      %s119 = sphi 0, %s121
      %s122 = sphi 0, %s119
      %s123 = sphi 0, %s122
      %s139 = sphi 0, %s123
    $region4: #{speech_recognition_forward.4} parent=1 // loop_header_branch
      %13 = sbr.rel (%p11) target = $region8
    $region5: #{speech_recognition_forward.4} parent=1 // loop_body
      %s15 = ssub.s32 %s10, 1
      %s16 = ssub.s32 %s10, 2
      %s17 = sadd.s32 %s10, 1
      %s19 = sadd.s32 %s18, 1
      %p22 = scmp.eq.s32.totalorder %s10, 1
      %p23 = scmp.ne.s32.totalorder %s18, %s20
      %p24 = scmp.eq.s32.totalorder %s10, 0
      %p25 = por %p23, %p24
      %p26 = scmp.ne.s32.totalorder %s18, %s20
      %p27 = scmp.eq.s32.totalorder %s15, 1
      %p28 = por %p26, %p27
      %p29 = scmp.ne.s32.totalorder %s20, %s21
      %p30 = scmp.eq.s32.totalorder %s15, 0
      %p31 = por %p29, %p30
      %p32 = scmp.ne.s32.totalorder %s20, %s21
      %p33 = scmp.eq.s32.totalorder %s16, 1
      %p34 = por %p32, %p33
      %p36 = scmp.ne.s32.totalorder %s21, %s35
      %p37 = scmp.eq.s32.totalorder %s16, 0
      %p38 = por %p36, %p37
      %s39 = ssub.s32 %s10, %s17
      %p40 = scmp.eq.s32.totalorder %s39, 0
      %s42 = sadd.s32 %s41, 1
      %s43 = scalar_select %p40, %s41, %s42
      %p46 = pneg %p40
      %p47 = scmp.eq.s32.totalorder %s10, 1
      %p48 = por %p46, %p47
      %p49 = scmp.ne.s32.totalorder %s41, %s44
      %p50 = scmp.eq.s32.totalorder %s10, 0
      %p51 = por %p49, %p50
      %p52 = scmp.ne.s32.totalorder %s41, %s44
      %p53 = scmp.eq.s32.totalorder %s15, 1
      %p54 = por %p52, %p53
      %p55 = scmp.ne.s32.totalorder %s44, %s45
      %p56 = scmp.eq.s32.totalorder %s15, 0
      %p57 = por %p55, %p56
      %p58 = scmp.ne.s32.totalorder %s44, %s45
      %p59 = scmp.eq.s32.totalorder %s16, 1
      %p60 = por %p58, %p59
      %p62 = scmp.ne.s32.totalorder %s45, %s61
      %p63 = scmp.eq.s32.totalorder %s16, 0
      %p64 = por %p62, %p63
      %s65 = ssub.s32 %s10, %s17
      %p66 = scmp.eq.s32.totalorder %s65, 0
      %s68 = sadd.s32 %s67, 1
      %s69 = scalar_select %p66, %s67, %s68
      %p72 = pneg %p66
      %p73 = scmp.eq.s32.totalorder %s10, 1
      %p74 = por %p72, %p73
      %p75 = scmp.ne.s32.totalorder %s67, %s70
      %p76 = scmp.eq.s32.totalorder %s10, 0
      %p77 = por %p75, %p76
      %p78 = scmp.ne.s32.totalorder %s67, %s70
      %p79 = scmp.eq.s32.totalorder %s15, 1
      %p80 = por %p78, %p79
      %p81 = scmp.ne.s32.totalorder %s70, %s71
      %p82 = scmp.eq.s32.totalorder %s15, 0
      %p83 = por %p81, %p82
      %p84 = scmp.ne.s32.totalorder %s70, %s71
      %p85 = scmp.eq.s32.totalorder %s16, 1
      %p86 = por %p84, %p85
      %p88 = scmp.ne.s32.totalorder %s71, %s87
      %p89 = scmp.eq.s32.totalorder %s16, 0
      %p90 = por %p88, %p89
      %s91 = ssub.s32 %s10, %s17
      %p92 = scmp.eq.s32.totalorder %s91, 0
      %s94 = sadd.s32 %s93, 1
      %s95 = scalar_select %p92, %s93, %s94
      %p98 = pneg %p92
      %p99 = scmp.eq.s32.totalorder %s10, 1
      %p100 = por %p98, %p99
      %p101 = scmp.ne.s32.totalorder %s93, %s96
      %p102 = scmp.eq.s32.totalorder %s10, 0
      %p103 = por %p101, %p102
      %p104 = scmp.ne.s32.totalorder %s93, %s96
      %p105 = scmp.eq.s32.totalorder %s15, 1
      %p106 = por %p104, %p105
      %p107 = scmp.ne.s32.totalorder %s96, %s97
      %p108 = scmp.eq.s32.totalorder %s15, 0
      %p109 = por %p107, %p108
      %p110 = scmp.ne.s32.totalorder %s96, %s97
      %p111 = scmp.eq.s32.totalorder %s16, 1
      %p112 = por %p110, %p111
      %p114 = scmp.ne.s32.totalorder %s97, %s113
      %p115 = scmp.eq.s32.totalorder %s16, 0
      %p116 = por %p114, %p115
      %s117 = ssub.s32 %s10, %s17
      %p118 = scmp.eq.s32.totalorder %s117, 0
      %s120 = sadd.s32 %s119, 1
      %s121 = scalar_select %p118, %s119, %s120
      %p124 = pneg %p118
      %p125 = scmp.eq.s32.totalorder %s10, 1
      %p126 = por %p124, %p125
      %p127 = scmp.ne.s32.totalorder %s119, %s122
      %p128 = scmp.eq.s32.totalorder %s10, 0
      %p129 = por %p127, %p128
      %p130 = scmp.ne.s32.totalorder %s119, %s122
      %p131 = scmp.eq.s32.totalorder %s15, 1
      %p132 = por %p130, %p131
      %p133 = scmp.ne.s32.totalorder %s122, %s123
      %p134 = scmp.eq.s32.totalorder %s15, 0
      %p135 = por %p133, %p134
      %p136 = scmp.ne.s32.totalorder %s122, %s123
      %p137 = scmp.eq.s32.totalorder %s16, 1
      %p138 = por %p136, %p137
      %p140 = scmp.ne.s32.totalorder %s123, %s139
      %p141 = scmp.eq.s32.totalorder %s16, 0
      %p142 = por %p140, %p141
      %p143 = scmp.le.s32.totalorder 1, %s10
      %p144 = scmp.lt.s32.totalorder %s10, 3
      %p145 = pnand %p143, %p144
      %p146 = pneg %p145
      // Predicated region
      $region9: #{speech_recognition_forward.4} parent=5 // pred_check
        _
      $region10: #{speech_recognition_forward.4} parent=5 // pred_check_branch
        %148 = sbr.rel (%p145) target = $region12
      $region11: #{speech_recognition_forward.4} parent=5 // pred_region
        %s149 = ssub.s32 %s10, 1
        // Predicated region
        $region13: #{speech_recognition_forward.4} parent=11 // pred_check
          %p150 = pneg %p31
        $region14: #{speech_recognition_forward.4} parent=11 // pred_check_branch
          %152 = sbr.rel (%p150) target = $region16
        $region15: #{speech_recognition_forward.4} parent=11 // pred_region
          _
        $region16: #{speech_recognition_forward.4} parent=11 // pred_fallthru
          _
      $region12: #{speech_recognition_forward.4} parent=5 // pred_fallthru
        _
      %p153 = scmp.lt.s32.totalorder %s10, 2
      // Predicated region
      $region17: #{speech_recognition_forward.4} parent=5 // pred_check
        %p154 = pneg %p153
      $region18: #{speech_recognition_forward.4} parent=5 // pred_check_branch
        %156 = sbr.rel (%p154) target = $region20
      $region19: #{speech_recognition_forward.4} parent=5 // pred_region
        // Predicated region
        $region21: #{speech_recognition_forward.4} parent=19 // pred_check
          %p157 = pneg %p51
        $region22: #{speech_recognition_forward.4} parent=19 // pred_check_branch
          %159 = sbr.rel (%p157) target = $region24
        $region23: #{speech_recognition_forward.4} parent=19 // pred_region
          %p160 = scmp.lt.s32.totalorder %s10, 1
          %s161 = scalar_select %p160, %s10, 1
          %s162 = smul.addr %s161, 64
          %s163 = smul.addr %s162, 4
          %s164 = scalar_lea.vmem %s1, %s163
        $region24: #{speech_recognition_forward.4} parent=19 // pred_fallthru
          _
        // Predicated region
        $region25: #{speech_recognition_forward.4} parent=19 // pred_check
          %p165 = pneg %p77
        $region26: #{speech_recognition_forward.4} parent=19 // pred_check_branch
          %167 = sbr.rel (%p165) target = $region28
        $region27: #{speech_recognition_forward.4} parent=19 // pred_region
          %p168 = scmp.lt.s32.totalorder %s10, 1
          %s169 = scalar_select %p168, %s10, 1
          %s170 = smul.addr %s169, 64
          %s171 = smul.addr %s170, 4
          %s172 = scalar_lea.vmem %s2, %s171
        $region28: #{speech_recognition_forward.4} parent=19 // pred_fallthru
          _
        // Predicated region
        $region29: #{speech_recognition_forward.4} parent=19 // pred_check
          %p173 = pneg %p103
        $region30: #{speech_recognition_forward.4} parent=19 // pred_check_branch
          %175 = sbr.rel (%p173) target = $region32
        $region31: #{speech_recognition_forward.4} parent=19 // pred_region
          %p176 = scmp.lt.s32.totalorder %s10, 1
          %s177 = scalar_select %p176, %s10, 1
          %s178 = smul.addr %s177, 4
          %s179 = scalar_lea.vmem %s3, %s178
        $region32: #{speech_recognition_forward.4} parent=19 // pred_fallthru
          _
      $region20: #{speech_recognition_forward.4} parent=5 // pred_fallthru
        _
      %p180 = scmp.le.s32.totalorder 1, %s10
      %p181 = scmp.lt.s32.totalorder %s10, 3
      %p182 = pnand %p180, %p181
      %p183 = pneg %p182
      // Predicated region
      $region33: #{speech_recognition_forward.4} parent=5 // pred_check
        _
      $region34: #{speech_recognition_forward.4} parent=5 // pred_check_branch
        %185 = sbr.rel (%p182) target = $region36
      $region35: #{speech_recognition_forward.4} parent=5 // pred_region
        %s186 = ssub.s32 %s10, 1
        %p187 = pneg %p31
        %p188 = pneg %p28
        %p189 = scmp.lt.s32.totalorder %s15, 1
        %s190 = scalar_select %p189, %s15, 1
        %s191 = smul.addr %s190, 64
        %s192 = smul.addr %s191, 4
        %s193 = scalar_lea.vmem %s1, %s192
        %p194 = pneg %p57
        %p195 = pneg %p54
        %p196 = scmp.lt.s32.totalorder %s15, 1
        %s197 = scalar_select %p196, %s15, 1
        %s198 = smul.addr %s197, 64
        %s199 = smul.addr %s198, 4
        %s200 = scalar_lea.vmem %s2, %s199
        %p201 = pneg %p83
        %p202 = pneg %p80
        %p203 = scmp.lt.s32.totalorder %s15, 1
        %s204 = scalar_select %p203, %s15, 1
        %s205 = smul.addr %s204, 4
        %s206 = scalar_lea.vmem %s3, %s205
        %p207 = pneg %p109
        %p208 = pneg %p106
        %p209 = pneg %p135
        %p210 = pneg %p132
        %s211 = sand.u32 %s122, 1
        %s212 = sand.u32 %s122, 1
        %s213 = smul.addr %s212, 64
        %s214 = scalar_lea.vmem [#allocation5], %s213
        %p215 = scmp.lt.s32.totalorder %s15, 1
        %s216 = scalar_select %p215, %s15, 1
        %s217 = smul.addr %s216, 64
        %s218 = smul.addr %s217, 4
        %s219 = scalar_lea.vmem %s1, %s218
        %p220 = scmp.lt.s32.totalorder %s15, 1
        %s221 = scalar_select %p220, %s15, 1
        %s222 = smul.addr %s221, 64
        %s223 = smul.addr %s222, 4
        %s224 = scalar_lea.vmem %s2, %s223
        %p225 = scmp.lt.s32.totalorder %s15, 1
        %s226 = scalar_select %p225, %s15, 1
        %s227 = smul.addr %s226, 4
        %s228 = scalar_lea.vmem %s3, %s227
        %v230 = vld [vmem:[%s0] sm:$0xf]
        %v231 = vld [vmem:[%s0 + $0x4] sm:$0xf]
        %v232 = vld [vmem:[%s0 + $0x8] sm:$0xf]
        %v233 = vld [vmem:[%s0 + $0xc] sm:$0xf]
        %v234 = vld [vmem:[%s0 + $0x10] sm:$0xf]
        %v235 = vld [vmem:[%s0 + $0x14] sm:$0xf]
        %v236 = vld [vmem:[%s0 + $0x18] sm:$0xf]
        %v237 = vld [vmem:[%s0 + $0x1c] sm:$0xf]
        %v238 = vld [vmem:[%s0 + $0x20] sm:$0xf]
        %v239 = vld [vmem:[%s0 + $0x24] sm:$0xf]
        %v240 = vld [vmem:[%s0 + $0x28] sm:$0xf]
        %v241 = vld [vmem:[%s0 + $0x2c] sm:$0xf]
        %v242 = vld [vmem:[%s0 + $0x30] sm:$0xf]
        %v243 = vld [vmem:[%s0 + $0x34] sm:$0xf]
        %v244 = vld [vmem:[%s0 + $0x38] sm:$0xf]
        %v245 = vld [vmem:[%s0 + $0x3c] sm:$0xf]
        %v246 = vld [vmem:[%s219] sm:$0xff]
        %v247 = vld [vmem:[%s219 + $0x8] sm:$0xff]
        %v248 = vld [vmem:[%s219 + $0x10] sm:$0xff]
        %v249 = vld [vmem:[%s219 + $0x18] sm:$0xff]
        %v250 = vld [vmem:[%s219 + $0x20] sm:$0xff]
        %v251 = vld [vmem:[%s219 + $0x28] sm:$0xff]
        %v252 = vld [vmem:[%s219 + $0x30] sm:$0xff]
        %v253 = vld [vmem:[%s219 + $0x38] sm:$0xff]
        %v254 = vld [vmem:[%s219 + $0x40] sm:$0xff]
        %v255 = vld [vmem:[%s219 + $0x48] sm:$0xff]
        %v256 = vld [vmem:[%s219 + $0x50] sm:$0xff]
        %v257 = vld [vmem:[%s219 + $0x58] sm:$0xff]
        %v258 = vld [vmem:[%s219 + $0x60] sm:$0xff]
        %v259 = vld [vmem:[%s219 + $0x68] sm:$0xff]
        %v260 = vld [vmem:[%s219 + $0x70] sm:$0xff]
        %v261 = vld [vmem:[%s219 + $0x78] sm:$0xff]
        %v262 = vld [vmem:[%s219 + $0x80] sm:$0xff]
        %v263 = vld [vmem:[%s219 + $0x88] sm:$0xff]
        %v264 = vld [vmem:[%s219 + $0x90] sm:$0xff]
        %v265 = vld [vmem:[%s219 + $0x98] sm:$0xff]
        %v266 = vld [vmem:[%s219 + $0xa0] sm:$0xff]
        %v267 = vld [vmem:[%s219 + $0xa8] sm:$0xff]
        %v268 = vld [vmem:[%s219 + $0xb0] sm:$0xff]
        %v269 = vld [vmem:[%s219 + $0xb8] sm:$0xff]
        %v270 = vld [vmem:[%s219 + $0xc0] sm:$0xff]
        %v271 = vld [vmem:[%s219 + $0xc8] sm:$0xff]
        %v272 = vld [vmem:[%s219 + $0xd0] sm:$0xff]
        %v273 = vld [vmem:[%s219 + $0xd8] sm:$0xff]
        %v274 = vld [vmem:[%s219 + $0xe0] sm:$0xff]
        %v275 = vld [vmem:[%s219 + $0xe8] sm:$0xff]
        %v276 = vld [vmem:[%s219 + $0xf0] sm:$0xff]
        %v277 = vld [vmem:[%s219 + $0xf8] sm:$0xff]
        %v278 = vld [vmem:[%s228] sm:$0xf]
        %v280 = vlaneseq
        %v281 = vshrl.u32 %v280, 7
        %v282 = vsub.s32 0, %v281
        %v283 = vrot.slane %v278, %v282
        %v284 = vlaneseq
        %v285 = vshrl.u32 %v284, 7
        %v286 = vsub.s32 1, %v285
        %v287 = vrot.slane %v278, %v286
        %v288 = vlaneseq
        %v289 = vshrl.u32 %v288, 7
        %v290 = vsub.s32 2, %v289
        %v291 = vrot.slane %v278, %v290
        %v292 = vlaneseq
        %v293 = vshrl.u32 %v292, 7
        %v294 = vsub.s32 3, %v293
        %v295 = vrot.slane %v278, %v294
        %v316 = vunpack.c.l.b16 %v230
        %v317 = vunpack.c.l.b16 %v231
        %v318 = vunpack.c.l.b16 %v232
        %v319 = vunpack.c.l.b16 %v233
        %v320 = vunpack.c.l.b16 %v234
        %v321 = vunpack.c.l.b16 %v235
        %v322 = vunpack.c.l.b16 %v236
        %v323 = vunpack.c.l.b16 %v237
        %v324 = vunpack.c.l.b16 %v238
        %v325 = vunpack.c.l.b16 %v239
        %v326 = vunpack.c.l.b16 %v240
        %v327 = vunpack.c.l.b16 %v241
        %v328 = vunpack.c.l.b16 %v242
        %v329 = vunpack.c.l.b16 %v243
        %v330 = vunpack.c.l.b16 %v244
        %v331 = vunpack.c.l.b16 %v245
        %v332 = vpack.c.b16 %v317, %v316
        %v333 = vpack.c.b16 %v319, %v318
        %v334 = vpack.c.b16 %v321, %v320
        %v335 = vpack.c.b16 %v323, %v322
        %v336 = vpack.c.b16 %v325, %v324
        %v337 = vpack.c.b16 %v327, %v326
        %v338 = vpack.c.b16 %v329, %v328
        %v339 = vpack.c.b16 %v331, %v330
        %v380 = vunpack.c.l.b16 %v246
        %v381 = vunpack.c.h.b16 %v246
        %v382 = vunpack.c.l.b16 %v247
        %v383 = vunpack.c.h.b16 %v247
        %v384 = vunpack.c.l.b16 %v248
        %v385 = vunpack.c.h.b16 %v248
        %v386 = vunpack.c.l.b16 %v249
        %v387 = vunpack.c.h.b16 %v249
        %v388 = vunpack.c.l.b16 %v250
        %v389 = vunpack.c.h.b16 %v250
        %v390 = vunpack.c.l.b16 %v251
        %v391 = vunpack.c.h.b16 %v251
        %v392 = vunpack.c.l.b16 %v252
        %v393 = vunpack.c.h.b16 %v252
        %v394 = vunpack.c.l.b16 %v253
        %v395 = vunpack.c.h.b16 %v253
        %v396 = vunpack.c.l.b16 %v254
        %v397 = vunpack.c.h.b16 %v254
        %v398 = vunpack.c.l.b16 %v255
        %v399 = vunpack.c.h.b16 %v255
        %v400 = vunpack.c.l.b16 %v256
        %v401 = vunpack.c.h.b16 %v256
        %v402 = vunpack.c.l.b16 %v257
        %v403 = vunpack.c.h.b16 %v257
        %v404 = vunpack.c.l.b16 %v258
        %v405 = vunpack.c.h.b16 %v258
        %v406 = vunpack.c.l.b16 %v259
        %v407 = vunpack.c.h.b16 %v259
        %v408 = vunpack.c.l.b16 %v260
        %v409 = vunpack.c.h.b16 %v260
        %v410 = vunpack.c.l.b16 %v261
        %v411 = vunpack.c.h.b16 %v261
        %v412 = vunpack.c.l.b16 %v262
        %v413 = vunpack.c.h.b16 %v262
        %v414 = vunpack.c.l.b16 %v263
        %v415 = vunpack.c.h.b16 %v263
        %v416 = vunpack.c.l.b16 %v264
        %v417 = vunpack.c.h.b16 %v264
        %v418 = vunpack.c.l.b16 %v265
        %v419 = vunpack.c.h.b16 %v265
        %v420 = vunpack.c.l.b16 %v266
        %v421 = vunpack.c.h.b16 %v266
        %v422 = vunpack.c.l.b16 %v267
        %v423 = vunpack.c.h.b16 %v267
        %v424 = vunpack.c.l.b16 %v268
        %v425 = vunpack.c.h.b16 %v268
        %v426 = vunpack.c.l.b16 %v269
        %v427 = vunpack.c.h.b16 %v269
        %v428 = vunpack.c.l.b16 %v270
        %v429 = vunpack.c.h.b16 %v270
        %v430 = vunpack.c.l.b16 %v271
        %v431 = vunpack.c.h.b16 %v271
        %v432 = vunpack.c.l.b16 %v272
        %v433 = vunpack.c.h.b16 %v272
        %v434 = vunpack.c.l.b16 %v273
        %v435 = vunpack.c.h.b16 %v273
        %v436 = vunpack.c.l.b16 %v274
        %v437 = vunpack.c.h.b16 %v274
        %v438 = vunpack.c.l.b16 %v275
        %v439 = vunpack.c.h.b16 %v275
        %v440 = vunpack.c.l.b16 %v276
        %v441 = vunpack.c.h.b16 %v276
        %v442 = vunpack.c.l.b16 %v277
        %v443 = vunpack.c.h.b16 %v277
        %v444 = vpack.c.b16 %v384, %v380
        %v445 = vpack.c.b16 %v385, %v381
        %v446 = vpack.c.b16 %v386, %v382
        %v447 = vpack.c.b16 %v387, %v383
        %v448 = vpack.c.b16 %v392, %v388
        %v449 = vpack.c.b16 %v393, %v389
        %v450 = vpack.c.b16 %v394, %v390
        %v451 = vpack.c.b16 %v395, %v391
        %v452 = vpack.c.b16 %v400, %v396
        %v453 = vpack.c.b16 %v401, %v397
        %v454 = vpack.c.b16 %v402, %v398
        %v455 = vpack.c.b16 %v403, %v399
        %v456 = vpack.c.b16 %v408, %v404
        %v457 = vpack.c.b16 %v409, %v405
        %v458 = vpack.c.b16 %v410, %v406
        %v459 = vpack.c.b16 %v411, %v407
        %v460 = vpack.c.b16 %v416, %v412
        %v461 = vpack.c.b16 %v417, %v413
        %v462 = vpack.c.b16 %v418, %v414
        %v463 = vpack.c.b16 %v419, %v415
        %v464 = vpack.c.b16 %v424, %v420
        %v465 = vpack.c.b16 %v425, %v421
        %v466 = vpack.c.b16 %v426, %v422
        %v467 = vpack.c.b16 %v427, %v423
        %v468 = vpack.c.b16 %v432, %v428
        %v469 = vpack.c.b16 %v433, %v429
        %v470 = vpack.c.b16 %v434, %v430
        %v471 = vpack.c.b16 %v435, %v431
        %v472 = vpack.c.b16 %v440, %v436
        %v473 = vpack.c.b16 %v441, %v437
        %v474 = vpack.c.b16 %v442, %v438
        %v475 = vpack.c.b16 %v443, %v439
        %508 = vmatprep.subr.bf16.mxu0 %v445
        %509 = vmatpush1.bf16.msra.mxu0 %v444
        %510 = vmatprep.subr.bf16.mxu0 %v449
        %511 = vmatpush1.bf16.msra.mxu0 %v448
        %512 = vmatprep.subr.bf16.mxu0 %v453
        %513 = vmatpush1.bf16.msra.mxu0 %v452
        %514 = vmatprep.subr.bf16.mxu0 %v457
        %515 = vmatpush1.bf16.msra.mxu0 %v456
        %516 = vmatprep.subr.bf16.mxu0 %v461
        %517 = vmatpush1.bf16.msra.mxu0 %v460
        %518 = vmatprep.subr.bf16.mxu0 %v465
        %519 = vmatpush1.bf16.msra.mxu0 %v464
        %520 = vmatprep.subr.bf16.mxu0 %v469
        %521 = vmatpush1.bf16.msra.mxu0 %v468
        %522 = vmatprep.subr.bf16.mxu0 %v473
        %523 = vmatpush1.bf16.msra.mxu0 %v472
        %524 = vmatprep.subr.bf16.mxu0 0
        %525 = vmatpush1.bf16.msra.mxu0 0
        %526 = vmatprep.subr.bf16.mxu0 0
        %527 = vmatpush1.bf16.msra.mxu0 0
        %528 = vmatprep.subr.bf16.mxu0 0
        %529 = vmatpush1.bf16.msra.mxu0 0
        %530 = vmatprep.subr.bf16.mxu0 0
        %531 = vmatpush1.bf16.msra.mxu0 0
        %532 = vmatprep.subr.bf16.mxu0 0
        %533 = vmatpush1.bf16.msra.mxu0 0
        %534 = vmatprep.subr.bf16.mxu0 0
        %535 = vmatpush1.bf16.msra.mxu0 0
        %536 = vmatprep.subr.bf16.mxu0 0
        %537 = vmatpush1.bf16.msra.mxu0 0
        %538 = vmatprep.subr.bf16.mxu0 0
        %539 = vmatpush1.bf16.msra.mxu0 0
        %540 = vmatprep.mubr.bf16.mxu0 0
        %541 = vmatmul.mubr.bf16.gmra.mrb[0].mxu0 %v332
        %v542 = vpop.f32.mrb[0].mxu0
        %v543 = vadd.f32 %v283, %v542
        %v544 = vpop.f32.mrb[0].mxu0
        %v545 = vadd.f32 %v287, %v544
        %v546 = vpop.f32.mrb[0].mxu0
        %v547 = vadd.f32 %v283, %v546
        %v548 = vpop.f32.mrb[0].mxu0
        %v549 = vadd.f32 %v287, %v548
        %550 = vmatprep.mubr.bf16.mxu0 0
        %551 = vmatmul.mubr.bf16.gmra.mrb[0].mxu0 %v333
        %v552 = vpop.f32.mrb[0].mxu0
        %v553 = vadd.f32 %v283, %v552
        %v554 = vpop.f32.mrb[0].mxu0
        %v555 = vadd.f32 %v287, %v554
        %v556 = vpop.f32.mrb[0].mxu0
        %v557 = vadd.f32 %v283, %v556
        %v558 = vpop.f32.mrb[0].mxu0
        %v559 = vadd.f32 %v287, %v558
        %560 = vmatprep.mubr.bf16.mxu0 0
        %561 = vmatmul.mubr.bf16.gmra.mrb[0].mxu0 %v334
        %v562 = vpop.f32.mrb[0].mxu0
        %v563 = vadd.f32 %v283, %v562
        %v564 = vpop.f32.mrb[0].mxu0
        %v565 = vadd.f32 %v287, %v564
        %v566 = vpop.f32.mrb[0].mxu0
        %v567 = vadd.f32 %v283, %v566
        %v568 = vpop.f32.mrb[0].mxu0
        %v569 = vadd.f32 %v287, %v568
        %570 = vmatprep.mubr.bf16.mxu0 0
        %571 = vmatmul.mubr.bf16.gmra.mrb[0].mxu0 %v335
        %v572 = vpop.f32.mrb[0].mxu0
        %v573 = vadd.f32 %v283, %v572
        %v574 = vpop.f32.mrb[0].mxu0
        %v575 = vadd.f32 %v287, %v574
        %v576 = vpop.f32.mrb[0].mxu0
        %v577 = vadd.f32 %v283, %v576
        %v578 = vpop.f32.mrb[0].mxu0
        %v579 = vadd.f32 %v287, %v578
        %580 = vmatprep.mubr.bf16.mxu0 0
        %581 = vmatmul.mubr.bf16.gmra.mrb[0].mxu0 %v336
        %v582 = vpop.f32.mrb[0].mxu0
        %v583 = vadd.f32 %v283, %v582
        %v584 = vpop.f32.mrb[0].mxu0
        %v585 = vadd.f32 %v287, %v584
        %v586 = vpop.f32.mrb[0].mxu0
        %v587 = vadd.f32 %v283, %v586
        %v588 = vpop.f32.mrb[0].mxu0
        %v589 = vadd.f32 %v287, %v588
        %590 = vmatprep.mubr.bf16.mxu0 0
        %591 = vmatmul.mubr.bf16.gmra.mrb[0].mxu0 %v337
        %v592 = vpop.f32.mrb[0].mxu0
        %v593 = vadd.f32 %v283, %v592
        %v594 = vpop.f32.mrb[0].mxu0
        %v595 = vadd.f32 %v287, %v594
        %v596 = vpop.f32.mrb[0].mxu0
        %v597 = vadd.f32 %v283, %v596
        %v598 = vpop.f32.mrb[0].mxu0
        %v599 = vadd.f32 %v287, %v598
        %600 = vmatprep.mubr.bf16.mxu0 0
        %601 = vmatmul.mubr.bf16.gmra.mrb[0].mxu0 %v338
        %v602 = vpop.f32.mrb[0].mxu0
        %v603 = vadd.f32 %v283, %v602
        %v604 = vpop.f32.mrb[0].mxu0
        %v605 = vadd.f32 %v287, %v604
        %v606 = vpop.f32.mrb[0].mxu0
        %v607 = vadd.f32 %v283, %v606
        %v608 = vpop.f32.mrb[0].mxu0
        %v609 = vadd.f32 %v287, %v608
        %610 = vmatprep.mubr.bf16.mxu0 0
        %611 = vmatmul.mubr.bf16.gmra.mrb[0].mxu0 %v339
        %v612 = vpop.f32.mrb[0].mxu0
        %v613 = vadd.f32 %v283, %v612
        %v614 = vpop.f32.mrb[0].mxu0
        %v615 = vadd.f32 %v287, %v614
        %v616 = vpop.f32.mrb[0].mxu0
        %v617 = vadd.f32 %v283, %v616
        %v618 = vpop.f32.mrb[0].mxu0
        %v619 = vadd.f32 %v287, %v618
        %620 = vdwg.mxu0
        %621 = vmatprep.subr.bf16.mxu0 %v447
        %622 = vmatpush1.bf16.msra.mxu0 %v446
        %623 = vmatprep.subr.bf16.mxu0 %v451
        %624 = vmatpush1.bf16.msra.mxu0 %v450
        %625 = vmatprep.subr.bf16.mxu0 %v455
        %626 = vmatpush1.bf16.msra.mxu0 %v454
        %627 = vmatprep.subr.bf16.mxu0 %v459
        %628 = vmatpush1.bf16.msra.mxu0 %v458
        %629 = vmatprep.subr.bf16.mxu0 %v463
        %630 = vmatpush1.bf16.msra.mxu0 %v462
        %631 = vmatprep.subr.bf16.mxu0 %v467
        %632 = vmatpush1.bf16.msra.mxu0 %v466
        %633 = vmatprep.subr.bf16.mxu0 %v471
        %634 = vmatpush1.bf16.msra.mxu0 %v470
        %635 = vmatprep.subr.bf16.mxu0 %v475
        %636 = vmatpush1.bf16.msra.mxu0 %v474
        %637 = vmatprep.subr.bf16.mxu0 0
        %638 = vmatpush1.bf16.msra.mxu0 0
        %639 = vmatprep.subr.bf16.mxu0 0
        %640 = vmatpush1.bf16.msra.mxu0 0
        %641 = vmatprep.subr.bf16.mxu0 0
        %642 = vmatpush1.bf16.msra.mxu0 0
        %643 = vmatprep.subr.bf16.mxu0 0
        %644 = vmatpush1.bf16.msra.mxu0 0
        %645 = vmatprep.subr.bf16.mxu0 0
        %646 = vmatpush1.bf16.msra.mxu0 0
        %647 = vmatprep.subr.bf16.mxu0 0
        %648 = vmatpush1.bf16.msra.mxu0 0
        %649 = vmatprep.subr.bf16.mxu0 0
        %650 = vmatpush1.bf16.msra.mxu0 0
        %651 = vmatprep.subr.bf16.mxu0 0
        %652 = vmatpush1.bf16.msra.mxu0 0
        %653 = vmatprep.mubr.bf16.mxu0 0
        %654 = vmatmul.mubr.bf16.gmra.mrb[0].mxu0 %v332
        %v655 = vpop.f32.mrb[0].mxu0
        %v656 = vadd.f32 %v291, %v655
        %v657 = vpop.f32.mrb[0].mxu0
        %v658 = vadd.f32 %v295, %v657
        %v659 = vpop.f32.mrb[0].mxu0
        %v660 = vadd.f32 %v291, %v659
        %v661 = vpop.f32.mrb[0].mxu0
        %v662 = vadd.f32 %v295, %v661
        %663 = vmatprep.mubr.bf16.mxu0 0
        %664 = vmatmul.mubr.bf16.gmra.mrb[0].mxu0 %v333
        %v665 = vpop.f32.mrb[0].mxu0
        %v666 = vadd.f32 %v291, %v665
        %v667 = vpop.f32.mrb[0].mxu0
        %v668 = vadd.f32 %v295, %v667
        %v669 = vpop.f32.mrb[0].mxu0
        %v670 = vadd.f32 %v291, %v669
        %v671 = vpop.f32.mrb[0].mxu0
        %v672 = vadd.f32 %v295, %v671
        %673 = vmatprep.mubr.bf16.mxu0 0
        %674 = vmatmul.mubr.bf16.gmra.mrb[0].mxu0 %v334
        %v675 = vpop.f32.mrb[0].mxu0
        %v676 = vadd.f32 %v291, %v675
        %v677 = vpop.f32.mrb[0].mxu0
        %v678 = vadd.f32 %v295, %v677
        %v679 = vpop.f32.mrb[0].mxu0
        %v680 = vadd.f32 %v291, %v679
        %v681 = vpop.f32.mrb[0].mxu0
        %v682 = vadd.f32 %v295, %v681
        %683 = vmatprep.mubr.bf16.mxu0 0
        %684 = vmatmul.mubr.bf16.gmra.mrb[0].mxu0 %v335
        %v685 = vpop.f32.mrb[0].mxu0
        %v686 = vadd.f32 %v291, %v685
        %v687 = vpop.f32.mrb[0].mxu0
        %v688 = vadd.f32 %v295, %v687
        %v689 = vpop.f32.mrb[0].mxu0
        %v690 = vadd.f32 %v291, %v689
        %v691 = vpop.f32.mrb[0].mxu0
        %v692 = vadd.f32 %v295, %v691
        %693 = vmatprep.mubr.bf16.mxu0 0
        %694 = vmatmul.mubr.bf16.gmra.mrb[0].mxu0 %v336
        %v695 = vpop.f32.mrb[0].mxu0
        %v696 = vadd.f32 %v291, %v695
        %v697 = vpop.f32.mrb[0].mxu0
        %v698 = vadd.f32 %v295, %v697
        %v699 = vpop.f32.mrb[0].mxu0
        %v700 = vadd.f32 %v291, %v699
        %v701 = vpop.f32.mrb[0].mxu0
        %v702 = vadd.f32 %v295, %v701
        %703 = vmatprep.mubr.bf16.mxu0 0
        %704 = vmatmul.mubr.bf16.gmra.mrb[0].mxu0 %v337
        %v705 = vpop.f32.mrb[0].mxu0
        %v706 = vadd.f32 %v291, %v705
        %v707 = vpop.f32.mrb[0].mxu0
        %v708 = vadd.f32 %v295, %v707
        %v709 = vpop.f32.mrb[0].mxu0
        %v710 = vadd.f32 %v291, %v709
        %v711 = vpop.f32.mrb[0].mxu0
        %v712 = vadd.f32 %v295, %v711
        %713 = vmatprep.mubr.bf16.mxu0 0
        %714 = vmatmul.mubr.bf16.gmra.mrb[0].mxu0 %v338
        %v715 = vpop.f32.mrb[0].mxu0
        %v716 = vadd.f32 %v291, %v715
        %v717 = vpop.f32.mrb[0].mxu0
        %v718 = vadd.f32 %v295, %v717
        %v719 = vpop.f32.mrb[0].mxu0
        %v720 = vadd.f32 %v291, %v719
        %v721 = vpop.f32.mrb[0].mxu0
        %v722 = vadd.f32 %v295, %v721
        %723 = vmatprep.mubr.bf16.mxu0 0
        %724 = vmatmul.mubr.bf16.gmra.mrb[0].mxu0 %v339
        %v725 = vpop.f32.mrb[0].mxu0
        %v726 = vadd.f32 %v291, %v725
        %v727 = vpop.f32.mrb[0].mxu0
        %v728 = vadd.f32 %v295, %v727
        %v729 = vpop.f32.mrb[0].mxu0
        %v730 = vadd.f32 %v291, %v729
        %v731 = vpop.f32.mrb[0].mxu0
        %v732 = vadd.f32 %v295, %v731
        %733 = vdwg.mxu0
        %734 = vst [vmem:[#allocation2] sm:$0xff] %v543
        %735 = vst [vmem:[#allocation2 + $0x8] sm:$0xff] %v545
        %736 = vst [vmem:[#allocation2 + $0x10] sm:$0xff] %v656
        %737 = vst [vmem:[#allocation2 + $0x18] sm:$0xff] %v658
        %738 = vst [vmem:[#allocation2 + $0x20] sm:$0xff] %v547
        %739 = vst [vmem:[#allocation2 + $0x28] sm:$0xff] %v549
        %740 = vst [vmem:[#allocation2 + $0x30] sm:$0xff] %v660
        %741 = vst [vmem:[#allocation2 + $0x38] sm:$0xff] %v662
        %742 = vst [vmem:[#allocation2 + $0x40] sm:$0xff] %v553
        %743 = vst [vmem:[#allocation2 + $0x48] sm:$0xff] %v555
        %744 = vst [vmem:[#allocation2 + $0x50] sm:$0xff] %v666
        %745 = vst [vmem:[#allocation2 + $0x58] sm:$0xff] %v668
        %746 = vst [vmem:[#allocation2 + $0x60] sm:$0xff] %v557
        %747 = vst [vmem:[#allocation2 + $0x68] sm:$0xff] %v559
        %748 = vst [vmem:[#allocation2 + $0x70] sm:$0xff] %v670
        %749 = vst [vmem:[#allocation2 + $0x78] sm:$0xff] %v672
        %750 = vst [vmem:[#allocation2 + $0x80] sm:$0xff] %v563
        %751 = vst [vmem:[#allocation2 + $0x88] sm:$0xff] %v565
        %752 = vst [vmem:[#allocation2 + $0x90] sm:$0xff] %v676
        %753 = vst [vmem:[#allocation2 + $0x98] sm:$0xff] %v678
        %754 = vst [vmem:[#allocation2 + $0xa0] sm:$0xff] %v567
        %755 = vst [vmem:[#allocation2 + $0xa8] sm:$0xff] %v569
        %756 = vst [vmem:[#allocation2 + $0xb0] sm:$0xff] %v680
        %757 = vst [vmem:[#allocation2 + $0xb8] sm:$0xff] %v682
        %758 = vst [vmem:[#allocation2 + $0xc0] sm:$0xff] %v573
        %759 = vst [vmem:[#allocation2 + $0xc8] sm:$0xff] %v575
        %760 = vst [vmem:[#allocation2 + $0xd0] sm:$0xff] %v686
        %761 = vst [vmem:[#allocation2 + $0xd8] sm:$0xff] %v688
        %762 = vst [vmem:[#allocation2 + $0xe0] sm:$0xff] %v577
        %763 = vst [vmem:[#allocation2 + $0xe8] sm:$0xff] %v579
        %764 = vst [vmem:[#allocation2 + $0xf0] sm:$0xff] %v690
        %765 = vst [vmem:[#allocation2 + $0xf8] sm:$0xff] %v692
        %766 = vst [vmem:[#allocation2 + $0x100] sm:$0xff] %v583
        %767 = vst [vmem:[#allocation2 + $0x108] sm:$0xff] %v585
        %768 = vst [vmem:[#allocation2 + $0x110] sm:$0xff] %v696
        %769 = vst [vmem:[#allocation2 + $0x118] sm:$0xff] %v698
        %770 = vst [vmem:[#allocation2 + $0x120] sm:$0xff] %v587
        %771 = vst [vmem:[#allocation2 + $0x128] sm:$0xff] %v589
        %772 = vst [vmem:[#allocation2 + $0x130] sm:$0xff] %v700
        %773 = vst [vmem:[#allocation2 + $0x138] sm:$0xff] %v702
        %774 = vst [vmem:[#allocation2 + $0x140] sm:$0xff] %v593
        %775 = vst [vmem:[#allocation2 + $0x148] sm:$0xff] %v595
        %776 = vst [vmem:[#allocation2 + $0x150] sm:$0xff] %v706
        %777 = vst [vmem:[#allocation2 + $0x158] sm:$0xff] %v708
        %778 = vst [vmem:[#allocation2 + $0x160] sm:$0xff] %v597
        %779 = vst [vmem:[#allocation2 + $0x168] sm:$0xff] %v599
        %780 = vst [vmem:[#allocation2 + $0x170] sm:$0xff] %v710
        %781 = vst [vmem:[#allocation2 + $0x178] sm:$0xff] %v712
        %782 = vst [vmem:[#allocation2 + $0x180] sm:$0xff] %v603
        %783 = vst [vmem:[#allocation2 + $0x188] sm:$0xff] %v605
        %784 = vst [vmem:[#allocation2 + $0x190] sm:$0xff] %v716
        %785 = vst [vmem:[#allocation2 + $0x198] sm:$0xff] %v718
        %786 = vst [vmem:[#allocation2 + $0x1a0] sm:$0xff] %v607
        %787 = vst [vmem:[#allocation2 + $0x1a8] sm:$0xff] %v609
        %788 = vst [vmem:[#allocation2 + $0x1b0] sm:$0xff] %v720
        %789 = vst [vmem:[#allocation2 + $0x1b8] sm:$0xff] %v722
        %790 = vst [vmem:[#allocation2 + $0x1c0] sm:$0xff] %v613
        %791 = vst [vmem:[#allocation2 + $0x1c8] sm:$0xff] %v615
        %792 = vst [vmem:[#allocation2 + $0x1d0] sm:$0xff] %v726
        %793 = vst [vmem:[#allocation2 + $0x1d8] sm:$0xff] %v728
        %794 = vst [vmem:[#allocation2 + $0x1e0] sm:$0xff] %v617
        %795 = vst [vmem:[#allocation2 + $0x1e8] sm:$0xff] %v619
        %796 = vst [vmem:[#allocation2 + $0x1f0] sm:$0xff] %v730
        %797 = vst [vmem:[#allocation2 + $0x1f8] sm:$0xff] %v732
        %798 = vst [vmem:[#allocation3] sm:$0xff] 0.0
        %799 = vst [vmem:[#allocation3 + $0x8] sm:$0xff] 0.0
        %800 = vst [vmem:[#allocation4] sm:$0xff] 0.0
        %801 = vst [vmem:[#allocation4 + $0x8] sm:$0xff] 0.0
        %p802 = scmp.eq.s32.totalorder %s15, 1
        loop: start=0, step=1, limit=8
        $region37: #{speech_recognition_forward.4} parent=35 // loop_pre_header
          _
        $region38: #{speech_recognition_forward.4} parent=35 // loop_header
          %s804 = sphi 0, %s808
          %p805 = scmp.ge.s32.totalorder %s804, 8
        $region39: #{speech_recognition_forward.4} parent=35 // loop_header_branch
          %807 = sbr.rel (%p805) target = $region43
        $region40: #{speech_recognition_forward.4} parent=35 // loop_body
          %s809 = ssub.s32 7, %s804
          %s810 = scalar_select %p802, %s809, %s804
          %s811 = smul.u32 %s810, 8
          %s812 = smul.addr %s811, 8
          %s813 = scalar_lea.vmem [#allocation2], %s812
          %v814 = vld [vmem:[%s813] sm:$0xff]
          %v815 = vld [vmem:[%s813 + $0x8] sm:$0xff]
          %v816 = vld [vmem:[%s813 + $0x10] sm:$0xff]
          %v817 = vld [vmem:[%s813 + $0x18] sm:$0xff]
          %v818 = vld [vmem:[%s813 + $0x20] sm:$0xff]
          %v819 = vld [vmem:[%s813 + $0x28] sm:$0xff]
          %v820 = vld [vmem:[%s813 + $0x30] sm:$0xff]
          %v821 = vld [vmem:[%s813 + $0x38] sm:$0xff]
          %v822 = vld [vmem:[#allocation3] sm:$0xff]
          %v823 = vld [vmem:[#allocation3 + $0x8] sm:$0xff]
          %v824 = vpack.c.bf16 %v823, %v822
          %v825 = vld [vmem:[%s224] sm:$0xff]
          %v826 = vld [vmem:[%s224 + $0x8] sm:$0xff]
          %v827 = vld [vmem:[%s224 + $0x10] sm:$0xff]
          %v828 = vld [vmem:[%s224 + $0x18] sm:$0xff]
          %v829 = vld [vmem:[%s224 + $0x20] sm:$0xff]
          %v830 = vld [vmem:[%s224 + $0x28] sm:$0xff]
          %v831 = vld [vmem:[%s224 + $0x30] sm:$0xff]
          %v832 = vld [vmem:[%s224 + $0x38] sm:$0xff]
          %v833 = vld [vmem:[%s224 + $0x40] sm:$0xff]
          %v834 = vld [vmem:[%s224 + $0x48] sm:$0xff]
          %v835 = vld [vmem:[%s224 + $0x50] sm:$0xff]
          %v836 = vld [vmem:[%s224 + $0x58] sm:$0xff]
          %v837 = vld [vmem:[%s224 + $0x60] sm:$0xff]
          %v838 = vld [vmem:[%s224 + $0x68] sm:$0xff]
          %v839 = vld [vmem:[%s224 + $0x70] sm:$0xff]
          %v840 = vld [vmem:[%s224 + $0x78] sm:$0xff]
          %v841 = vld [vmem:[%s224 + $0x80] sm:$0xff]
          %v842 = vld [vmem:[%s224 + $0x88] sm:$0xff]
          %v843 = vld [vmem:[%s224 + $0x90] sm:$0xff]
          %v844 = vld [vmem:[%s224 + $0x98] sm:$0xff]
          %v845 = vld [vmem:[%s224 + $0xa0] sm:$0xff]
          %v846 = vld [vmem:[%s224 + $0xa8] sm:$0xff]
          %v847 = vld [vmem:[%s224 + $0xb0] sm:$0xff]
          %v848 = vld [vmem:[%s224 + $0xb8] sm:$0xff]
          %v849 = vld [vmem:[%s224 + $0xc0] sm:$0xff]
          %v850 = vld [vmem:[%s224 + $0xc8] sm:$0xff]
          %v851 = vld [vmem:[%s224 + $0xd0] sm:$0xff]
          %v852 = vld [vmem:[%s224 + $0xd8] sm:$0xff]
          %v853 = vld [vmem:[%s224 + $0xe0] sm:$0xff]
          %v854 = vld [vmem:[%s224 + $0xe8] sm:$0xff]
          %v855 = vld [vmem:[%s224 + $0xf0] sm:$0xff]
          %v856 = vld [vmem:[%s224 + $0xf8] sm:$0xff]
          %v889 = vunpack.c.l.b16 %v825
          %v890 = vunpack.c.h.b16 %v825
          %v891 = vunpack.c.l.b16 %v826
          %v892 = vunpack.c.h.b16 %v826
          %v893 = vunpack.c.l.b16 %v827
          %v894 = vunpack.c.h.b16 %v827
          %v895 = vunpack.c.l.b16 %v828
          %v896 = vunpack.c.h.b16 %v828
          %v897 = vunpack.c.l.b16 %v829
          %v898 = vunpack.c.h.b16 %v829
          %v899 = vunpack.c.l.b16 %v830
          %v900 = vunpack.c.h.b16 %v830
          %v901 = vunpack.c.l.b16 %v831
          %v902 = vunpack.c.h.b16 %v831
          %v903 = vunpack.c.l.b16 %v832
          %v904 = vunpack.c.h.b16 %v832
          %v905 = vunpack.c.l.b16 %v833
          %v906 = vunpack.c.h.b16 %v833
          %v907 = vunpack.c.l.b16 %v834
          %v908 = vunpack.c.h.b16 %v834
          %v909 = vunpack.c.l.b16 %v835
          %v910 = vunpack.c.h.b16 %v835
          %v911 = vunpack.c.l.b16 %v836
          %v912 = vunpack.c.h.b16 %v836
          %v913 = vunpack.c.l.b16 %v837
          %v914 = vunpack.c.h.b16 %v837
          %v915 = vunpack.c.l.b16 %v838
          %v916 = vunpack.c.h.b16 %v838
          %v917 = vunpack.c.l.b16 %v839
          %v918 = vunpack.c.h.b16 %v839
          %v919 = vunpack.c.l.b16 %v840
          %v920 = vunpack.c.h.b16 %v840
          %v921 = vunpack.c.l.b16 %v841
          %v922 = vunpack.c.h.b16 %v841
          %v923 = vunpack.c.l.b16 %v842
          %v924 = vunpack.c.h.b16 %v842
          %v925 = vunpack.c.l.b16 %v843
          %v926 = vunpack.c.h.b16 %v843
          %v927 = vunpack.c.l.b16 %v844
          %v928 = vunpack.c.h.b16 %v844
          %v929 = vunpack.c.l.b16 %v845
          %v930 = vunpack.c.h.b16 %v845
          %v931 = vunpack.c.l.b16 %v846
          %v932 = vunpack.c.h.b16 %v846
          %v933 = vunpack.c.l.b16 %v847
          %v934 = vunpack.c.h.b16 %v847
          %v935 = vunpack.c.l.b16 %v848
          %v936 = vunpack.c.h.b16 %v848
          %v937 = vunpack.c.l.b16 %v849
          %v938 = vunpack.c.h.b16 %v849
          %v939 = vunpack.c.l.b16 %v850
          %v940 = vunpack.c.h.b16 %v850
          %v941 = vunpack.c.l.b16 %v851
          %v942 = vunpack.c.h.b16 %v851
          %v943 = vunpack.c.l.b16 %v852
          %v944 = vunpack.c.h.b16 %v852
          %v945 = vunpack.c.l.b16 %v853
          %v946 = vunpack.c.h.b16 %v853
          %v947 = vunpack.c.l.b16 %v854
          %v948 = vunpack.c.h.b16 %v854
          %v949 = vunpack.c.l.b16 %v855
          %v950 = vunpack.c.h.b16 %v855
          %v951 = vunpack.c.l.b16 %v856
          %v952 = vunpack.c.h.b16 %v856
          %v953 = vpack.c.b16 %v893, %v889
          %v954 = vpack.c.b16 %v894, %v890
          %v955 = vpack.c.b16 %v895, %v891
          %v956 = vpack.c.b16 %v896, %v892
          %v957 = vpack.c.b16 %v901, %v897
          %v958 = vpack.c.b16 %v902, %v898
          %v959 = vpack.c.b16 %v903, %v899
          %v960 = vpack.c.b16 %v904, %v900
          %v961 = vpack.c.b16 %v909, %v905
          %v962 = vpack.c.b16 %v910, %v906
          %v963 = vpack.c.b16 %v911, %v907
          %v964 = vpack.c.b16 %v912, %v908
          %v965 = vpack.c.b16 %v917, %v913
          %v966 = vpack.c.b16 %v918, %v914
          %v967 = vpack.c.b16 %v919, %v915
          %v968 = vpack.c.b16 %v920, %v916
          %v969 = vpack.c.b16 %v925, %v921
          %v970 = vpack.c.b16 %v926, %v922
          %v971 = vpack.c.b16 %v927, %v923
          %v972 = vpack.c.b16 %v928, %v924
          %v973 = vpack.c.b16 %v933, %v929
          %v974 = vpack.c.b16 %v934, %v930
          %v975 = vpack.c.b16 %v935, %v931
          %v976 = vpack.c.b16 %v936, %v932
          %v977 = vpack.c.b16 %v941, %v937
          %v978 = vpack.c.b16 %v942, %v938
          %v979 = vpack.c.b16 %v943, %v939
          %v980 = vpack.c.b16 %v944, %v940
          %v981 = vpack.c.b16 %v949, %v945
          %v982 = vpack.c.b16 %v950, %v946
          %v983 = vpack.c.b16 %v951, %v947
          %v984 = vpack.c.b16 %v952, %v948
          %1017 = vmatprep.subr.bf16.mxu0 %v954
          %1018 = vmatpush1.bf16.msra.mxu0 %v953
          %1019 = vmatprep.subr.bf16.mxu0 %v958
          %1020 = vmatpush1.bf16.msra.mxu0 %v957
          %1021 = vmatprep.subr.bf16.mxu0 %v962
          %1022 = vmatpush1.bf16.msra.mxu0 %v961
          %1023 = vmatprep.subr.bf16.mxu0 %v966
          %1024 = vmatpush1.bf16.msra.mxu0 %v965
          %1025 = vmatprep.subr.bf16.mxu0 %v970
          %1026 = vmatpush1.bf16.msra.mxu0 %v969
          %1027 = vmatprep.subr.bf16.mxu0 %v974
          %1028 = vmatpush1.bf16.msra.mxu0 %v973
          %1029 = vmatprep.subr.bf16.mxu0 %v978
          %1030 = vmatpush1.bf16.msra.mxu0 %v977
          %1031 = vmatprep.subr.bf16.mxu0 %v982
          %1032 = vmatpush1.bf16.msra.mxu0 %v981
          %1033 = vmatprep.subr.bf16.mxu0 0
          %1034 = vmatpush1.bf16.msra.mxu0 0
          %1035 = vmatprep.subr.bf16.mxu0 0
          %1036 = vmatpush1.bf16.msra.mxu0 0
          %1037 = vmatprep.subr.bf16.mxu0 0
          %1038 = vmatpush1.bf16.msra.mxu0 0
          %1039 = vmatprep.subr.bf16.mxu0 0
          %1040 = vmatpush1.bf16.msra.mxu0 0
          %1041 = vmatprep.subr.bf16.mxu0 0
          %1042 = vmatpush1.bf16.msra.mxu0 0
          %1043 = vmatprep.subr.bf16.mxu0 0
          %1044 = vmatpush1.bf16.msra.mxu0 0
          %1045 = vmatprep.subr.bf16.mxu0 0
          %1046 = vmatpush1.bf16.msra.mxu0 0
          %1047 = vmatprep.subr.bf16.mxu0 0
          %1048 = vmatpush1.bf16.msra.mxu0 0
          %1049 = vmatprep.mubr.bf16.mxu0 0
          %1050 = vmatmul.mubr.bf16.gmra.mrb[0].mxu0 %v824
          %v1051 = vpop.f32.mrb[0].mxu0
          %v1052 = vadd.f32 0.0, %v1051
          %v1053 = vpop.f32.mrb[0].mxu0
          %v1054 = vadd.f32 0.0, %v1053
          %v1055 = vpop.f32.mrb[0].mxu0
          %v1056 = vadd.f32 0.0, %v1055
          %v1057 = vpop.f32.mrb[0].mxu0
          %v1058 = vadd.f32 0.0, %v1057
          %1059 = vdwg.mxu0
          %1060 = vmatprep.subr.bf16.mxu0 %v956
          %1061 = vmatpush1.bf16.msra.mxu0 %v955
          %1062 = vmatprep.subr.bf16.mxu0 %v960
          %1063 = vmatpush1.bf16.msra.mxu0 %v959
          %1064 = vmatprep.subr.bf16.mxu0 %v964
          %1065 = vmatpush1.bf16.msra.mxu0 %v963
          %1066 = vmatprep.subr.bf16.mxu0 %v968
          %1067 = vmatpush1.bf16.msra.mxu0 %v967
          %1068 = vmatprep.subr.bf16.mxu0 %v972
          %1069 = vmatpush1.bf16.msra.mxu0 %v971
          %1070 = vmatprep.subr.bf16.mxu0 %v976
          %1071 = vmatpush1.bf16.msra.mxu0 %v975
          %1072 = vmatprep.subr.bf16.mxu0 %v980
          %1073 = vmatpush1.bf16.msra.mxu0 %v979
          %1074 = vmatprep.subr.bf16.mxu0 %v984
          %1075 = vmatpush1.bf16.msra.mxu0 %v983
          %1076 = vmatprep.subr.bf16.mxu0 0
          %1077 = vmatpush1.bf16.msra.mxu0 0
          %1078 = vmatprep.subr.bf16.mxu0 0
          %1079 = vmatpush1.bf16.msra.mxu0 0
          %1080 = vmatprep.subr.bf16.mxu0 0
          %1081 = vmatpush1.bf16.msra.mxu0 0
          %1082 = vmatprep.subr.bf16.mxu0 0
          %1083 = vmatpush1.bf16.msra.mxu0 0
          %1084 = vmatprep.subr.bf16.mxu0 0
          %1085 = vmatpush1.bf16.msra.mxu0 0
          %1086 = vmatprep.subr.bf16.mxu0 0
          %1087 = vmatpush1.bf16.msra.mxu0 0
          %1088 = vmatprep.subr.bf16.mxu0 0
          %1089 = vmatpush1.bf16.msra.mxu0 0
          %1090 = vmatprep.subr.bf16.mxu0 0
          %1091 = vmatpush1.bf16.msra.mxu0 0
          %1092 = vmatprep.mubr.bf16.mxu0 0
          %1093 = vmatmul.mubr.bf16.gmra.mrb[0].mxu0 %v824
          %v1094 = vpop.f32.mrb[0].mxu0
          %v1095 = vadd.f32 0.0, %v1094
          %v1096 = vpop.f32.mrb[0].mxu0
          %v1097 = vadd.f32 0.0, %v1096
          %v1098 = vpop.f32.mrb[0].mxu0
          %v1099 = vadd.f32 0.0, %v1098
          %v1100 = vpop.f32.mrb[0].mxu0
          %v1101 = vadd.f32 0.0, %v1100
          %1102 = vdwg.mxu0
          %v1103 = vadd.f32 %v814, %v1052
          %v1104 = vadd.f32 %v815, %v1054
          %v1105 = vadd.f32 %v816, %v1095
          %v1106 = vadd.f32 %v817, %v1097
          %v1107 = vadd.f32 %v818, %v1056
          %v1108 = vadd.f32 %v819, %v1058
          %v1109 = vadd.f32 %v820, %v1099
          %v1110 = vadd.f32 %v821, %v1101
          %v1111 = vxor.u32 %v1103, 2147483648
          %v1112 = vxor.u32 %v1107, 2147483648
          %v1113 = vmul.f32 %v1111, 1.442695
          %v1114 = vpow.pop %v1113
          %v1115 = vmul.f32 %v1112, 1.442695
          %v1116 = vpow.pop %v1115
          %v1117 = vadd.f32 %v1114, 1.0
          %v1118 = vadd.f32 %v1116, 1.0
          %v1119 = vrcp.pop %v1117
          %v1120 = vmul.f32 1.0, %v1119
          %v1121 = vrcp.pop %v1118
          %v1122 = vmul.f32 1.0, %v1121
          %v1123 = vxor.u32 %v1104, 2147483648
          %v1124 = vxor.u32 %v1108, 2147483648
          %v1125 = vmul.f32 %v1123, 1.442695
          %v1126 = vpow.pop %v1125
          %v1127 = vmul.f32 %v1124, 1.442695
          %v1128 = vpow.pop %v1127
          %v1129 = vadd.f32 %v1126, 1.0
          %v1130 = vadd.f32 %v1128, 1.0
          %v1131 = vrcp.pop %v1129
          %v1132 = vmul.f32 1.0, %v1131
          %v1133 = vrcp.pop %v1130
          %v1134 = vmul.f32 1.0, %v1133
          %v1135 = vtanh.pop %v1105
          %v1136 = vtanh.pop %v1109
          %v1137 = vxor.u32 %v1106, 2147483648
          %v1138 = vxor.u32 %v1110, 2147483648
          %v1139 = vmul.f32 %v1137, 1.442695
          %v1140 = vpow.pop %v1139
          %v1141 = vmul.f32 %v1138, 1.442695
          %v1142 = vpow.pop %v1141
          %v1143 = vadd.f32 %v1140, 1.0
          %v1144 = vadd.f32 %v1142, 1.0
          %v1145 = vrcp.pop %v1143
          %v1146 = vmul.f32 1.0, %v1145
          %v1147 = vrcp.pop %v1144
          %v1148 = vmul.f32 1.0, %v1147
          %v1149 = vld [vmem:[#allocation4] sm:$0xff]
          %v1150 = vld [vmem:[#allocation4 + $0x8] sm:$0xff]
          %v1151 = vmul.f32 %v1132, %v1149
          %v1152 = vmul.f32 %v1134, %v1150
          %v1153 = vmul.f32 %v1120, %v1135
          %v1154 = vmul.f32 %v1122, %v1136
          %v1155 = vadd.f32 %v1151, %v1153
          %v1156 = vadd.f32 %v1152, %v1154
          %v1157 = vtanh.pop %v1155
          %v1158 = vtanh.pop %v1156
          %v1159 = vmul.f32 %v1146, %v1157
          %v1160 = vmul.f32 %v1148, %v1158
          %1161 = vst [vmem:[#allocation4] sm:$0xff] %v1155
          %1162 = vst [vmem:[#allocation4 + $0x8] sm:$0xff] %v1156
          %1163 = vst [vmem:[#allocation3] sm:$0xff] %v1159
          %1164 = vst [vmem:[#allocation3 + $0x8] sm:$0xff] %v1160
          %v1165 = vpack.c.bf16 %v1160, %v1159
          %v1167 = vunpack.c.l.b16 %v1165
          %v1168 = vunpack.c.h.b16 %v1165
          %v1169 = vpack.c.b16 %v1167, %v1167
          %v1170 = vpack.c.b16 %v1168, %v1168
          %s1173 = smul.u32 %s810, 2
          %s1174 = smul.addr %s1173, 4
          %s1175 = scalar_lea.vmem %s214, %s1174 [#allocation5]
          %1176 = vst [vmem:[%s1175] sm:$0xf] %v1169
          %1177 = vst [vmem:[%s1175 + $0x4] sm:$0xf] %v1170
        $region41: #{speech_recognition_forward.4} parent=35 // loop_footer
          %s808 = sadd.s32 1, %s804
        $region42: #{speech_recognition_forward.4} parent=35 // loop_footer_branch
          %803 = sbr.rel target = $region38
        $region43: #{speech_recognition_forward.4} parent=35 // loop_exit
          _
        %s1178 = sand.u32 %s122, 1
        %s1179 = sand.u32 %s122, 1
        %s1180 = smul.addr %s1179, 64
        %s1181 = scalar_lea.vmem [#allocation5], %s1180
        // Predicated region
        $region44: #{speech_recognition_forward.4} parent=35 // pred_check
          %p1182 = pneg %p132
        $region45: #{speech_recognition_forward.4} parent=35 // pred_check_branch
          %1184 = sbr.rel (%p1182) target = $region47
        $region46: #{speech_recognition_forward.4} parent=35 // pred_region
          %s1185 = smul.addr %s15, 4
          %s1186 = scalar_lea.vmem %s4, %s1185
          // Predicated region
          $region48: #{speech_recognition_forward.4} parent=46 // pred_check
            _
          $region49: #{speech_recognition_forward.4} parent=46 // pred_check_branch
            %1188 = sbr.rel (0) target = $region51
          $region50: #{speech_recognition_forward.4} parent=46 // pred_region
            // Predicated region
            $region52: #{speech_recognition_forward.4} parent=50 // pred_check
              _
            $region53: #{speech_recognition_forward.4} parent=50 // pred_check_branch
              %1190 = sbr.rel target = $region55
            $region54: #{speech_recognition_forward.4} parent=50 // pred_region
              // Predicated region
              $region67: #{speech_recognition_forward.4} parent=54 // pred_check
                _
              $region68: #{speech_recognition_forward.4} parent=54 // pred_check_branch
                %1235 = sbr.rel (0) target = $region70
              $region69: #{speech_recognition_forward.4} parent=54 // pred_region
                loop: start=0, step=1, limit=1
                $region71: #{speech_recognition_forward.4} parent=69 // loop_pre_header
                  _
                $region72: #{speech_recognition_forward.4} parent=69 // loop_header
                  %s1237 = sphi 0, %s1241
                  %p1238 = scmp.ge.s32.totalorder %s1237, 1
                  %s1242 = sphi %s1181, %s1181
                  %s1243 = sphi %s1186, %s1186
                $region73: #{speech_recognition_forward.4} parent=69 // loop_header_branch
                  %1240 = sbr.rel (%p1238) target = $region77
                $region74: #{speech_recognition_forward.4} parent=69 // loop_body
                  _
                $region75: #{speech_recognition_forward.4} parent=69 // loop_footer
                  %s1241 = sadd.s32 1, %s1237
                $region76: #{speech_recognition_forward.4} parent=69 // loop_footer_branch
                  %1236 = sbr.rel target = $region72
                $region77: #{speech_recognition_forward.4} parent=69 // loop_exit
                  _
                loop: start=0, step=1, limit=1
                $region78: #{speech_recognition_forward.4} parent=69 // loop_pre_header
                  _
                $region79: #{speech_recognition_forward.4} parent=69 // loop_header
                  %s1246 = sphi 0, %s1250
                  %p1247 = scmp.ge.s32.totalorder %s1246, 1
                  %s1251 = sphi %s1181, %s1181
                  %s1252 = sphi %s1186, %s1186
                $region80: #{speech_recognition_forward.4} parent=69 // loop_header_branch
                  %1249 = sbr.rel (%p1247) target = $region84
                $region81: #{speech_recognition_forward.4} parent=69 // loop_body
                  %v1253 = vld [vmem:[%s1251] sm:$0xf]
                  %1254 = vst [vmem:[%s1252] sm:$0xf] %v1253
                  %v1255 = vld [vmem:[%s1251 + $0x4] sm:$0xf]
                  %1256 = vst [vmem:[%s1252 + $0x8] sm:$0xf] %v1255
                  %v1257 = vld [vmem:[%s1251 + $0x8] sm:$0xf]
                  %1258 = vst [vmem:[%s1252 + $0x10] sm:$0xf] %v1257
                  %v1259 = vld [vmem:[%s1251 + $0xc] sm:$0xf]
                  %1260 = vst [vmem:[%s1252 + $0x18] sm:$0xf] %v1259
                  %v1261 = vld [vmem:[%s1251 + $0x10] sm:$0xf]
                  %1262 = vst [vmem:[%s1252 + $0x20] sm:$0xf] %v1261
                  %v1263 = vld [vmem:[%s1251 + $0x14] sm:$0xf]
                  %1264 = vst [vmem:[%s1252 + $0x28] sm:$0xf] %v1263
                  %v1265 = vld [vmem:[%s1251 + $0x18] sm:$0xf]
                  %1266 = vst [vmem:[%s1252 + $0x30] sm:$0xf] %v1265
                  %v1267 = vld [vmem:[%s1251 + $0x1c] sm:$0xf]
                  %1268 = vst [vmem:[%s1252 + $0x38] sm:$0xf] %v1267
                  %v1269 = vld [vmem:[%s1251 + $0x20] sm:$0xf]
                  %1270 = vst [vmem:[%s1252 + $0x40] sm:$0xf] %v1269
                  %v1271 = vld [vmem:[%s1251 + $0x24] sm:$0xf]
                  %1272 = vst [vmem:[%s1252 + $0x48] sm:$0xf] %v1271
                  %v1273 = vld [vmem:[%s1251 + $0x28] sm:$0xf]
                  %1274 = vst [vmem:[%s1252 + $0x50] sm:$0xf] %v1273
                  %v1275 = vld [vmem:[%s1251 + $0x2c] sm:$0xf]
                  %1276 = vst [vmem:[%s1252 + $0x58] sm:$0xf] %v1275
                  %v1277 = vld [vmem:[%s1251 + $0x30] sm:$0xf]
                  %1278 = vst [vmem:[%s1252 + $0x60] sm:$0xf] %v1277
                  %v1279 = vld [vmem:[%s1251 + $0x34] sm:$0xf]
                  %1280 = vst [vmem:[%s1252 + $0x68] sm:$0xf] %v1279
                  %v1281 = vld [vmem:[%s1251 + $0x38] sm:$0xf]
                  %1282 = vst [vmem:[%s1252 + $0x70] sm:$0xf] %v1281
                  %v1283 = vld [vmem:[%s1251 + $0x3c] sm:$0xf]
                  %1284 = vst [vmem:[%s1252 + $0x78] sm:$0xf] %v1283
                $region82: #{speech_recognition_forward.4} parent=69 // loop_footer
                  %s1250 = sadd.s32 1, %s1246
                $region83: #{speech_recognition_forward.4} parent=69 // loop_footer_branch
                  %1245 = sbr.rel target = $region79
                $region84: #{speech_recognition_forward.4} parent=69 // loop_exit
                  _
              $region70: #{speech_recognition_forward.4} parent=54 // pred_fallthru
                _
            $region55: #{speech_recognition_forward.4} parent=50 // pred_fallthru
              _
            // Predicated region
            $region56: #{speech_recognition_forward.4} parent=50 // pred_check
              _
            $region57: #{speech_recognition_forward.4} parent=50 // pred_check_branch
              %1192 = sbr.rel (0) target = $region59
            $region58: #{speech_recognition_forward.4} parent=50 // pred_region
              loop: start=0, step=1, limit=1
              $region60: #{speech_recognition_forward.4} parent=58 // loop_pre_header
                _
              $region61: #{speech_recognition_forward.4} parent=58 // loop_header
                %s1195 = sphi 0, %s1199
                %p1196 = scmp.ge.s32.totalorder %s1195, 1
                %s1200 = sphi %s1181, %s1181
                %s1201 = sphi %s1186, %s1186
              $region62: #{speech_recognition_forward.4} parent=58 // loop_header_branch
                %1198 = sbr.rel (%p1196) target = $region66
              $region63: #{speech_recognition_forward.4} parent=58 // loop_body
                %v1202 = vld [vmem:[%s1200] sm:$0xf]
                %1203 = vst [vmem:[%s1201] sm:$0xf] %v1202
                %v1204 = vld [vmem:[%s1200 + $0x4] sm:$0xf]
                %1205 = vst [vmem:[%s1201 + $0x8] sm:$0xf] %v1204
                %v1206 = vld [vmem:[%s1200 + $0x8] sm:$0xf]
                %1207 = vst [vmem:[%s1201 + $0x10] sm:$0xf] %v1206
                %v1208 = vld [vmem:[%s1200 + $0xc] sm:$0xf]
                %1209 = vst [vmem:[%s1201 + $0x18] sm:$0xf] %v1208
                %v1210 = vld [vmem:[%s1200 + $0x10] sm:$0xf]
                %1211 = vst [vmem:[%s1201 + $0x20] sm:$0xf] %v1210
                %v1212 = vld [vmem:[%s1200 + $0x14] sm:$0xf]
                %1213 = vst [vmem:[%s1201 + $0x28] sm:$0xf] %v1212
                %v1214 = vld [vmem:[%s1200 + $0x18] sm:$0xf]
                %1215 = vst [vmem:[%s1201 + $0x30] sm:$0xf] %v1214
                %v1216 = vld [vmem:[%s1200 + $0x1c] sm:$0xf]
                %1217 = vst [vmem:[%s1201 + $0x38] sm:$0xf] %v1216
                %v1218 = vld [vmem:[%s1200 + $0x20] sm:$0xf]
                %1219 = vst [vmem:[%s1201 + $0x40] sm:$0xf] %v1218
                %v1220 = vld [vmem:[%s1200 + $0x24] sm:$0xf]
                %1221 = vst [vmem:[%s1201 + $0x48] sm:$0xf] %v1220
                %v1222 = vld [vmem:[%s1200 + $0x28] sm:$0xf]
                %1223 = vst [vmem:[%s1201 + $0x50] sm:$0xf] %v1222
                %v1224 = vld [vmem:[%s1200 + $0x2c] sm:$0xf]
                %1225 = vst [vmem:[%s1201 + $0x58] sm:$0xf] %v1224
                %v1226 = vld [vmem:[%s1200 + $0x30] sm:$0xf]
                %1227 = vst [vmem:[%s1201 + $0x60] sm:$0xf] %v1226
                %v1228 = vld [vmem:[%s1200 + $0x34] sm:$0xf]
                %1229 = vst [vmem:[%s1201 + $0x68] sm:$0xf] %v1228
                %v1230 = vld [vmem:[%s1200 + $0x38] sm:$0xf]
                %1231 = vst [vmem:[%s1201 + $0x70] sm:$0xf] %v1230
                %v1232 = vld [vmem:[%s1200 + $0x3c] sm:$0xf]
                %1233 = vst [vmem:[%s1201 + $0x78] sm:$0xf] %v1232
              $region64: #{speech_recognition_forward.4} parent=58 // loop_footer
                %s1199 = sadd.s32 1, %s1195
              $region65: #{speech_recognition_forward.4} parent=58 // loop_footer_branch
                %1194 = sbr.rel target = $region61
              $region66: #{speech_recognition_forward.4} parent=58 // loop_exit
                _
            $region59: #{speech_recognition_forward.4} parent=50 // pred_fallthru
              _
          $region51: #{speech_recognition_forward.4} parent=46 // pred_fallthru
            _
          %1285 = vnop
        $region47: #{speech_recognition_forward.4} parent=35 // pred_fallthru
          _
      $region36: #{speech_recognition_forward.4} parent=5 // pred_fallthru
        _
      %p1286 = scmp.le.s32.totalorder 2, %s10
      // Predicated region
      $region85: #{speech_recognition_forward.4} parent=5 // pred_check
        %p1287 = pneg %p1286
      $region86: #{speech_recognition_forward.4} parent=5 // pred_check_branch
        %1289 = sbr.rel (%p1287) target = $region88
      $region87: #{speech_recognition_forward.4} parent=5 // pred_region
        %s1290 = ssub.s32 %s10, 2
        // Predicated region
        $region89: #{speech_recognition_forward.4} parent=87 // pred_check
          %p1291 = pneg %p138
        $region90: #{speech_recognition_forward.4} parent=87 // pred_check_branch
          %1293 = sbr.rel (%p1291) target = $region92
        $region91: #{speech_recognition_forward.4} parent=87 // pred_region
          %s1294 = sand.u32 %s123, 1
          %s1295 = sand.u32 %s123, 1
          %s1296 = smul.addr %s1295, 64
          %s1297 = scalar_lea.vmem [#allocation5], %s1296
        $region92: #{speech_recognition_forward.4} parent=87 // pred_fallthru
          _
      $region88: #{speech_recognition_forward.4} parent=5 // pred_fallthru
        _
    $region6: #{speech_recognition_forward.4} parent=1 // loop_footer
      %s14 = sadd.s32 1, %s10
    $region7: #{speech_recognition_forward.4} parent=1 // loop_footer_branch
      %9 = sbr.rel target = $region3
    $region8: #{speech_recognition_forward.4} parent=1 // loop_exit
      _

// kernel: speech_recognition_forward.5
$region0: #{speech_recognition_forward.5}
  #allocation0 [shape = 'u32[]', space=smem, size = 0x4, offset = 0x4, fixed_abs, tag = 'smem constant byte address 0x4 - core index']
  #allocation1 [shape = 'u32[144,128]{1,0:T(1,128)}', space=vmem, size = 0x12000, scoped, tag = 'internal scratch']
  #allocation2 [shape = 'f32[8,16,512]{2,1,0:T(8,128)}', space=vmem, size = 0x40000, scoped, tag = 'scratch operand']
  #allocation3 [shape = 'f32[16,128]{1,0:T(8,128)}', space=vmem, size = 0x2000, scoped, tag = 'scratch operand']
  #allocation4 [shape = 'f32[16,128]{1,0:T(8,128)}', space=vmem, size = 0x2000, scoped, tag = 'scratch operand']
  %s0 = inlined_call_operand.vmem [shape: bf16[8,16,256], index: 0, kind: input, shape index: {}]
  %s1 = inlined_call_operand.vmem [shape: bf16[2,256,512], index: 1, kind: input, shape index: {}]
  %s2 = inlined_call_operand.vmem [shape: bf16[2,128,512], index: 2, kind: input, shape index: {}]
  %s3 = inlined_call_operand.vmem [shape: f32[2,1,512], index: 3, kind: input, shape index: {}]
  %s4 = inlined_call_operand.vmem [shape: bf16[8,16,256], index: 4, kind: output, shape index: {}]
  %s5 = sld [smem:[#allocation0]]
  $region93: #{speech_recognition_forward.5} parent=0
    _
  %s7 = ssub.s32 1, %s5
  %s8 = scalar_select 0, %s7, %s5
  $region1: #{speech_recognition_forward.5} parent=0
    #allocation5 [shape = 'u8[65536]{0}', space=vmem, size = 0x10000, scoped, tag = 'output window, operand 0']
    loop: start=0, step=1, limit=4
    $region2: #{speech_recognition_forward.5} parent=1 // loop_pre_header
      _
    $region3: #{speech_recognition_forward.5} parent=1 // loop_header
      %s10 = sphi 0, %s14
      %p11 = scmp.ge.s32.totalorder %s10, 4
      %s18 = sphi 0, %s18
      %s20 = sphi 0, %s18
      %s21 = sphi 0, %s20
      %s35 = sphi 0, %s21
      %s41 = sphi 0, %s43
      %s44 = sphi 0, %s41
      %s45 = sphi 0, %s44
      %s61 = sphi 0, %s45
      %s67 = sphi 0, %s69
      %s70 = sphi 0, %s67
      %s71 = sphi 0, %s70
      %s87 = sphi 0, %s71
      %s93 = sphi 0, %s95
      %s96 = sphi 0, %s93
      %s97 = sphi 0, %s96
      %s113 = sphi 0, %s97
      %s119 = sphi 0, %s121
      %s122 = sphi 0, %s119
      %s123 = sphi 0, %s122
      %s139 = sphi 0, %s123
    $region4: #{speech_recognition_forward.5} parent=1 // loop_header_branch
      %13 = sbr.rel (%p11) target = $region8
    $region5: #{speech_recognition_forward.5} parent=1 // loop_body
      %s15 = ssub.s32 %s10, 1
      %s16 = ssub.s32 %s10, 2
      %s17 = sadd.s32 %s10, 1
      %s19 = sadd.s32 %s18, 1
      %p22 = scmp.eq.s32.totalorder %s10, 1
      %p23 = scmp.ne.s32.totalorder %s18, %s20
      %p24 = scmp.eq.s32.totalorder %s10, 0
      %p25 = por %p23, %p24
      %p26 = scmp.ne.s32.totalorder %s18, %s20
      %p27 = scmp.eq.s32.totalorder %s15, 1
      %p28 = por %p26, %p27
      %p29 = scmp.ne.s32.totalorder %s20, %s21
      %p30 = scmp.eq.s32.totalorder %s15, 0
      %p31 = por %p29, %p30
      %p32 = scmp.ne.s32.totalorder %s20, %s21
      %p33 = scmp.eq.s32.totalorder %s16, 1
      %p34 = por %p32, %p33
      %p36 = scmp.ne.s32.totalorder %s21, %s35
      %p37 = scmp.eq.s32.totalorder %s16, 0
      %p38 = por %p36, %p37
      %s39 = ssub.s32 %s10, %s17
      %p40 = scmp.eq.s32.totalorder %s39, 0
      %s42 = sadd.s32 %s41, 1
      %s43 = scalar_select %p40, %s41, %s42
      %p46 = pneg %p40
      %p47 = scmp.eq.s32.totalorder %s10, 1
      %p48 = por %p46, %p47
      %p49 = scmp.ne.s32.totalorder %s41, %s44
      %p50 = scmp.eq.s32.totalorder %s10, 0
      %p51 = por %p49, %p50
      %p52 = scmp.ne.s32.totalorder %s41, %s44
      %p53 = scmp.eq.s32.totalorder %s15, 1
      %p54 = por %p52, %p53
      %p55 = scmp.ne.s32.totalorder %s44, %s45
      %p56 = scmp.eq.s32.totalorder %s15, 0
      %p57 = por %p55, %p56
      %p58 = scmp.ne.s32.totalorder %s44, %s45
      %p59 = scmp.eq.s32.totalorder %s16, 1
      %p60 = por %p58, %p59
      %p62 = scmp.ne.s32.totalorder %s45, %s61
      %p63 = scmp.eq.s32.totalorder %s16, 0
      %p64 = por %p62, %p63
      %s65 = ssub.s32 %s10, %s17
      %p66 = scmp.eq.s32.totalorder %s65, 0
      %s68 = sadd.s32 %s67, 1
      %s69 = scalar_select %p66, %s67, %s68
      %p72 = pneg %p66
      %p73 = scmp.eq.s32.totalorder %s10, 1
      %p74 = por %p72, %p73
      %p75 = scmp.ne.s32.totalorder %s67, %s70
      %p76 = scmp.eq.s32.totalorder %s10, 0
      %p77 = por %p75, %p76
      %p78 = scmp.ne.s32.totalorder %s67, %s70
      %p79 = scmp.eq.s32.totalorder %s15, 1
      %p80 = por %p78, %p79
      %p81 = scmp.ne.s32.totalorder %s70, %s71
      %p82 = scmp.eq.s32.totalorder %s15, 0
      %p83 = por %p81, %p82
      %p84 = scmp.ne.s32.totalorder %s70, %s71
      %p85 = scmp.eq.s32.totalorder %s16, 1
      %p86 = por %p84, %p85
      %p88 = scmp.ne.s32.totalorder %s71, %s87
      %p89 = scmp.eq.s32.totalorder %s16, 0
      %p90 = por %p88, %p89
      %s91 = ssub.s32 %s10, %s17
      %p92 = scmp.eq.s32.totalorder %s91, 0
      %s94 = sadd.s32 %s93, 1
      %s95 = scalar_select %p92, %s93, %s94
      %p98 = pneg %p92
      %p99 = scmp.eq.s32.totalorder %s10, 1
      %p100 = por %p98, %p99
      %p101 = scmp.ne.s32.totalorder %s93, %s96
      %p102 = scmp.eq.s32.totalorder %s10, 0
      %p103 = por %p101, %p102
      %p104 = scmp.ne.s32.totalorder %s93, %s96
      %p105 = scmp.eq.s32.totalorder %s15, 1
      %p106 = por %p104, %p105
      %p107 = scmp.ne.s32.totalorder %s96, %s97
      %p108 = scmp.eq.s32.totalorder %s15, 0
      %p109 = por %p107, %p108
      %p110 = scmp.ne.s32.totalorder %s96, %s97
      %p111 = scmp.eq.s32.totalorder %s16, 1
      %p112 = por %p110, %p111
      %p114 = scmp.ne.s32.totalorder %s97, %s113
      %p115 = scmp.eq.s32.totalorder %s16, 0
      %p116 = por %p114, %p115
      %s117 = ssub.s32 %s10, %s17
      %p118 = scmp.eq.s32.totalorder %s117, 0
      %s120 = sadd.s32 %s119, 1
      %s121 = scalar_select %p118, %s119, %s120
      %p124 = pneg %p118
      %p125 = scmp.eq.s32.totalorder %s10, 1
      %p126 = por %p124, %p125
      %p127 = scmp.ne.s32.totalorder %s119, %s122
      %p128 = scmp.eq.s32.totalorder %s10, 0
      %p129 = por %p127, %p128
      %p130 = scmp.ne.s32.totalorder %s119, %s122
      %p131 = scmp.eq.s32.totalorder %s15, 1
      %p132 = por %p130, %p131
      %p133 = scmp.ne.s32.totalorder %s122, %s123
      %p134 = scmp.eq.s32.totalorder %s15, 0
      %p135 = por %p133, %p134
      %p136 = scmp.ne.s32.totalorder %s122, %s123
      %p137 = scmp.eq.s32.totalorder %s16, 1
      %p138 = por %p136, %p137
      %p140 = scmp.ne.s32.totalorder %s123, %s139
      %p141 = scmp.eq.s32.totalorder %s16, 0
      %p142 = por %p140, %p141
      %p143 = scmp.le.s32.totalorder 1, %s10
      %p144 = scmp.lt.s32.totalorder %s10, 3
      %p145 = pnand %p143, %p144
      %p146 = pneg %p145
      // Predicated region
      $region9: #{speech_recognition_forward.5} parent=5 // pred_check
        _
      $region10: #{speech_recognition_forward.5} parent=5 // pred_check_branch
        %148 = sbr.rel (%p145) target = $region12
      $region11: #{speech_recognition_forward.5} parent=5 // pred_region
        %s149 = ssub.s32 %s10, 1
        // Predicated region
        $region13: #{speech_recognition_forward.5} parent=11 // pred_check
          %p150 = pneg %p31
        $region14: #{speech_recognition_forward.5} parent=11 // pred_check_branch
          %152 = sbr.rel (%p150) target = $region16
        $region15: #{speech_recognition_forward.5} parent=11 // pred_region
          _
        $region16: #{speech_recognition_forward.5} parent=11 // pred_fallthru
          _
      $region12: #{speech_recognition_forward.5} parent=5 // pred_fallthru
        _
      %p153 = scmp.lt.s32.totalorder %s10, 2
      // Predicated region
      $region17: #{speech_recognition_forward.5} parent=5 // pred_check
        %p154 = pneg %p153
      $region18: #{speech_recognition_forward.5} parent=5 // pred_check_branch
        %156 = sbr.rel (%p154) target = $region20
      $region19: #{speech_recognition_forward.5} parent=5 // pred_region
        // Predicated region
        $region21: #{speech_recognition_forward.5} parent=19 // pred_check
          %p157 = pneg %p51
        $region22: #{speech_recognition_forward.5} parent=19 // pred_check_branch
          %159 = sbr.rel (%p157) target = $region24
        $region23: #{speech_recognition_forward.5} parent=19 // pred_region
          %p160 = scmp.lt.s32.totalorder %s10, 1
          %s161 = scalar_select %p160, %s10, 1
          %s162 = smul.addr %s161, 128
          %s163 = smul.addr %s162, 4
          %s164 = scalar_lea.vmem %s1, %s163
        $region24: #{speech_recognition_forward.5} parent=19 // pred_fallthru
          _
        // Predicated region
        $region25: #{speech_recognition_forward.5} parent=19 // pred_check
          %p165 = pneg %p77
        $region26: #{speech_recognition_forward.5} parent=19 // pred_check_branch
          %167 = sbr.rel (%p165) target = $region28
        $region27: #{speech_recognition_forward.5} parent=19 // pred_region
          %p168 = scmp.lt.s32.totalorder %s10, 1
          %s169 = scalar_select %p168, %s10, 1
          %s170 = smul.addr %s169, 64
          %s171 = smul.addr %s170, 4
          %s172 = scalar_lea.vmem %s2, %s171
        $region28: #{speech_recognition_forward.5} parent=19 // pred_fallthru
          _
        // Predicated region
        $region29: #{speech_recognition_forward.5} parent=19 // pred_check
          %p173 = pneg %p103
        $region30: #{speech_recognition_forward.5} parent=19 // pred_check_branch
          %175 = sbr.rel (%p173) target = $region32
        $region31: #{speech_recognition_forward.5} parent=19 // pred_region
          %p176 = scmp.lt.s32.totalorder %s10, 1
          %s177 = scalar_select %p176, %s10, 1
          %s178 = smul.addr %s177, 4
          %s179 = scalar_lea.vmem %s3, %s178
        $region32: #{speech_recognition_forward.5} parent=19 // pred_fallthru
          _
      $region20: #{speech_recognition_forward.5} parent=5 // pred_fallthru
        _
      %p180 = scmp.le.s32.totalorder 1, %s10
      %p181 = scmp.lt.s32.totalorder %s10, 3
      %p182 = pnand %p180, %p181
      %p183 = pneg %p182
      // Predicated region
      $region33: #{speech_recognition_forward.5} parent=5 // pred_check
        _
      $region34: #{speech_recognition_forward.5} parent=5 // pred_check_branch
        %185 = sbr.rel (%p182) target = $region36
      $region35: #{speech_recognition_forward.5} parent=5 // pred_region
        %s186 = ssub.s32 %s10, 1
        %p187 = pneg %p31
        %p188 = pneg %p28
        %p189 = scmp.lt.s32.totalorder %s15, 1
        %s190 = scalar_select %p189, %s15, 1
        %s191 = smul.addr %s190, 128
        %s192 = smul.addr %s191, 4
        %s193 = scalar_lea.vmem %s1, %s192
        %p194 = pneg %p57
        %p195 = pneg %p54
        %p196 = scmp.lt.s32.totalorder %s15, 1
        %s197 = scalar_select %p196, %s15, 1
        %s198 = smul.addr %s197, 64
        %s199 = smul.addr %s198, 4
        %s200 = scalar_lea.vmem %s2, %s199
        %p201 = pneg %p83
        %p202 = pneg %p80
        %p203 = scmp.lt.s32.totalorder %s15, 1
        %s204 = scalar_select %p203, %s15, 1
        %s205 = smul.addr %s204, 4
        %s206 = scalar_lea.vmem %s3, %s205
        %p207 = pneg %p109
        %p208 = pneg %p106
        %p209 = pneg %p135
        %p210 = pneg %p132
        %s211 = sand.u32 %s122, 1
        %s212 = sand.u32 %s122, 1
        %s213 = smul.addr %s212, 64
        %s214 = scalar_lea.vmem [#allocation5], %s213
        %p215 = scmp.lt.s32.totalorder %s15, 1
        %s216 = scalar_select %p215, %s15, 1
        %s217 = smul.addr %s216, 128
        %s218 = smul.addr %s217, 4
        %s219 = scalar_lea.vmem %s1, %s218
        %p220 = scmp.lt.s32.totalorder %s15, 1
        %s221 = scalar_select %p220, %s15, 1
        %s222 = smul.addr %s221, 64
        %s223 = smul.addr %s222, 4
        %s224 = scalar_lea.vmem %s2, %s223
        %p225 = scmp.lt.s32.totalorder %s15, 1
        %s226 = scalar_select %p225, %s15, 1
        %s227 = smul.addr %s226, 4
        %s228 = scalar_lea.vmem %s3, %s227
        %v230 = vld [vmem:[%s0] sm:$0xff]
        %v231 = vld [vmem:[%s0 + $0x8] sm:$0xff]
        %v232 = vld [vmem:[%s0 + $0x10] sm:$0xff]
        %v233 = vld [vmem:[%s0 + $0x18] sm:$0xff]
        %v234 = vld [vmem:[%s0 + $0x20] sm:$0xff]
        %v235 = vld [vmem:[%s0 + $0x28] sm:$0xff]
        %v236 = vld [vmem:[%s0 + $0x30] sm:$0xff]
        %v237 = vld [vmem:[%s0 + $0x38] sm:$0xff]
        %v238 = vld [vmem:[%s0 + $0x40] sm:$0xff]
        %v239 = vld [vmem:[%s0 + $0x48] sm:$0xff]
        %v240 = vld [vmem:[%s0 + $0x50] sm:$0xff]
        %v241 = vld [vmem:[%s0 + $0x58] sm:$0xff]
        %v242 = vld [vmem:[%s0 + $0x60] sm:$0xff]
        %v243 = vld [vmem:[%s0 + $0x68] sm:$0xff]
        %v244 = vld [vmem:[%s0 + $0x70] sm:$0xff]
        %v245 = vld [vmem:[%s0 + $0x78] sm:$0xff]
        %v246 = vld [vmem:[%s219] sm:$0xff]
        %v247 = vld [vmem:[%s219 + $0x8] sm:$0xff]
        %v248 = vld [vmem:[%s219 + $0x10] sm:$0xff]
        %v249 = vld [vmem:[%s219 + $0x18] sm:$0xff]
        %v250 = vld [vmem:[%s219 + $0x20] sm:$0xff]
        %v251 = vld [vmem:[%s219 + $0x28] sm:$0xff]
        %v252 = vld [vmem:[%s219 + $0x30] sm:$0xff]
        %v253 = vld [vmem:[%s219 + $0x38] sm:$0xff]
        %v254 = vld [vmem:[%s219 + $0x40] sm:$0xff]
        %v255 = vld [vmem:[%s219 + $0x48] sm:$0xff]
        %v256 = vld [vmem:[%s219 + $0x50] sm:$0xff]
        %v257 = vld [vmem:[%s219 + $0x58] sm:$0xff]
        %v258 = vld [vmem:[%s219 + $0x60] sm:$0xff]
        %v259 = vld [vmem:[%s219 + $0x68] sm:$0xff]
        %v260 = vld [vmem:[%s219 + $0x70] sm:$0xff]
        %v261 = vld [vmem:[%s219 + $0x78] sm:$0xff]
        %v262 = vld [vmem:[%s219 + $0x80] sm:$0xff]
        %v263 = vld [vmem:[%s219 + $0x88] sm:$0xff]
        %v264 = vld [vmem:[%s219 + $0x90] sm:$0xff]
        %v265 = vld [vmem:[%s219 + $0x98] sm:$0xff]
        %v266 = vld [vmem:[%s219 + $0xa0] sm:$0xff]
        %v267 = vld [vmem:[%s219 + $0xa8] sm:$0xff]
        %v268 = vld [vmem:[%s219 + $0xb0] sm:$0xff]
        %v269 = vld [vmem:[%s219 + $0xb8] sm:$0xff]
        %v270 = vld [vmem:[%s219 + $0xc0] sm:$0xff]
        %v271 = vld [vmem:[%s219 + $0xc8] sm:$0xff]
        %v272 = vld [vmem:[%s219 + $0xd0] sm:$0xff]
        %v273 = vld [vmem:[%s219 + $0xd8] sm:$0xff]
        %v274 = vld [vmem:[%s219 + $0xe0] sm:$0xff]
        %v275 = vld [vmem:[%s219 + $0xe8] sm:$0xff]
        %v276 = vld [vmem:[%s219 + $0xf0] sm:$0xff]
        %v277 = vld [vmem:[%s219 + $0xf8] sm:$0xff]
        %v278 = vld [vmem:[%s219 + $0x100] sm:$0xff]
        %v279 = vld [vmem:[%s219 + $0x108] sm:$0xff]
        %v280 = vld [vmem:[%s219 + $0x110] sm:$0xff]
        %v281 = vld [vmem:[%s219 + $0x118] sm:$0xff]
        %v282 = vld [vmem:[%s219 + $0x120] sm:$0xff]
        %v283 = vld [vmem:[%s219 + $0x128] sm:$0xff]
        %v284 = vld [vmem:[%s219 + $0x130] sm:$0xff]
        %v285 = vld [vmem:[%s219 + $0x138] sm:$0xff]
        %v286 = vld [vmem:[%s219 + $0x140] sm:$0xff]
        %v287 = vld [vmem:[%s219 + $0x148] sm:$0xff]
        %v288 = vld [vmem:[%s219 + $0x150] sm:$0xff]
        %v289 = vld [vmem:[%s219 + $0x158] sm:$0xff]
        %v290 = vld [vmem:[%s219 + $0x160] sm:$0xff]
        %v291 = vld [vmem:[%s219 + $0x168] sm:$0xff]
        %v292 = vld [vmem:[%s219 + $0x170] sm:$0xff]
        %v293 = vld [vmem:[%s219 + $0x178] sm:$0xff]
        %v294 = vld [vmem:[%s219 + $0x180] sm:$0xff]
        %v295 = vld [vmem:[%s219 + $0x188] sm:$0xff]
        %v296 = vld [vmem:[%s219 + $0x190] sm:$0xff]
        %v297 = vld [vmem:[%s219 + $0x198] sm:$0xff]
        %v298 = vld [vmem:[%s219 + $0x1a0] sm:$0xff]
        %v299 = vld [vmem:[%s219 + $0x1a8] sm:$0xff]
        %v300 = vld [vmem:[%s219 + $0x1b0] sm:$0xff]
        %v301 = vld [vmem:[%s219 + $0x1b8] sm:$0xff]
        %v302 = vld [vmem:[%s219 + $0x1c0] sm:$0xff]
        %v303 = vld [vmem:[%s219 + $0x1c8] sm:$0xff]
        %v304 = vld [vmem:[%s219 + $0x1d0] sm:$0xff]
        %v305 = vld [vmem:[%s219 + $0x1d8] sm:$0xff]
        %v306 = vld [vmem:[%s219 + $0x1e0] sm:$0xff]
        %v307 = vld [vmem:[%s219 + $0x1e8] sm:$0xff]
        %v308 = vld [vmem:[%s219 + $0x1f0] sm:$0xff]
        %v309 = vld [vmem:[%s219 + $0x1f8] sm:$0xff]
        %v310 = vld [vmem:[%s228] sm:$0xf]
        %v312 = vlaneseq
        %v313 = vshrl.u32 %v312, 7
        %v314 = vsub.s32 0, %v313
        %v315 = vrot.slane %v310, %v314
        %v316 = vlaneseq
        %v317 = vshrl.u32 %v316, 7
        %v318 = vsub.s32 1, %v317
        %v319 = vrot.slane %v310, %v318
        %v320 = vlaneseq
        %v321 = vshrl.u32 %v320, 7
        %v322 = vsub.s32 2, %v321
        %v323 = vrot.slane %v310, %v322
        %v324 = vlaneseq
        %v325 = vshrl.u32 %v324, 7
        %v326 = vsub.s32 3, %v325
        %v327 = vrot.slane %v310, %v326
        %v348 = vunpack.c.l.b16 %v230
        %v349 = vunpack.c.h.b16 %v230
        %v350 = vunpack.c.l.b16 %v231
        %v351 = vunpack.c.h.b16 %v231
        %v352 = vunpack.c.l.b16 %v232
        %v353 = vunpack.c.h.b16 %v232
        %v354 = vunpack.c.l.b16 %v233
        %v355 = vunpack.c.h.b16 %v233
        %v356 = vunpack.c.l.b16 %v234
        %v357 = vunpack.c.h.b16 %v234
        %v358 = vunpack.c.l.b16 %v235
        %v359 = vunpack.c.h.b16 %v235
        %v360 = vunpack.c.l.b16 %v236
        %v361 = vunpack.c.h.b16 %v236
        %v362 = vunpack.c.l.b16 %v237
        %v363 = vunpack.c.h.b16 %v237
        %v364 = vunpack.c.l.b16 %v238
        %v365 = vunpack.c.h.b16 %v238
        %v366 = vunpack.c.l.b16 %v239
        %v367 = vunpack.c.h.b16 %v239
        %v368 = vunpack.c.l.b16 %v240
        %v369 = vunpack.c.h.b16 %v240
        %v370 = vunpack.c.l.b16 %v241
        %v371 = vunpack.c.h.b16 %v241
        %v372 = vunpack.c.l.b16 %v242
        %v373 = vunpack.c.h.b16 %v242
        %v374 = vunpack.c.l.b16 %v243
        %v375 = vunpack.c.h.b16 %v243
        %v376 = vunpack.c.l.b16 %v244
        %v377 = vunpack.c.h.b16 %v244
        %v378 = vunpack.c.l.b16 %v245
        %v379 = vunpack.c.h.b16 %v245
        %v380 = vpack.c.b16 %v350, %v348
        %v381 = vpack.c.b16 %v351, %v349
        %v382 = vpack.c.b16 %v354, %v352
        %v383 = vpack.c.b16 %v355, %v353
        %v384 = vpack.c.b16 %v358, %v356
        %v385 = vpack.c.b16 %v359, %v357
        %v386 = vpack.c.b16 %v362, %v360
        %v387 = vpack.c.b16 %v363, %v361
        %v388 = vpack.c.b16 %v366, %v364
        %v389 = vpack.c.b16 %v367, %v365
        %v390 = vpack.c.b16 %v370, %v368
        %v391 = vpack.c.b16 %v371, %v369
        %v392 = vpack.c.b16 %v374, %v372
        %v393 = vpack.c.b16 %v375, %v373
        %v394 = vpack.c.b16 %v378, %v376
        %v395 = vpack.c.b16 %v379, %v377
        %v476 = vunpack.c.l.b16 %v246
        %v477 = vunpack.c.h.b16 %v246
        %v478 = vunpack.c.l.b16 %v247
        %v479 = vunpack.c.h.b16 %v247
        %v480 = vunpack.c.l.b16 %v248
        %v481 = vunpack.c.h.b16 %v248
        %v482 = vunpack.c.l.b16 %v249
        %v483 = vunpack.c.h.b16 %v249
        %v484 = vunpack.c.l.b16 %v250
        %v485 = vunpack.c.h.b16 %v250
        %v486 = vunpack.c.l.b16 %v251
        %v487 = vunpack.c.h.b16 %v251
        %v488 = vunpack.c.l.b16 %v252
        %v489 = vunpack.c.h.b16 %v252
        %v490 = vunpack.c.l.b16 %v253
        %v491 = vunpack.c.h.b16 %v253
        %v492 = vunpack.c.l.b16 %v254
        %v493 = vunpack.c.h.b16 %v254
        %v494 = vunpack.c.l.b16 %v255
        %v495 = vunpack.c.h.b16 %v255
        %v496 = vunpack.c.l.b16 %v256
        %v497 = vunpack.c.h.b16 %v256
        %v498 = vunpack.c.l.b16 %v257
        %v499 = vunpack.c.h.b16 %v257
        %v500 = vunpack.c.l.b16 %v258
        %v501 = vunpack.c.h.b16 %v258
        %v502 = vunpack.c.l.b16 %v259
        %v503 = vunpack.c.h.b16 %v259
        %v504 = vunpack.c.l.b16 %v260
        %v505 = vunpack.c.h.b16 %v260
        %v506 = vunpack.c.l.b16 %v261
        %v507 = vunpack.c.h.b16 %v261
        %v508 = vunpack.c.l.b16 %v262
        %v509 = vunpack.c.h.b16 %v262
        %v510 = vunpack.c.l.b16 %v263
        %v511 = vunpack.c.h.b16 %v263
        %v512 = vunpack.c.l.b16 %v264
        %v513 = vunpack.c.h.b16 %v264
        %v514 = vunpack.c.l.b16 %v265
        %v515 = vunpack.c.h.b16 %v265
        %v516 = vunpack.c.l.b16 %v266
        %v517 = vunpack.c.h.b16 %v266
        %v518 = vunpack.c.l.b16 %v267
        %v519 = vunpack.c.h.b16 %v267
        %v520 = vunpack.c.l.b16 %v268
        %v521 = vunpack.c.h.b16 %v268
        %v522 = vunpack.c.l.b16 %v269
        %v523 = vunpack.c.h.b16 %v269
        %v524 = vunpack.c.l.b16 %v270
        %v525 = vunpack.c.h.b16 %v270
        %v526 = vunpack.c.l.b16 %v271
        %v527 = vunpack.c.h.b16 %v271
        %v528 = vunpack.c.l.b16 %v272
        %v529 = vunpack.c.h.b16 %v272
        %v530 = vunpack.c.l.b16 %v273
        %v531 = vunpack.c.h.b16 %v273
        %v532 = vunpack.c.l.b16 %v274
        %v533 = vunpack.c.h.b16 %v274
        %v534 = vunpack.c.l.b16 %v275
        %v535 = vunpack.c.h.b16 %v275
        %v536 = vunpack.c.l.b16 %v276
        %v537 = vunpack.c.h.b16 %v276
        %v538 = vunpack.c.l.b16 %v277
        %v539 = vunpack.c.h.b16 %v277
        %v540 = vunpack.c.l.b16 %v278
        %v541 = vunpack.c.h.b16 %v278
        %v542 = vunpack.c.l.b16 %v279
        %v543 = vunpack.c.h.b16 %v279
        %v544 = vunpack.c.l.b16 %v280
        %v545 = vunpack.c.h.b16 %v280
        %v546 = vunpack.c.l.b16 %v281
        %v547 = vunpack.c.h.b16 %v281
        %v548 = vunpack.c.l.b16 %v282
        %v549 = vunpack.c.h.b16 %v282
        %v550 = vunpack.c.l.b16 %v283
        %v551 = vunpack.c.h.b16 %v283
        %v552 = vunpack.c.l.b16 %v284
        %v553 = vunpack.c.h.b16 %v284
        %v554 = vunpack.c.l.b16 %v285
        %v555 = vunpack.c.h.b16 %v285
        %v556 = vunpack.c.l.b16 %v286
        %v557 = vunpack.c.h.b16 %v286
        %v558 = vunpack.c.l.b16 %v287
        %v559 = vunpack.c.h.b16 %v287
        %v560 = vunpack.c.l.b16 %v288
        %v561 = vunpack.c.h.b16 %v288
        %v562 = vunpack.c.l.b16 %v289
        %v563 = vunpack.c.h.b16 %v289
        %v564 = vunpack.c.l.b16 %v290
        %v565 = vunpack.c.h.b16 %v290
        %v566 = vunpack.c.l.b16 %v291
        %v567 = vunpack.c.h.b16 %v291
        %v568 = vunpack.c.l.b16 %v292
        %v569 = vunpack.c.h.b16 %v292
        %v570 = vunpack.c.l.b16 %v293
        %v571 = vunpack.c.h.b16 %v293
        %v572 = vunpack.c.l.b16 %v294
        %v573 = vunpack.c.h.b16 %v294
        %v574 = vunpack.c.l.b16 %v295
        %v575 = vunpack.c.h.b16 %v295
        %v576 = vunpack.c.l.b16 %v296
        %v577 = vunpack.c.h.b16 %v296
        %v578 = vunpack.c.l.b16 %v297
        %v579 = vunpack.c.h.b16 %v297
        %v580 = vunpack.c.l.b16 %v298
        %v581 = vunpack.c.h.b16 %v298
        %v582 = vunpack.c.l.b16 %v299
        %v583 = vunpack.c.h.b16 %v299
        %v584 = vunpack.c.l.b16 %v300
        %v585 = vunpack.c.h.b16 %v300
        %v586 = vunpack.c.l.b16 %v301
        %v587 = vunpack.c.h.b16 %v301
        %v588 = vunpack.c.l.b16 %v302
        %v589 = vunpack.c.h.b16 %v302
        %v590 = vunpack.c.l.b16 %v303
        %v591 = vunpack.c.h.b16 %v303
        %v592 = vunpack.c.l.b16 %v304
        %v593 = vunpack.c.h.b16 %v304
        %v594 = vunpack.c.l.b16 %v305
        %v595 = vunpack.c.h.b16 %v305
        %v596 = vunpack.c.l.b16 %v306
        %v597 = vunpack.c.h.b16 %v306
        %v598 = vunpack.c.l.b16 %v307
        %v599 = vunpack.c.h.b16 %v307
        %v600 = vunpack.c.l.b16 %v308
        %v601 = vunpack.c.h.b16 %v308
        %v602 = vunpack.c.l.b16 %v309
        %v603 = vunpack.c.h.b16 %v309
        %v604 = vpack.c.b16 %v480, %v476
        %v605 = vpack.c.b16 %v481, %v477
        %v606 = vpack.c.b16 %v482, %v478
        %v607 = vpack.c.b16 %v483, %v479
        %v608 = vpack.c.b16 %v488, %v484
        %v609 = vpack.c.b16 %v489, %v485
        %v610 = vpack.c.b16 %v490, %v486
        %v611 = vpack.c.b16 %v491, %v487
        %v612 = vpack.c.b16 %v496, %v492
        %v613 = vpack.c.b16 %v497, %v493
        %v614 = vpack.c.b16 %v498, %v494
        %v615 = vpack.c.b16 %v499, %v495
        %v616 = vpack.c.b16 %v504, %v500
        %v617 = vpack.c.b16 %v505, %v501
        %v618 = vpack.c.b16 %v506, %v502
        %v619 = vpack.c.b16 %v507, %v503
        %v620 = vpack.c.b16 %v512, %v508
        %v621 = vpack.c.b16 %v513, %v509
        %v622 = vpack.c.b16 %v514, %v510
        %v623 = vpack.c.b16 %v515, %v511
        %v624 = vpack.c.b16 %v520, %v516
        %v625 = vpack.c.b16 %v521, %v517
        %v626 = vpack.c.b16 %v522, %v518
        %v627 = vpack.c.b16 %v523, %v519
        %v628 = vpack.c.b16 %v528, %v524
        %v629 = vpack.c.b16 %v529, %v525
        %v630 = vpack.c.b16 %v530, %v526
        %v631 = vpack.c.b16 %v531, %v527
        %v632 = vpack.c.b16 %v536, %v532
        %v633 = vpack.c.b16 %v537, %v533
        %v634 = vpack.c.b16 %v538, %v534
        %v635 = vpack.c.b16 %v539, %v535
        %v636 = vpack.c.b16 %v544, %v540
        %v637 = vpack.c.b16 %v545, %v541
        %v638 = vpack.c.b16 %v546, %v542
        %v639 = vpack.c.b16 %v547, %v543
        %v640 = vpack.c.b16 %v552, %v548
        %v641 = vpack.c.b16 %v553, %v549
        %v642 = vpack.c.b16 %v554, %v550
        %v643 = vpack.c.b16 %v555, %v551
        %v644 = vpack.c.b16 %v560, %v556
        %v645 = vpack.c.b16 %v561, %v557
        %v646 = vpack.c.b16 %v562, %v558
        %v647 = vpack.c.b16 %v563, %v559
        %v648 = vpack.c.b16 %v568, %v564
        %v649 = vpack.c.b16 %v569, %v565
        %v650 = vpack.c.b16 %v570, %v566
        %v651 = vpack.c.b16 %v571, %v567
        %v652 = vpack.c.b16 %v576, %v572
        %v653 = vpack.c.b16 %v577, %v573
        %v654 = vpack.c.b16 %v578, %v574
        %v655 = vpack.c.b16 %v579, %v575
        %v656 = vpack.c.b16 %v584, %v580
        %v657 = vpack.c.b16 %v585, %v581
        %v658 = vpack.c.b16 %v586, %v582
        %v659 = vpack.c.b16 %v587, %v583
        %v660 = vpack.c.b16 %v592, %v588
        %v661 = vpack.c.b16 %v593, %v589
        %v662 = vpack.c.b16 %v594, %v590
        %v663 = vpack.c.b16 %v595, %v591
        %v664 = vpack.c.b16 %v600, %v596
        %v665 = vpack.c.b16 %v601, %v597
        %v666 = vpack.c.b16 %v602, %v598
        %v667 = vpack.c.b16 %v603, %v599
        %732 = vmatprep.subr.bf16.mxu0 %v605
        %733 = vmatpush1.bf16.msra.mxu0 %v604
        %734 = vmatprep.subr.bf16.mxu0 %v609
        %735 = vmatpush1.bf16.msra.mxu0 %v608
        %736 = vmatprep.subr.bf16.mxu0 %v613
        %737 = vmatpush1.bf16.msra.mxu0 %v612
        %738 = vmatprep.subr.bf16.mxu0 %v617
        %739 = vmatpush1.bf16.msra.mxu0 %v616
        %740 = vmatprep.subr.bf16.mxu0 %v621
        %741 = vmatpush1.bf16.msra.mxu0 %v620
        %742 = vmatprep.subr.bf16.mxu0 %v625
        %743 = vmatpush1.bf16.msra.mxu0 %v624
        %744 = vmatprep.subr.bf16.mxu0 %v629
        %745 = vmatpush1.bf16.msra.mxu0 %v628
        %746 = vmatprep.subr.bf16.mxu0 %v633
        %747 = vmatpush1.bf16.msra.mxu0 %v632
        %748 = vmatprep.subr.bf16.mxu0 %v637
        %749 = vmatpush1.bf16.msra.mxu0 %v636
        %750 = vmatprep.subr.bf16.mxu0 %v641
        %751 = vmatpush1.bf16.msra.mxu0 %v640
        %752 = vmatprep.subr.bf16.mxu0 %v645
        %753 = vmatpush1.bf16.msra.mxu0 %v644
        %754 = vmatprep.subr.bf16.mxu0 %v649
        %755 = vmatpush1.bf16.msra.mxu0 %v648
        %756 = vmatprep.subr.bf16.mxu0 %v653
        %757 = vmatpush1.bf16.msra.mxu0 %v652
        %758 = vmatprep.subr.bf16.mxu0 %v657
        %759 = vmatpush1.bf16.msra.mxu0 %v656
        %760 = vmatprep.subr.bf16.mxu0 %v661
        %761 = vmatpush1.bf16.msra.mxu0 %v660
        %762 = vmatprep.subr.bf16.mxu0 %v665
        %763 = vmatpush1.bf16.msra.mxu0 %v664
        %764 = vmatprep.mubr.bf16.mxu0 %v381
        %765 = vmatmul.mubr.bf16.gmra.mrb[0].mxu0 %v380
        %v766 = vpop.f32.mrb[0].mxu0
        %v767 = vadd.f32 %v315, %v766
        %v768 = vpop.f32.mrb[0].mxu0
        %v769 = vadd.f32 %v319, %v768
        %v770 = vpop.f32.mrb[0].mxu0
        %v771 = vadd.f32 %v315, %v770
        %v772 = vpop.f32.mrb[0].mxu0
        %v773 = vadd.f32 %v319, %v772
        %774 = vmatprep.mubr.bf16.mxu0 %v383
        %775 = vmatmul.mubr.bf16.gmra.mrb[0].mxu0 %v382
        %v776 = vpop.f32.mrb[0].mxu0
        %v777 = vadd.f32 %v315, %v776
        %v778 = vpop.f32.mrb[0].mxu0
        %v779 = vadd.f32 %v319, %v778
        %v780 = vpop.f32.mrb[0].mxu0
        %v781 = vadd.f32 %v315, %v780
        %v782 = vpop.f32.mrb[0].mxu0
        %v783 = vadd.f32 %v319, %v782
        %784 = vmatprep.mubr.bf16.mxu0 %v385
        %785 = vmatmul.mubr.bf16.gmra.mrb[0].mxu0 %v384
        %v786 = vpop.f32.mrb[0].mxu0
        %v787 = vadd.f32 %v315, %v786
        %v788 = vpop.f32.mrb[0].mxu0
        %v789 = vadd.f32 %v319, %v788
        %v790 = vpop.f32.mrb[0].mxu0
        %v791 = vadd.f32 %v315, %v790
        %v792 = vpop.f32.mrb[0].mxu0
        %v793 = vadd.f32 %v319, %v792
        %794 = vmatprep.mubr.bf16.mxu0 %v387
        %795 = vmatmul.mubr.bf16.gmra.mrb[0].mxu0 %v386
        %v796 = vpop.f32.mrb[0].mxu0
        %v797 = vadd.f32 %v315, %v796
        %v798 = vpop.f32.mrb[0].mxu0
        %v799 = vadd.f32 %v319, %v798
        %v800 = vpop.f32.mrb[0].mxu0
        %v801 = vadd.f32 %v315, %v800
        %v802 = vpop.f32.mrb[0].mxu0
        %v803 = vadd.f32 %v319, %v802
        %804 = vmatprep.mubr.bf16.mxu0 %v389
        %805 = vmatmul.mubr.bf16.gmra.mrb[0].mxu0 %v388
        %v806 = vpop.f32.mrb[0].mxu0
        %v807 = vadd.f32 %v315, %v806
        %v808 = vpop.f32.mrb[0].mxu0
        %v809 = vadd.f32 %v319, %v808
        %v810 = vpop.f32.mrb[0].mxu0
        %v811 = vadd.f32 %v315, %v810
        %v812 = vpop.f32.mrb[0].mxu0
        %v813 = vadd.f32 %v319, %v812
        %814 = vmatprep.mubr.bf16.mxu0 %v391
        %815 = vmatmul.mubr.bf16.gmra.mrb[0].mxu0 %v390
        %v816 = vpop.f32.mrb[0].mxu0
        %v817 = vadd.f32 %v315, %v816
        %v818 = vpop.f32.mrb[0].mxu0
        %v819 = vadd.f32 %v319, %v818
        %v820 = vpop.f32.mrb[0].mxu0
        %v821 = vadd.f32 %v315, %v820
        %v822 = vpop.f32.mrb[0].mxu0
        %v823 = vadd.f32 %v319, %v822
        %824 = vmatprep.mubr.bf16.mxu0 %v393
        %825 = vmatmul.mubr.bf16.gmra.mrb[0].mxu0 %v392
        %v826 = vpop.f32.mrb[0].mxu0
        %v827 = vadd.f32 %v315, %v826
        %v828 = vpop.f32.mrb[0].mxu0
        %v829 = vadd.f32 %v319, %v828
        %v830 = vpop.f32.mrb[0].mxu0
        %v831 = vadd.f32 %v315, %v830
        %v832 = vpop.f32.mrb[0].mxu0
        %v833 = vadd.f32 %v319, %v832
        %834 = vmatprep.mubr.bf16.mxu0 %v395
        %835 = vmatmul.mubr.bf16.gmra.mrb[0].mxu0 %v394
        %v836 = vpop.f32.mrb[0].mxu0
        %v837 = vadd.f32 %v315, %v836
        %v838 = vpop.f32.mrb[0].mxu0
        %v839 = vadd.f32 %v319, %v838
        %v840 = vpop.f32.mrb[0].mxu0
        %v841 = vadd.f32 %v315, %v840
        %v842 = vpop.f32.mrb[0].mxu0
        %v843 = vadd.f32 %v319, %v842
        %844 = vdwg.mxu0
        %845 = vmatprep.subr.bf16.mxu0 %v607
        %846 = vmatpush1.bf16.msra.mxu0 %v606
        %847 = vmatprep.subr.bf16.mxu0 %v611
        %848 = vmatpush1.bf16.msra.mxu0 %v610
        %849 = vmatprep.subr.bf16.mxu0 %v615
        %850 = vmatpush1.bf16.msra.mxu0 %v614
        %851 = vmatprep.subr.bf16.mxu0 %v619
        %852 = vmatpush1.bf16.msra.mxu0 %v618
        %853 = vmatprep.subr.bf16.mxu0 %v623
        %854 = vmatpush1.bf16.msra.mxu0 %v622
        %855 = vmatprep.subr.bf16.mxu0 %v627
        %856 = vmatpush1.bf16.msra.mxu0 %v626
        %857 = vmatprep.subr.bf16.mxu0 %v631
        %858 = vmatpush1.bf16.msra.mxu0 %v630
        %859 = vmatprep.subr.bf16.mxu0 %v635
        %860 = vmatpush1.bf16.msra.mxu0 %v634
        %861 = vmatprep.subr.bf16.mxu0 %v639
        %862 = vmatpush1.bf16.msra.mxu0 %v638
        %863 = vmatprep.subr.bf16.mxu0 %v643
        %864 = vmatpush1.bf16.msra.mxu0 %v642
        %865 = vmatprep.subr.bf16.mxu0 %v647
        %866 = vmatpush1.bf16.msra.mxu0 %v646
        %867 = vmatprep.subr.bf16.mxu0 %v651
        %868 = vmatpush1.bf16.msra.mxu0 %v650
        %869 = vmatprep.subr.bf16.mxu0 %v655
        %870 = vmatpush1.bf16.msra.mxu0 %v654
        %871 = vmatprep.subr.bf16.mxu0 %v659
        %872 = vmatpush1.bf16.msra.mxu0 %v658
        %873 = vmatprep.subr.bf16.mxu0 %v663
        %874 = vmatpush1.bf16.msra.mxu0 %v662
        %875 = vmatprep.subr.bf16.mxu0 %v667
        %876 = vmatpush1.bf16.msra.mxu0 %v666
        %877 = vmatprep.mubr.bf16.mxu0 %v381
        %878 = vmatmul.mubr.bf16.gmra.mrb[0].mxu0 %v380
        %v879 = vpop.f32.mrb[0].mxu0
        %v880 = vadd.f32 %v323, %v879
        %v881 = vpop.f32.mrb[0].mxu0
        %v882 = vadd.f32 %v327, %v881
        %v883 = vpop.f32.mrb[0].mxu0
        %v884 = vadd.f32 %v323, %v883
        %v885 = vpop.f32.mrb[0].mxu0
        %v886 = vadd.f32 %v327, %v885
        %887 = vmatprep.mubr.bf16.mxu0 %v383
        %888 = vmatmul.mubr.bf16.gmra.mrb[0].mxu0 %v382
        %v889 = vpop.f32.mrb[0].mxu0
        %v890 = vadd.f32 %v323, %v889
        %v891 = vpop.f32.mrb[0].mxu0
        %v892 = vadd.f32 %v327, %v891
        %v893 = vpop.f32.mrb[0].mxu0
        %v894 = vadd.f32 %v323, %v893
        %v895 = vpop.f32.mrb[0].mxu0
        %v896 = vadd.f32 %v327, %v895
        %897 = vmatprep.mubr.bf16.mxu0 %v385
        %898 = vmatmul.mubr.bf16.gmra.mrb[0].mxu0 %v384
        %v899 = vpop.f32.mrb[0].mxu0
        %v900 = vadd.f32 %v323, %v899
        %v901 = vpop.f32.mrb[0].mxu0
        %v902 = vadd.f32 %v327, %v901
        %v903 = vpop.f32.mrb[0].mxu0
        %v904 = vadd.f32 %v323, %v903
        %v905 = vpop.f32.mrb[0].mxu0
        %v906 = vadd.f32 %v327, %v905
        %907 = vmatprep.mubr.bf16.mxu0 %v387
        %908 = vmatmul.mubr.bf16.gmra.mrb[0].mxu0 %v386
        %v909 = vpop.f32.mrb[0].mxu0
        %v910 = vadd.f32 %v323, %v909
        %v911 = vpop.f32.mrb[0].mxu0
        %v912 = vadd.f32 %v327, %v911
        %v913 = vpop.f32.mrb[0].mxu0
        %v914 = vadd.f32 %v323, %v913
        %v915 = vpop.f32.mrb[0].mxu0
        %v916 = vadd.f32 %v327, %v915
        %917 = vmatprep.mubr.bf16.mxu0 %v389
        %918 = vmatmul.mubr.bf16.gmra.mrb[0].mxu0 %v388
        %v919 = vpop.f32.mrb[0].mxu0
        %v920 = vadd.f32 %v323, %v919
        %v921 = vpop.f32.mrb[0].mxu0
        %v922 = vadd.f32 %v327, %v921
        %v923 = vpop.f32.mrb[0].mxu0
        %v924 = vadd.f32 %v323, %v923
        %v925 = vpop.f32.mrb[0].mxu0
        %v926 = vadd.f32 %v327, %v925
        %927 = vmatprep.mubr.bf16.mxu0 %v391
        %928 = vmatmul.mubr.bf16.gmra.mrb[0].mxu0 %v390
        %v929 = vpop.f32.mrb[0].mxu0
        %v930 = vadd.f32 %v323, %v929
        %v931 = vpop.f32.mrb[0].mxu0
        %v932 = vadd.f32 %v327, %v931
        %v933 = vpop.f32.mrb[0].mxu0
        %v934 = vadd.f32 %v323, %v933
        %v935 = vpop.f32.mrb[0].mxu0
        %v936 = vadd.f32 %v327, %v935
        %937 = vmatprep.mubr.bf16.mxu0 %v393
        %938 = vmatmul.mubr.bf16.gmra.mrb[0].mxu0 %v392
        %v939 = vpop.f32.mrb[0].mxu0
        %v940 = vadd.f32 %v323, %v939
        %v941 = vpop.f32.mrb[0].mxu0
        %v942 = vadd.f32 %v327, %v941
        %v943 = vpop.f32.mrb[0].mxu0
        %v944 = vadd.f32 %v323, %v943
        %v945 = vpop.f32.mrb[0].mxu0
        %v946 = vadd.f32 %v327, %v945
        %947 = vmatprep.mubr.bf16.mxu0 %v395
        %948 = vmatmul.mubr.bf16.gmra.mrb[0].mxu0 %v394
        %v949 = vpop.f32.mrb[0].mxu0
        %v950 = vadd.f32 %v323, %v949
        %v951 = vpop.f32.mrb[0].mxu0
        %v952 = vadd.f32 %v327, %v951
        %v953 = vpop.f32.mrb[0].mxu0
        %v954 = vadd.f32 %v323, %v953
        %v955 = vpop.f32.mrb[0].mxu0
        %v956 = vadd.f32 %v327, %v955
        %957 = vdwg.mxu0
        %958 = vst [vmem:[#allocation2] sm:$0xff] %v767
        %959 = vst [vmem:[#allocation2 + $0x8] sm:$0xff] %v769
        %960 = vst [vmem:[#allocation2 + $0x10] sm:$0xff] %v880
        %961 = vst [vmem:[#allocation2 + $0x18] sm:$0xff] %v882
        %962 = vst [vmem:[#allocation2 + $0x20] sm:$0xff] %v771
        %963 = vst [vmem:[#allocation2 + $0x28] sm:$0xff] %v773
        %964 = vst [vmem:[#allocation2 + $0x30] sm:$0xff] %v884
        %965 = vst [vmem:[#allocation2 + $0x38] sm:$0xff] %v886
        %966 = vst [vmem:[#allocation2 + $0x40] sm:$0xff] %v777
        %967 = vst [vmem:[#allocation2 + $0x48] sm:$0xff] %v779
        %968 = vst [vmem:[#allocation2 + $0x50] sm:$0xff] %v890
        %969 = vst [vmem:[#allocation2 + $0x58] sm:$0xff] %v892
        %970 = vst [vmem:[#allocation2 + $0x60] sm:$0xff] %v781
        %971 = vst [vmem:[#allocation2 + $0x68] sm:$0xff] %v783
        %972 = vst [vmem:[#allocation2 + $0x70] sm:$0xff] %v894
        %973 = vst [vmem:[#allocation2 + $0x78] sm:$0xff] %v896
        %974 = vst [vmem:[#allocation2 + $0x80] sm:$0xff] %v787
        %975 = vst [vmem:[#allocation2 + $0x88] sm:$0xff] %v789
        %976 = vst [vmem:[#allocation2 + $0x90] sm:$0xff] %v900
        %977 = vst [vmem:[#allocation2 + $0x98] sm:$0xff] %v902
        %978 = vst [vmem:[#allocation2 + $0xa0] sm:$0xff] %v791
        %979 = vst [vmem:[#allocation2 + $0xa8] sm:$0xff] %v793
        %980 = vst [vmem:[#allocation2 + $0xb0] sm:$0xff] %v904
        %981 = vst [vmem:[#allocation2 + $0xb8] sm:$0xff] %v906
        %982 = vst [vmem:[#allocation2 + $0xc0] sm:$0xff] %v797
        %983 = vst [vmem:[#allocation2 + $0xc8] sm:$0xff] %v799
        %984 = vst [vmem:[#allocation2 + $0xd0] sm:$0xff] %v910
        %985 = vst [vmem:[#allocation2 + $0xd8] sm:$0xff] %v912
        %986 = vst [vmem:[#allocation2 + $0xe0] sm:$0xff] %v801
        %987 = vst [vmem:[#allocation2 + $0xe8] sm:$0xff] %v803
        %988 = vst [vmem:[#allocation2 + $0xf0] sm:$0xff] %v914
        %989 = vst [vmem:[#allocation2 + $0xf8] sm:$0xff] %v916
        %990 = vst [vmem:[#allocation2 + $0x100] sm:$0xff] %v807
        %991 = vst [vmem:[#allocation2 + $0x108] sm:$0xff] %v809
        %992 = vst [vmem:[#allocation2 + $0x110] sm:$0xff] %v920
        %993 = vst [vmem:[#allocation2 + $0x118] sm:$0xff] %v922
        %994 = vst [vmem:[#allocation2 + $0x120] sm:$0xff] %v811
        %995 = vst [vmem:[#allocation2 + $0x128] sm:$0xff] %v813
        %996 = vst [vmem:[#allocation2 + $0x130] sm:$0xff] %v924
        %997 = vst [vmem:[#allocation2 + $0x138] sm:$0xff] %v926
        %998 = vst [vmem:[#allocation2 + $0x140] sm:$0xff] %v817
        %999 = vst [vmem:[#allocation2 + $0x148] sm:$0xff] %v819
        %1000 = vst [vmem:[#allocation2 + $0x150] sm:$0xff] %v930
        %1001 = vst [vmem:[#allocation2 + $0x158] sm:$0xff] %v932
        %1002 = vst [vmem:[#allocation2 + $0x160] sm:$0xff] %v821
        %1003 = vst [vmem:[#allocation2 + $0x168] sm:$0xff] %v823
        %1004 = vst [vmem:[#allocation2 + $0x170] sm:$0xff] %v934
        %1005 = vst [vmem:[#allocation2 + $0x178] sm:$0xff] %v936
        %1006 = vst [vmem:[#allocation2 + $0x180] sm:$0xff] %v827
        %1007 = vst [vmem:[#allocation2 + $0x188] sm:$0xff] %v829
        %1008 = vst [vmem:[#allocation2 + $0x190] sm:$0xff] %v940
        %1009 = vst [vmem:[#allocation2 + $0x198] sm:$0xff] %v942
        %1010 = vst [vmem:[#allocation2 + $0x1a0] sm:$0xff] %v831
        %1011 = vst [vmem:[#allocation2 + $0x1a8] sm:$0xff] %v833
        %1012 = vst [vmem:[#allocation2 + $0x1b0] sm:$0xff] %v944
        %1013 = vst [vmem:[#allocation2 + $0x1b8] sm:$0xff] %v946
        %1014 = vst [vmem:[#allocation2 + $0x1c0] sm:$0xff] %v837
        %1015 = vst [vmem:[#allocation2 + $0x1c8] sm:$0xff] %v839
        %1016 = vst [vmem:[#allocation2 + $0x1d0] sm:$0xff] %v950
        %1017 = vst [vmem:[#allocation2 + $0x1d8] sm:$0xff] %v952
        %1018 = vst [vmem:[#allocation2 + $0x1e0] sm:$0xff] %v841
        %1019 = vst [vmem:[#allocation2 + $0x1e8] sm:$0xff] %v843
        %1020 = vst [vmem:[#allocation2 + $0x1f0] sm:$0xff] %v954
        %1021 = vst [vmem:[#allocation2 + $0x1f8] sm:$0xff] %v956
        %1022 = vst [vmem:[#allocation3] sm:$0xff] 0.0
        %1023 = vst [vmem:[#allocation3 + $0x8] sm:$0xff] 0.0
        %1024 = vst [vmem:[#allocation4] sm:$0xff] 0.0
        %1025 = vst [vmem:[#allocation4 + $0x8] sm:$0xff] 0.0
        %p1026 = scmp.eq.s32.totalorder %s15, 1
        loop: start=0, step=1, limit=8
        $region37: #{speech_recognition_forward.5} parent=35 // loop_pre_header
          _
        $region38: #{speech_recognition_forward.5} parent=35 // loop_header
          %s1028 = sphi 0, %s1032
          %p1029 = scmp.ge.s32.totalorder %s1028, 8
        $region39: #{speech_recognition_forward.5} parent=35 // loop_header_branch
          %1031 = sbr.rel (%p1029) target = $region43
        $region40: #{speech_recognition_forward.5} parent=35 // loop_body
          %s1033 = ssub.s32 7, %s1028
          %s1034 = scalar_select %p1026, %s1033, %s1028
          %s1035 = smul.u32 %s1034, 8
          %s1036 = smul.addr %s1035, 8
          %s1037 = scalar_lea.vmem [#allocation2], %s1036
          %v1038 = vld [vmem:[%s1037] sm:$0xff]
          %v1039 = vld [vmem:[%s1037 + $0x8] sm:$0xff]
          %v1040 = vld [vmem:[%s1037 + $0x10] sm:$0xff]
          %v1041 = vld [vmem:[%s1037 + $0x18] sm:$0xff]
          %v1042 = vld [vmem:[%s1037 + $0x20] sm:$0xff]
          %v1043 = vld [vmem:[%s1037 + $0x28] sm:$0xff]
          %v1044 = vld [vmem:[%s1037 + $0x30] sm:$0xff]
          %v1045 = vld [vmem:[%s1037 + $0x38] sm:$0xff]
          %v1046 = vld [vmem:[#allocation3] sm:$0xff]
          %v1047 = vld [vmem:[#allocation3 + $0x8] sm:$0xff]
          %v1048 = vpack.c.bf16 %v1047, %v1046
          %v1049 = vld [vmem:[%s224] sm:$0xff]
          %v1050 = vld [vmem:[%s224 + $0x8] sm:$0xff]
          %v1051 = vld [vmem:[%s224 + $0x10] sm:$0xff]
          %v1052 = vld [vmem:[%s224 + $0x18] sm:$0xff]
          %v1053 = vld [vmem:[%s224 + $0x20] sm:$0xff]
          %v1054 = vld [vmem:[%s224 + $0x28] sm:$0xff]
          %v1055 = vld [vmem:[%s224 + $0x30] sm:$0xff]
          %v1056 = vld [vmem:[%s224 + $0x38] sm:$0xff]
          %v1057 = vld [vmem:[%s224 + $0x40] sm:$0xff]
          %v1058 = vld [vmem:[%s224 + $0x48] sm:$0xff]
          %v1059 = vld [vmem:[%s224 + $0x50] sm:$0xff]
          %v1060 = vld [vmem:[%s224 + $0x58] sm:$0xff]
          %v1061 = vld [vmem:[%s224 + $0x60] sm:$0xff]
          %v1062 = vld [vmem:[%s224 + $0x68] sm:$0xff]
          %v1063 = vld [vmem:[%s224 + $0x70] sm:$0xff]
          %v1064 = vld [vmem:[%s224 + $0x78] sm:$0xff]
          %v1065 = vld [vmem:[%s224 + $0x80] sm:$0xff]
          %v1066 = vld [vmem:[%s224 + $0x88] sm:$0xff]
          %v1067 = vld [vmem:[%s224 + $0x90] sm:$0xff]
          %v1068 = vld [vmem:[%s224 + $0x98] sm:$0xff]
          %v1069 = vld [vmem:[%s224 + $0xa0] sm:$0xff]
          %v1070 = vld [vmem:[%s224 + $0xa8] sm:$0xff]
          %v1071 = vld [vmem:[%s224 + $0xb0] sm:$0xff]
          %v1072 = vld [vmem:[%s224 + $0xb8] sm:$0xff]
          %v1073 = vld [vmem:[%s224 + $0xc0] sm:$0xff]
          %v1074 = vld [vmem:[%s224 + $0xc8] sm:$0xff]
          %v1075 = vld [vmem:[%s224 + $0xd0] sm:$0xff]
          %v1076 = vld [vmem:[%s224 + $0xd8] sm:$0xff]
          %v1077 = vld [vmem:[%s224 + $0xe0] sm:$0xff]
          %v1078 = vld [vmem:[%s224 + $0xe8] sm:$0xff]
          %v1079 = vld [vmem:[%s224 + $0xf0] sm:$0xff]
          %v1080 = vld [vmem:[%s224 + $0xf8] sm:$0xff]
          %v1113 = vunpack.c.l.b16 %v1049
          %v1114 = vunpack.c.h.b16 %v1049
          %v1115 = vunpack.c.l.b16 %v1050
          %v1116 = vunpack.c.h.b16 %v1050
          %v1117 = vunpack.c.l.b16 %v1051
          %v1118 = vunpack.c.h.b16 %v1051
          %v1119 = vunpack.c.l.b16 %v1052
          %v1120 = vunpack.c.h.b16 %v1052
          %v1121 = vunpack.c.l.b16 %v1053
          %v1122 = vunpack.c.h.b16 %v1053
          %v1123 = vunpack.c.l.b16 %v1054
          %v1124 = vunpack.c.h.b16 %v1054
          %v1125 = vunpack.c.l.b16 %v1055
          %v1126 = vunpack.c.h.b16 %v1055
          %v1127 = vunpack.c.l.b16 %v1056
          %v1128 = vunpack.c.h.b16 %v1056
          %v1129 = vunpack.c.l.b16 %v1057
          %v1130 = vunpack.c.h.b16 %v1057
          %v1131 = vunpack.c.l.b16 %v1058
          %v1132 = vunpack.c.h.b16 %v1058
          %v1133 = vunpack.c.l.b16 %v1059
          %v1134 = vunpack.c.h.b16 %v1059
          %v1135 = vunpack.c.l.b16 %v1060
          %v1136 = vunpack.c.h.b16 %v1060
          %v1137 = vunpack.c.l.b16 %v1061
          %v1138 = vunpack.c.h.b16 %v1061
          %v1139 = vunpack.c.l.b16 %v1062
          %v1140 = vunpack.c.h.b16 %v1062
          %v1141 = vunpack.c.l.b16 %v1063
          %v1142 = vunpack.c.h.b16 %v1063
          %v1143 = vunpack.c.l.b16 %v1064
          %v1144 = vunpack.c.h.b16 %v1064
          %v1145 = vunpack.c.l.b16 %v1065
          %v1146 = vunpack.c.h.b16 %v1065
          %v1147 = vunpack.c.l.b16 %v1066
          %v1148 = vunpack.c.h.b16 %v1066
          %v1149 = vunpack.c.l.b16 %v1067
          %v1150 = vunpack.c.h.b16 %v1067
          %v1151 = vunpack.c.l.b16 %v1068
          %v1152 = vunpack.c.h.b16 %v1068
          %v1153 = vunpack.c.l.b16 %v1069
          %v1154 = vunpack.c.h.b16 %v1069
          %v1155 = vunpack.c.l.b16 %v1070
          %v1156 = vunpack.c.h.b16 %v1070
          %v1157 = vunpack.c.l.b16 %v1071
          %v1158 = vunpack.c.h.b16 %v1071
          %v1159 = vunpack.c.l.b16 %v1072
          %v1160 = vunpack.c.h.b16 %v1072
          %v1161 = vunpack.c.l.b16 %v1073
          %v1162 = vunpack.c.h.b16 %v1073
          %v1163 = vunpack.c.l.b16 %v1074
          %v1164 = vunpack.c.h.b16 %v1074
          %v1165 = vunpack.c.l.b16 %v1075
          %v1166 = vunpack.c.h.b16 %v1075
          %v1167 = vunpack.c.l.b16 %v1076
          %v1168 = vunpack.c.h.b16 %v1076
          %v1169 = vunpack.c.l.b16 %v1077
          %v1170 = vunpack.c.h.b16 %v1077
          %v1171 = vunpack.c.l.b16 %v1078
          %v1172 = vunpack.c.h.b16 %v1078
          %v1173 = vunpack.c.l.b16 %v1079
          %v1174 = vunpack.c.h.b16 %v1079
          %v1175 = vunpack.c.l.b16 %v1080
          %v1176 = vunpack.c.h.b16 %v1080
          %v1177 = vpack.c.b16 %v1117, %v1113
          %v1178 = vpack.c.b16 %v1118, %v1114
          %v1179 = vpack.c.b16 %v1119, %v1115
          %v1180 = vpack.c.b16 %v1120, %v1116
          %v1181 = vpack.c.b16 %v1125, %v1121
          %v1182 = vpack.c.b16 %v1126, %v1122
          %v1183 = vpack.c.b16 %v1127, %v1123
          %v1184 = vpack.c.b16 %v1128, %v1124
          %v1185 = vpack.c.b16 %v1133, %v1129
          %v1186 = vpack.c.b16 %v1134, %v1130
          %v1187 = vpack.c.b16 %v1135, %v1131
          %v1188 = vpack.c.b16 %v1136, %v1132
          %v1189 = vpack.c.b16 %v1141, %v1137
          %v1190 = vpack.c.b16 %v1142, %v1138
          %v1191 = vpack.c.b16 %v1143, %v1139
          %v1192 = vpack.c.b16 %v1144, %v1140
          %v1193 = vpack.c.b16 %v1149, %v1145
          %v1194 = vpack.c.b16 %v1150, %v1146
          %v1195 = vpack.c.b16 %v1151, %v1147
          %v1196 = vpack.c.b16 %v1152, %v1148
          %v1197 = vpack.c.b16 %v1157, %v1153
          %v1198 = vpack.c.b16 %v1158, %v1154
          %v1199 = vpack.c.b16 %v1159, %v1155
          %v1200 = vpack.c.b16 %v1160, %v1156
          %v1201 = vpack.c.b16 %v1165, %v1161
          %v1202 = vpack.c.b16 %v1166, %v1162
          %v1203 = vpack.c.b16 %v1167, %v1163
          %v1204 = vpack.c.b16 %v1168, %v1164
          %v1205 = vpack.c.b16 %v1173, %v1169
          %v1206 = vpack.c.b16 %v1174, %v1170
          %v1207 = vpack.c.b16 %v1175, %v1171
          %v1208 = vpack.c.b16 %v1176, %v1172
          %1241 = vmatprep.subr.bf16.mxu0 %v1178
          %1242 = vmatpush1.bf16.msra.mxu0 %v1177
          %1243 = vmatprep.subr.bf16.mxu0 %v1182
          %1244 = vmatpush1.bf16.msra.mxu0 %v1181
          %1245 = vmatprep.subr.bf16.mxu0 %v1186
          %1246 = vmatpush1.bf16.msra.mxu0 %v1185
          %1247 = vmatprep.subr.bf16.mxu0 %v1190
          %1248 = vmatpush1.bf16.msra.mxu0 %v1189
          %1249 = vmatprep.subr.bf16.mxu0 %v1194
          %1250 = vmatpush1.bf16.msra.mxu0 %v1193
          %1251 = vmatprep.subr.bf16.mxu0 %v1198
          %1252 = vmatpush1.bf16.msra.mxu0 %v1197
          %1253 = vmatprep.subr.bf16.mxu0 %v1202
          %1254 = vmatpush1.bf16.msra.mxu0 %v1201
          %1255 = vmatprep.subr.bf16.mxu0 %v1206
          %1256 = vmatpush1.bf16.msra.mxu0 %v1205
          %1257 = vmatprep.subr.bf16.mxu0 0
          %1258 = vmatpush1.bf16.msra.mxu0 0
          %1259 = vmatprep.subr.bf16.mxu0 0
          %1260 = vmatpush1.bf16.msra.mxu0 0
          %1261 = vmatprep.subr.bf16.mxu0 0
          %1262 = vmatpush1.bf16.msra.mxu0 0
          %1263 = vmatprep.subr.bf16.mxu0 0
          %1264 = vmatpush1.bf16.msra.mxu0 0
          %1265 = vmatprep.subr.bf16.mxu0 0
          %1266 = vmatpush1.bf16.msra.mxu0 0
          %1267 = vmatprep.subr.bf16.mxu0 0
          %1268 = vmatpush1.bf16.msra.mxu0 0
          %1269 = vmatprep.subr.bf16.mxu0 0
          %1270 = vmatpush1.bf16.msra.mxu0 0
          %1271 = vmatprep.subr.bf16.mxu0 0
          %1272 = vmatpush1.bf16.msra.mxu0 0
          %1273 = vmatprep.mubr.bf16.mxu0 0
          %1274 = vmatmul.mubr.bf16.gmra.mrb[0].mxu0 %v1048
          %v1275 = vpop.f32.mrb[0].mxu0
          %v1276 = vadd.f32 0.0, %v1275
          %v1277 = vpop.f32.mrb[0].mxu0
          %v1278 = vadd.f32 0.0, %v1277
          %v1279 = vpop.f32.mrb[0].mxu0
          %v1280 = vadd.f32 0.0, %v1279
          %v1281 = vpop.f32.mrb[0].mxu0
          %v1282 = vadd.f32 0.0, %v1281
          %1283 = vdwg.mxu0
          %1284 = vmatprep.subr.bf16.mxu0 %v1180
          %1285 = vmatpush1.bf16.msra.mxu0 %v1179
          %1286 = vmatprep.subr.bf16.mxu0 %v1184
          %1287 = vmatpush1.bf16.msra.mxu0 %v1183
          %1288 = vmatprep.subr.bf16.mxu0 %v1188
          %1289 = vmatpush1.bf16.msra.mxu0 %v1187
          %1290 = vmatprep.subr.bf16.mxu0 %v1192
          %1291 = vmatpush1.bf16.msra.mxu0 %v1191
          %1292 = vmatprep.subr.bf16.mxu0 %v1196
          %1293 = vmatpush1.bf16.msra.mxu0 %v1195
          %1294 = vmatprep.subr.bf16.mxu0 %v1200
          %1295 = vmatpush1.bf16.msra.mxu0 %v1199
          %1296 = vmatprep.subr.bf16.mxu0 %v1204
          %1297 = vmatpush1.bf16.msra.mxu0 %v1203
          %1298 = vmatprep.subr.bf16.mxu0 %v1208
          %1299 = vmatpush1.bf16.msra.mxu0 %v1207
          %1300 = vmatprep.subr.bf16.mxu0 0
          %1301 = vmatpush1.bf16.msra.mxu0 0
          %1302 = vmatprep.subr.bf16.mxu0 0
          %1303 = vmatpush1.bf16.msra.mxu0 0
          %1304 = vmatprep.subr.bf16.mxu0 0
          %1305 = vmatpush1.bf16.msra.mxu0 0
          %1306 = vmatprep.subr.bf16.mxu0 0
          %1307 = vmatpush1.bf16.msra.mxu0 0
          %1308 = vmatprep.subr.bf16.mxu0 0
          %1309 = vmatpush1.bf16.msra.mxu0 0
          %1310 = vmatprep.subr.bf16.mxu0 0
          %1311 = vmatpush1.bf16.msra.mxu0 0
          %1312 = vmatprep.subr.bf16.mxu0 0
          %1313 = vmatpush1.bf16.msra.mxu0 0
          %1314 = vmatprep.subr.bf16.mxu0 0
          %1315 = vmatpush1.bf16.msra.mxu0 0
          %1316 = vmatprep.mubr.bf16.mxu0 0
          %1317 = vmatmul.mubr.bf16.gmra.mrb[0].mxu0 %v1048
          %v1318 = vpop.f32.mrb[0].mxu0
          %v1319 = vadd.f32 0.0, %v1318
          %v1320 = vpop.f32.mrb[0].mxu0
          %v1321 = vadd.f32 0.0, %v1320
          %v1322 = vpop.f32.mrb[0].mxu0
          %v1323 = vadd.f32 0.0, %v1322
          %v1324 = vpop.f32.mrb[0].mxu0
          %v1325 = vadd.f32 0.0, %v1324
          %1326 = vdwg.mxu0
          %v1327 = vadd.f32 %v1038, %v1276
          %v1328 = vadd.f32 %v1039, %v1278
          %v1329 = vadd.f32 %v1040, %v1319
          %v1330 = vadd.f32 %v1041, %v1321
          %v1331 = vadd.f32 %v1042, %v1280
          %v1332 = vadd.f32 %v1043, %v1282
          %v1333 = vadd.f32 %v1044, %v1323
          %v1334 = vadd.f32 %v1045, %v1325
          %v1335 = vxor.u32 %v1327, 2147483648
          %v1336 = vxor.u32 %v1331, 2147483648
          %v1337 = vmul.f32 %v1335, 1.442695
          %v1338 = vpow.pop %v1337
          %v1339 = vmul.f32 %v1336, 1.442695
          %v1340 = vpow.pop %v1339
          %v1341 = vadd.f32 %v1338, 1.0
          %v1342 = vadd.f32 %v1340, 1.0
          %v1343 = vrcp.pop %v1341
          %v1344 = vmul.f32 1.0, %v1343
          %v1345 = vrcp.pop %v1342
          %v1346 = vmul.f32 1.0, %v1345
          %v1347 = vxor.u32 %v1328, 2147483648
          %v1348 = vxor.u32 %v1332, 2147483648
          %v1349 = vmul.f32 %v1347, 1.442695
          %v1350 = vpow.pop %v1349
          %v1351 = vmul.f32 %v1348, 1.442695
          %v1352 = vpow.pop %v1351
          %v1353 = vadd.f32 %v1350, 1.0
          %v1354 = vadd.f32 %v1352, 1.0
          %v1355 = vrcp.pop %v1353
          %v1356 = vmul.f32 1.0, %v1355
          %v1357 = vrcp.pop %v1354
          %v1358 = vmul.f32 1.0, %v1357
          %v1359 = vtanh.pop %v1329
          %v1360 = vtanh.pop %v1333
          %v1361 = vxor.u32 %v1330, 2147483648
          %v1362 = vxor.u32 %v1334, 2147483648
          %v1363 = vmul.f32 %v1361, 1.442695
          %v1364 = vpow.pop %v1363
          %v1365 = vmul.f32 %v1362, 1.442695
          %v1366 = vpow.pop %v1365
          %v1367 = vadd.f32 %v1364, 1.0
          %v1368 = vadd.f32 %v1366, 1.0
          %v1369 = vrcp.pop %v1367
          %v1370 = vmul.f32 1.0, %v1369
          %v1371 = vrcp.pop %v1368
          %v1372 = vmul.f32 1.0, %v1371
          %v1373 = vld [vmem:[#allocation4] sm:$0xff]
          %v1374 = vld [vmem:[#allocation4 + $0x8] sm:$0xff]
          %v1375 = vmul.f32 %v1356, %v1373
          %v1376 = vmul.f32 %v1358, %v1374
          %v1377 = vmul.f32 %v1344, %v1359
          %v1378 = vmul.f32 %v1346, %v1360
          %v1379 = vadd.f32 %v1375, %v1377
          %v1380 = vadd.f32 %v1376, %v1378
          %v1381 = vtanh.pop %v1379
          %v1382 = vtanh.pop %v1380
          %v1383 = vmul.f32 %v1370, %v1381
          %v1384 = vmul.f32 %v1372, %v1382
          %1385 = vst [vmem:[#allocation4] sm:$0xff] %v1379
          %1386 = vst [vmem:[#allocation4 + $0x8] sm:$0xff] %v1380
          %1387 = vst [vmem:[#allocation3] sm:$0xff] %v1383
          %1388 = vst [vmem:[#allocation3 + $0x8] sm:$0xff] %v1384
          %v1389 = vpack.c.bf16 %v1384, %v1383
          %v1391 = vunpack.c.l.b16 %v1389
          %v1392 = vunpack.c.h.b16 %v1389
          %v1393 = vpack.c.b16 %v1391, %v1391
          %v1394 = vpack.c.b16 %v1392, %v1392
          %s1397 = smul.u32 %s1034, 2
          %s1398 = smul.addr %s1397, 4
          %s1399 = scalar_lea.vmem %s214, %s1398 [#allocation5]
          %1400 = vst [vmem:[%s1399] sm:$0xf] %v1393
          %1401 = vst [vmem:[%s1399 + $0x4] sm:$0xf] %v1394
        $region41: #{speech_recognition_forward.5} parent=35 // loop_footer
          %s1032 = sadd.s32 1, %s1028
        $region42: #{speech_recognition_forward.5} parent=35 // loop_footer_branch
          %1027 = sbr.rel target = $region38
        $region43: #{speech_recognition_forward.5} parent=35 // loop_exit
          _
        %s1402 = sand.u32 %s122, 1
        %s1403 = sand.u32 %s122, 1
        %s1404 = smul.addr %s1403, 64
        %s1405 = scalar_lea.vmem [#allocation5], %s1404
        // Predicated region
        $region44: #{speech_recognition_forward.5} parent=35 // pred_check
          %p1406 = pneg %p132
        $region45: #{speech_recognition_forward.5} parent=35 // pred_check_branch
          %1408 = sbr.rel (%p1406) target = $region47
        $region46: #{speech_recognition_forward.5} parent=35 // pred_region
          %s1409 = smul.addr %s15, 4
          %s1410 = scalar_lea.vmem %s4, %s1409
          // Predicated region
          $region48: #{speech_recognition_forward.5} parent=46 // pred_check
            _
          $region49: #{speech_recognition_forward.5} parent=46 // pred_check_branch
            %1412 = sbr.rel (0) target = $region51
          $region50: #{speech_recognition_forward.5} parent=46 // pred_region
            // Predicated region
            $region52: #{speech_recognition_forward.5} parent=50 // pred_check
              _
            $region53: #{speech_recognition_forward.5} parent=50 // pred_check_branch
              %1414 = sbr.rel target = $region55
            $region54: #{speech_recognition_forward.5} parent=50 // pred_region
              // Predicated region
              $region67: #{speech_recognition_forward.5} parent=54 // pred_check
                _
              $region68: #{speech_recognition_forward.5} parent=54 // pred_check_branch
                %1459 = sbr.rel (0) target = $region70
              $region69: #{speech_recognition_forward.5} parent=54 // pred_region
                loop: start=0, step=1, limit=1
                $region71: #{speech_recognition_forward.5} parent=69 // loop_pre_header
                  _
                $region72: #{speech_recognition_forward.5} parent=69 // loop_header
                  %s1461 = sphi 0, %s1465
                  %p1462 = scmp.ge.s32.totalorder %s1461, 1
                  %s1466 = sphi %s1405, %s1405
                  %s1467 = sphi %s1410, %s1410
                $region73: #{speech_recognition_forward.5} parent=69 // loop_header_branch
                  %1464 = sbr.rel (%p1462) target = $region77
                $region74: #{speech_recognition_forward.5} parent=69 // loop_body
                  _
                $region75: #{speech_recognition_forward.5} parent=69 // loop_footer
                  %s1465 = sadd.s32 1, %s1461
                $region76: #{speech_recognition_forward.5} parent=69 // loop_footer_branch
                  %1460 = sbr.rel target = $region72
                $region77: #{speech_recognition_forward.5} parent=69 // loop_exit
                  _
                loop: start=0, step=1, limit=1
                $region78: #{speech_recognition_forward.5} parent=69 // loop_pre_header
                  _
                $region79: #{speech_recognition_forward.5} parent=69 // loop_header
                  %s1470 = sphi 0, %s1474
                  %p1471 = scmp.ge.s32.totalorder %s1470, 1
                  %s1475 = sphi %s1405, %s1405
                  %s1476 = sphi %s1410, %s1410
                $region80: #{speech_recognition_forward.5} parent=69 // loop_header_branch
                  %1473 = sbr.rel (%p1471) target = $region84
                $region81: #{speech_recognition_forward.5} parent=69 // loop_body
                  %v1477 = vld [vmem:[%s1475] sm:$0xf]
                  %1478 = vst [vmem:[%s1476] sm:$0xf] %v1477
                  %v1479 = vld [vmem:[%s1475 + $0x4] sm:$0xf]
                  %1480 = vst [vmem:[%s1476 + $0x8] sm:$0xf] %v1479
                  %v1481 = vld [vmem:[%s1475 + $0x8] sm:$0xf]
                  %1482 = vst [vmem:[%s1476 + $0x10] sm:$0xf] %v1481
                  %v1483 = vld [vmem:[%s1475 + $0xc] sm:$0xf]
                  %1484 = vst [vmem:[%s1476 + $0x18] sm:$0xf] %v1483
                  %v1485 = vld [vmem:[%s1475 + $0x10] sm:$0xf]
                  %1486 = vst [vmem:[%s1476 + $0x20] sm:$0xf] %v1485
                  %v1487 = vld [vmem:[%s1475 + $0x14] sm:$0xf]
                  %1488 = vst [vmem:[%s1476 + $0x28] sm:$0xf] %v1487
                  %v1489 = vld [vmem:[%s1475 + $0x18] sm:$0xf]
                  %1490 = vst [vmem:[%s1476 + $0x30] sm:$0xf] %v1489
                  %v1491 = vld [vmem:[%s1475 + $0x1c] sm:$0xf]
                  %1492 = vst [vmem:[%s1476 + $0x38] sm:$0xf] %v1491
                  %v1493 = vld [vmem:[%s1475 + $0x20] sm:$0xf]
                  %1494 = vst [vmem:[%s1476 + $0x40] sm:$0xf] %v1493
                  %v1495 = vld [vmem:[%s1475 + $0x24] sm:$0xf]
                  %1496 = vst [vmem:[%s1476 + $0x48] sm:$0xf] %v1495
                  %v1497 = vld [vmem:[%s1475 + $0x28] sm:$0xf]
                  %1498 = vst [vmem:[%s1476 + $0x50] sm:$0xf] %v1497
                  %v1499 = vld [vmem:[%s1475 + $0x2c] sm:$0xf]
                  %1500 = vst [vmem:[%s1476 + $0x58] sm:$0xf] %v1499
                  %v1501 = vld [vmem:[%s1475 + $0x30] sm:$0xf]
                  %1502 = vst [vmem:[%s1476 + $0x60] sm:$0xf] %v1501
                  %v1503 = vld [vmem:[%s1475 + $0x34] sm:$0xf]
                  %1504 = vst [vmem:[%s1476 + $0x68] sm:$0xf] %v1503
                  %v1505 = vld [vmem:[%s1475 + $0x38] sm:$0xf]
                  %1506 = vst [vmem:[%s1476 + $0x70] sm:$0xf] %v1505
                  %v1507 = vld [vmem:[%s1475 + $0x3c] sm:$0xf]
                  %1508 = vst [vmem:[%s1476 + $0x78] sm:$0xf] %v1507
                $region82: #{speech_recognition_forward.5} parent=69 // loop_footer
                  %s1474 = sadd.s32 1, %s1470
                $region83: #{speech_recognition_forward.5} parent=69 // loop_footer_branch
                  %1469 = sbr.rel target = $region79
                $region84: #{speech_recognition_forward.5} parent=69 // loop_exit
                  _
              $region70: #{speech_recognition_forward.5} parent=54 // pred_fallthru
                _
            $region55: #{speech_recognition_forward.5} parent=50 // pred_fallthru
              _
            // Predicated region
            $region56: #{speech_recognition_forward.5} parent=50 // pred_check
              _
            $region57: #{speech_recognition_forward.5} parent=50 // pred_check_branch
              %1416 = sbr.rel (0) target = $region59
            $region58: #{speech_recognition_forward.5} parent=50 // pred_region
              loop: start=0, step=1, limit=1
              $region60: #{speech_recognition_forward.5} parent=58 // loop_pre_header
                _
              $region61: #{speech_recognition_forward.5} parent=58 // loop_header
                %s1419 = sphi 0, %s1423
                %p1420 = scmp.ge.s32.totalorder %s1419, 1
                %s1424 = sphi %s1405, %s1405
                %s1425 = sphi %s1410, %s1410
              $region62: #{speech_recognition_forward.5} parent=58 // loop_header_branch
                %1422 = sbr.rel (%p1420) target = $region66
              $region63: #{speech_recognition_forward.5} parent=58 // loop_body
                %v1426 = vld [vmem:[%s1424] sm:$0xf]
                %1427 = vst [vmem:[%s1425] sm:$0xf] %v1426
                %v1428 = vld [vmem:[%s1424 + $0x4] sm:$0xf]
                %1429 = vst [vmem:[%s1425 + $0x8] sm:$0xf] %v1428
                %v1430 = vld [vmem:[%s1424 + $0x8] sm:$0xf]
                %1431 = vst [vmem:[%s1425 + $0x10] sm:$0xf] %v1430
                %v1432 = vld [vmem:[%s1424 + $0xc] sm:$0xf]
                %1433 = vst [vmem:[%s1425 + $0x18] sm:$0xf] %v1432
                %v1434 = vld [vmem:[%s1424 + $0x10] sm:$0xf]
                %1435 = vst [vmem:[%s1425 + $0x20] sm:$0xf] %v1434
                %v1436 = vld [vmem:[%s1424 + $0x14] sm:$0xf]
                %1437 = vst [vmem:[%s1425 + $0x28] sm:$0xf] %v1436
                %v1438 = vld [vmem:[%s1424 + $0x18] sm:$0xf]
                %1439 = vst [vmem:[%s1425 + $0x30] sm:$0xf] %v1438
                %v1440 = vld [vmem:[%s1424 + $0x1c] sm:$0xf]
                %1441 = vst [vmem:[%s1425 + $0x38] sm:$0xf] %v1440
                %v1442 = vld [vmem:[%s1424 + $0x20] sm:$0xf]
                %1443 = vst [vmem:[%s1425 + $0x40] sm:$0xf] %v1442
                %v1444 = vld [vmem:[%s1424 + $0x24] sm:$0xf]
                %1445 = vst [vmem:[%s1425 + $0x48] sm:$0xf] %v1444
                %v1446 = vld [vmem:[%s1424 + $0x28] sm:$0xf]
                %1447 = vst [vmem:[%s1425 + $0x50] sm:$0xf] %v1446
                %v1448 = vld [vmem:[%s1424 + $0x2c] sm:$0xf]
                %1449 = vst [vmem:[%s1425 + $0x58] sm:$0xf] %v1448
                %v1450 = vld [vmem:[%s1424 + $0x30] sm:$0xf]
                %1451 = vst [vmem:[%s1425 + $0x60] sm:$0xf] %v1450
                %v1452 = vld [vmem:[%s1424 + $0x34] sm:$0xf]
                %1453 = vst [vmem:[%s1425 + $0x68] sm:$0xf] %v1452
                %v1454 = vld [vmem:[%s1424 + $0x38] sm:$0xf]
                %1455 = vst [vmem:[%s1425 + $0x70] sm:$0xf] %v1454
                %v1456 = vld [vmem:[%s1424 + $0x3c] sm:$0xf]
                %1457 = vst [vmem:[%s1425 + $0x78] sm:$0xf] %v1456
              $region64: #{speech_recognition_forward.5} parent=58 // loop_footer
                %s1423 = sadd.s32 1, %s1419
              $region65: #{speech_recognition_forward.5} parent=58 // loop_footer_branch
                %1418 = sbr.rel target = $region61
              $region66: #{speech_recognition_forward.5} parent=58 // loop_exit
                _
            $region59: #{speech_recognition_forward.5} parent=50 // pred_fallthru
              _
          $region51: #{speech_recognition_forward.5} parent=46 // pred_fallthru
            _
          %1509 = vnop
        $region47: #{speech_recognition_forward.5} parent=35 // pred_fallthru
          _
      $region36: #{speech_recognition_forward.5} parent=5 // pred_fallthru
        _
      %p1510 = scmp.le.s32.totalorder 2, %s10
      // Predicated region
      $region85: #{speech_recognition_forward.5} parent=5 // pred_check
        %p1511 = pneg %p1510
      $region86: #{speech_recognition_forward.5} parent=5 // pred_check_branch
        %1513 = sbr.rel (%p1511) target = $region88
      $region87: #{speech_recognition_forward.5} parent=5 // pred_region
        %s1514 = ssub.s32 %s10, 2
        // Predicated region
        $region89: #{speech_recognition_forward.5} parent=87 // pred_check
          %p1515 = pneg %p138
        $region90: #{speech_recognition_forward.5} parent=87 // pred_check_branch
          %1517 = sbr.rel (%p1515) target = $region92
        $region91: #{speech_recognition_forward.5} parent=87 // pred_region
          %s1518 = sand.u32 %s123, 1
          %s1519 = sand.u32 %s123, 1
          %s1520 = smul.addr %s1519, 64
          %s1521 = scalar_lea.vmem [#allocation5], %s1520
        $region92: #{speech_recognition_forward.5} parent=87 // pred_fallthru
          _
      $region88: #{speech_recognition_forward.5} parent=5 // pred_fallthru
        _
    $region6: #{speech_recognition_forward.5} parent=1 // loop_footer
      %s14 = sadd.s32 1, %s10
    $region7: #{speech_recognition_forward.5} parent=1 // loop_footer_branch
      %9 = sbr.rel target = $region3
    $region8: #{speech_recognition_forward.5} parent=1 // loop_exit
      _

</llo_original>
